<compile_context>
chip_gen: v7x
topology: tpu7x:2x2x1
jax: 0.10.0
libtpu: 0.0.40
codegen_flags: <defaults>
</compile_context>

<pallas_src>
import functools
import math

import jax
import jax.numpy as jnp
from jax.experimental import pallas as pl
from jax.experimental.pallas import tpu as pltpu

NTAPS = 7      # deduplicated taps: 3 center-column + 4 shared side-tap weights
LANE = 128     # TPU lane width
SUB = 8        # TPU sublane granularity


def _round_up(a, b):
    return (a + b - 1) // b * b


def _vmem_budget_bytes():
    try:
        phys = int(pltpu.get_tpu_info().vmem_capacity_bytes)
    except Exception:
        phys = 64 * 1024 * 1024          # v7x per-core VMEM: safe lower bound
    return phys * 3 // 4


_VMEM_BUDGET = _vmem_budget_bytes()


def _spec(shape, index_map, buffers=None):
    """BlockSpec helper; requests `buffers`-deep pipelining when the API supports it."""
    if buffers is not None and hasattr(pl, "Buffered"):
        try:
            return pl.BlockSpec(shape, index_map, pipeline_mode=pl.Buffered(buffers))
        except TypeError:
            pass
    return pl.BlockSpec(shape, index_map)


def _pick_row_tile(h, wp, per_row_bytes, fixed_bytes, budget, target_rows):
    """Smallest divisor of h whose strip (TR*wp sublanes) reaches target_rows and fits
    the VMEM budget; otherwise the largest divisor that fits (minimum 1)."""
    best = 1
    for d in range(1, h + 1):
        if h % d:
            continue
        rows = d * wp
        if d > 1 and fixed_bytes + rows * per_row_bytes > budget:
            break
        best = d
        if rows >= target_rows:
            break
    return best


def _make_hexblock_kernel(trwp, wp, base, residual, sep_res):
    """trwp: sublanes per output strip; wp: padded width (multiple of 8); base: flat
    offset of padded (row 1, col 0) inside the head-padded input buffer (8-aligned)."""

    def body(m_ref, x_ref, w_ref, b_ref, o_ref, res_ref):
        # m_ref:   (trwp, 1) f32     1.0 where the ORIGINAL column index is even
        # x_ref:   (1, Ltot, Cp)     zero-padded flattened input (whole image, resident)
        # w_ref:   (NTAPS, Cp, Op)   deduplicated per-tap channel-mixing matrices
        # b_ref:   (1, Op) f32       bias
        # res_ref: (1, trwp, Cp) f32 exact residual strip (only when sep_res)
        # o_ref:   (1, trwp, Op) f32 output strip (still contains the halo columns)
        r = pl.program_id(1)
        start = base + r * trwp            # flat index of this strip's (0, 0) tap

        def win(dr, dc):                   # shifted, contiguous sublane window
            off = start + dr * wp + dc
            if dc == 0:                    # base, trwp, wp are all multiples of 8
                off = pl.multiple_of(off, SUB)
            return x_ref[0, pl.ds(off, trwp), :]

        center = win(0, 0)
        up, down = win(-1, 0), win(1, 0)
        left, right = win(0, -1), win(0, 1)
        up_l, up_r = win(-1, -1), win(-1, 1)
        dn_l, dn_r = win(1, -1), win(1, 1)

        c_in = center.shape[-1]
        m_even = jnp.broadcast_to(m_ref[...], (trwp, c_in)) != 0.0   # hoisted, reused

        taps = (
            center,                            # k0[:, :, 1, 0]
            up,                                # k0[:, :, 0, 0]
            down,                              # k0[:, :, 2, 0]
            jnp.where(m_even, up_l, left),     # k1[:, :, 0, 0]
            jnp.where(m_even, up_r, right),    # k1[:, :, 0, 1]
            jnp.where(m_even, left, dn_l),     # k1[:, :, 1, 0]
            jnp.where(m_even, right, dn_r),    # k1[:, :, 1, 1]
        )

        # Running accumulation: at most one extra live product tile; lets Mosaic keep
        # the partial sums in the MXU result buffer (in-place accumulate on v7x).
        acc = jnp.dot(taps[0], w_ref[0], preferred_element_type=jnp.float32)
        for i in range(1, NTAPS):
            acc = acc + jnp.dot(taps[i], w_ref[i], preferred_element_type=jnp.float32)

        acc = acc + b_ref[...]
        if residual:
            if sep_res:                                   # exact f32 skip connection
                acc = acc + res_ref[0, :, :]
            else:                                         # f32 compute: center is exact
                acc = acc + center.astype(jnp.float32)
        o_ref[0, :, :] = jnp.maximum(acc, 0.0).astype(o_ref.dtype)

    if sep_res:
        def kernel(m_ref, res_ref, x_ref, w_ref, b_ref, o_ref):
            body(m_ref, x_ref, w_ref, b_ref, o_ref, res_ref)
    else:
        def kernel(m_ref, x_ref, w_ref, b_ref, o_ref):
            body(m_ref, x_ref, w_ref, b_ref, o_ref, None)
    return kernel


@functools.partial(
    jax.jit,
    static_argnames=("residual", "compute_dtype", "exact_residual", "target_rows"))
def hex_block_forward(x, k0, k1, bias, residual=True, compute_dtype="bfloat16",
                      exact_residual=True, target_rows=1024):
    """relu(hexagdly.Conv2d(ks=1, stride=1)(x) (+ x)); x is NCHW float32."""
    N, C, H, W = x.shape
    O = k0.shape[0]
    if residual:
        assert C == O, "residual add requires in_channels == out_channels"
    use_bf16 = compute_dtype == "bfloat16"
    cdt = jnp.bfloat16 if use_bf16 else jnp.float32
    cbytes = 2 if use_bf16 else 4
    sep_res = bool(residual and exact_residual and use_bf16)

    # Lane-dense channels and 8-aligned padded width.
    Cp, Op = _round_up(C, LANE), _round_up(O, LANE)
    Hp, Wp = H + 2, _round_up(W + 2, SUB)
    Lq = H * Wp                      # output region: padded rows 1..H, all padded cols
    PRE = SUB                        # head room so every tap window stays in bounds
    Ltot = _round_up(PRE + Hp * Wp + 1, SUB)
    POST = Ltot - PRE - Hp * Wp
    base = PRE + Wp                  # flat offset of padded (row 1, col 0); 8-aligned

    # VMEM accounting: resident (single-buffered) operands vs per-strip streamed bytes.
    x_bufs = 1 if hasattr(pl, "Buffered") else 2
    resident = (x_bufs * Ltot * Cp * cbytes            # whole padded image
                + x_bufs * NTAPS * Cp * Op * cbytes    # weights
                + x_bufs * SUB * Op * 4                # bias (sublane padded)
                + (2 << 20))                           # compiler scratch slack
    per_row = 2 * (LANE * 4 + Op * 4 + (Cp * 4 if sep_res else 0))   # double-buffered
    TR = _pick_row_tile(H, Wp, per_row, resident, _VMEM_BUDGET, target_rows)
    TRWp = TR * Wp
    R = H // TR
    vmem_limit = int(min(_VMEM_BUDGET,
                         max(resident + TRWp * per_row + (6 << 20), 16 << 20)))

    # 7 deduplicated per-tap (Cp, Op) channel mixers; order matches the kernel taps.
    tap_w = jnp.stack(
        [k0[:, :, 1, 0], k0[:, :, 0, 0], k0[:, :, 2, 0],
         k1[:, :, 0, 0], k1[:, :, 0, 1], k1[:, :, 1, 0], k1[:, :, 1, 1]],
        axis=0)                                                  # (7, O, C)
    tap_w = jnp.transpose(tap_w, (0, 2, 1))                      # (7, C, O)
    tap_w = jnp.pad(tap_w, ((0, 0), (0, Cp - C), (0, Op - O))).astype(cdt)
    bias2d = jnp.pad(bias, (0, Op - O)).reshape(1, Op).astype(jnp.float32)

    # Column-parity mask over the flattened output region (original column c is even
    # <=> padded column cp = c + 1 is odd).  Halo-column values are dropped later.
    cp_idx = jnp.arange(Lq, dtype=jnp.int32) % Wp
    m_even = ((cp_idx % 2) == 1).astype(jnp.float32).reshape(Lq, 1)

    # Glue: channel + spatial zero pad, NCHW -> NHWC, flatten row-major, head/tail pad.
    xpad = jnp.pad(x, ((0, 0), (0, Cp - C), (1, 1), (1, Wp - W - 1)))
    xflat_f32 = jnp.transpose(xpad, (0, 2, 3, 1)).reshape(N, Hp * Wp, Cp)
    xflat = jnp.pad(xflat_f32.astype(cdt), ((0, 0), (PRE, POST), (0, 0)))   # (N,Ltot,Cp)

    inputs = [m_even]
    in_specs = [pl.BlockSpec((TRWp, 1), lambda n, r: (r, 0))]               # parity mask
    if sep_res:
        inputs.append(xflat_f32[:, Wp:Wp + Lq, :])                          # exact f32 skip
        in_specs.append(pl.BlockSpec((1, TRWp, Cp), lambda n, r: (n, r, 0)))
    inputs += [xflat, tap_w, bias2d]
    in_specs += [
        _spec((1, Ltot, Cp), lambda n, r: (n, 0, 0), buffers=1),   # image resident, 1 buf
        _spec((NTAPS, Cp, Op), lambda n, r: (0, 0, 0), buffers=1), # weights resident
        _spec((1, Op), lambda n, r: (0, 0), buffers=1),            # bias resident
    ]

    flops = 2 * NTAPS * N * Lq * Cp * Op
    bytes_accessed = (xflat.size * cbytes + tap_w.size * cbytes + bias2d.size * 4
                      + m_even.size * 4 + N * Lq * Op * 4
                      + (N * Lq * Cp * 4 if sep_res else 0))
    try:
        cost = pl.CostEstimate(flops=flops, transcendentals=0,
                               bytes_accessed=bytes_accessed)
    except Exception:
        cost = None

    kernel = _make_hexblock_kernel(TRWp, Wp, base, residual, sep_res)

    out_flat = pl.pallas_call(
        kernel,
        out_shape=jax.ShapeDtypeStruct((N, Lq, Op), jnp.float32),
        grid=(N, R),
        in_specs=in_specs,
        out_specs=pl.BlockSpec((1, TRWp, Op), lambda n, r: (n, r, 0)),
        compiler_params=pltpu.CompilerParams(
            dimension_semantics=("parallel", "parallel"),
            vmem_limit_bytes=vmem_limit),
        cost_estimate=cost,
    )(*inputs)

    # Glue: drop halo columns and padded lanes, back to NCHW.
    out = out_flat.reshape(N, H, Wp, Op)[:, :, 1:1 + W, :O]
    return jnp.transpose(out, (0, 3, 1, 2))


# ----------------------- pure-JAX reference (for checking) -----------------------
def _hexconv2d_ref(x, k0, k1, bias):
    N, C, H, W = x.shape
    xp = jnp.pad(x, ((0, 0), (0, 0), (1, 1), (1, 1)))

    def win(dr, dc):
        return xp[:, :, 1 + dr: 1 + dr + H, 1 + dc: 1 + dc + W]

    def mix(a, v):
        return jnp.einsum("oc,nchw->nohw", a, v)

    even = (jnp.arange(W) % 2 == 0)[None, None, None, :]
    out = bias[None, :, None, None]
    out = out + mix(k0[:, :, 0, 0], win(-1, 0)) + mix(k0[:, :, 1, 0], win(0, 0)) \
              + mix(k0[:, :, 2, 0], win(1, 0))
    ec = (mix(k1[:, :, 0, 0], win(-1, -1)) + mix(k1[:, :, 0, 1], win(-1, 1))
          + mix(k1[:, :, 1, 0], win(0, -1)) + mix(k1[:, :, 1, 1], win(0, 1)))
    oc = (mix(k1[:, :, 0, 0], win(0, -1)) + mix(k1[:, :, 0, 1], win(0, 1))
          + mix(k1[:, :, 1, 0], win(1, -1)) + mix(k1[:, :, 1, 1], win(1, 1)))
    return out + jnp.where(even, ec, oc)


def _hexblock_ref(x, k0, k1, bias, residual=True):
    y = _hexconv2d_ref(x, k0, k1, bias)
    if residual:
        y = y + x
    return jnp.maximum(y, 0.0)


if __name__ == "__main__":
    key = jax.random.PRNGKey(0)

    def make_case(k, N, C, O, H, W):
        kx, kk0, kk1, kb = jax.random.split(k, 4)
        bound = 1.0 / math.sqrt(7 * C)
        x = jax.random.normal(kx, (N, C, H, W), jnp.float32)
        k0 = jax.random.uniform(kk0, (O, C, 3, 1), jnp.float32, -bound, bound)
        k1w = jax.random.uniform(kk1, (O, C, 2, 2), jnp.float32, -bound, bound)
        b = jax.random.uniform(kb, (O,), jnp.float32, -bound, bound)
        return x, k0, k1w, b

    k_a, k_b, k_c = jax.random.split(key, 3)

    # Case 1: module default small shape, f32 operand compute (tight check).
    x, k0, k1w, b = make_case(k_a, 2, 4, 4, 16, 16)
    ref = _hexblock_ref(x, k0, k1w, b, residual=True)
    out = jax.block_until_ready(
        hex_block_forward(x, k0, k1w, b, residual=True, compute_dtype="float32"))
    assert out.shape == (2, 4, 16, 16)
    err = float(jnp.max(jnp.abs(out - ref)))
    if err > 1e-4:
        raise AssertionError(f"f32 Pallas kernel mismatch vs reference, max_err={err}")

    # Case 2: same shape, default bf16 operands (f32 accumulate + exact f32 residual).
    out_bf = jax.block_until_ready(hex_block_forward(x, k0, k1w, b, residual=True))
    err_bf = float(jnp.max(jnp.abs(out_bf - ref)))
    if err_bf > 1e-1:
        raise AssertionError(f"bf16 Pallas kernel mismatch vs reference, max_err={err_bf}")

    # Case 3: taller non-square image with a small strip target so the row-strip grid
    # axis is > 1 (exercises the multi-strip pipelined-output path).
    x3, k03, k13, b3 = make_case(k_b, 1, 4, 4, 40, 12)
    ref3 = _hexblock_ref(x3, k03, k13, b3, residual=True)
    out3 = jax.block_until_ready(
        hex_block_forward(x3, k03, k13, b3, residual=True, compute_dtype="float32",
                          target_rows=128))
    err3 = float(jnp.max(jnp.abs(out3 - ref3)))
    if err3 > 1e-4:
        raise AssertionError(f"row-tiled Pallas kernel mismatch, max_err={err3}")

    # Case 4: no residual branch, bf16 operands.
    x4, k04, k14, b4 = make_case(k_c, 1, 4, 4, 12, 20)
    ref4 = _hexblock_ref(x4, k04, k14, b4, residual=False)
    out4 = jax.block_until_ready(hex_block_forward(x4, k04, k14, b4, residual=False))
    err4 = float(jnp.max(jnp.abs(out4 - ref4)))
    if err4 > 1e-1:
        raise AssertionError(f"no-residual Pallas kernel mismatch, max_err={err4}")

    print("KERNEL_OK")
</pallas_src>

<mosaic_0001>
module attributes {stable_mosaic.version = 11 : i64} {
  func.func @kernel(%arg0: i32, %arg1: i32, %arg2: memref<384x1xf32, #tpu.memory_space<vmem>>, %arg3: memref<1x448x128xf32, #tpu.memory_space<vmem>>, %arg4: memref<7x128x128xf32, #tpu.memory_space<vmem>>, %arg5: memref<1x128xf32, #tpu.memory_space<vmem>>, %arg6: memref<1x384x128xf32, #tpu.memory_space<vmem>>) attributes {dimension_semantics = [#tpu.dimension_semantics<parallel>, #tpu.dimension_semantics<parallel>], iteration_bounds = array<i64: 2, 1>, scalar_prefetch = 0 : i64, scratch_operands = 0 : i64, tpu.core_type = #tpu.core_type<tc>, window_params = [{transform_indices = @transform_0, window_bounds = array<i64: 384, 1>}, {pipeline_mode = #tpu.pipeline_mode<synchronous>, transform_indices = @transform_1, window_bounds = array<i64: 1, 448, 128>}, {pipeline_mode = #tpu.pipeline_mode<synchronous>, transform_indices = @transform_2, window_bounds = array<i64: 7, 128, 128>}, {pipeline_mode = #tpu.pipeline_mode<synchronous>, transform_indices = @transform_3, window_bounds = array<i64: 1, 128>}, {transform_indices = @transform_4, window_bounds = array<i64: 1, 384, 128>}]} {
    %c384_i32 = arith.constant 384 : i32
    %0 = arith.muli %arg1, %c384_i32 : i32
    %c32_i32 = arith.constant 32 : i32
    %1 = arith.addi %c32_i32, %0 : i32
    %c0_i32 = arith.constant 0 : i32
    %2 = arith.addi %1, %c0_i32 : i32
    %c0_i32_0 = arith.constant 0 : i32
    %3 = arith.addi %2, %c0_i32_0 : i32
    %4 = tpu.assume_multiple %3, 8 : i32
    %c0 = arith.constant 0 : index
    %5 = arith.index_cast %4 : i32 to index
    %c0_1 = arith.constant 0 : index
    %6 = vector.load %arg3[%c0, %5, %c0_1] : memref<1x448x128xf32, #tpu.memory_space<vmem>>, vector<1x384x128xf32>
    %7 = vector.shape_cast %6 : vector<1x384x128xf32> to vector<384x128xf32>
    %c-24_i32 = arith.constant -24 : i32
    %8 = arith.addi %1, %c-24_i32 : i32
    %c0_i32_2 = arith.constant 0 : i32
    %9 = arith.addi %8, %c0_i32_2 : i32
    %10 = tpu.assume_multiple %9, 8 : i32
    %c0_3 = arith.constant 0 : index
    %11 = arith.index_cast %10 : i32 to index
    %c0_4 = arith.constant 0 : index
    %12 = vector.load %arg3[%c0_3, %11, %c0_4] : memref<1x448x128xf32, #tpu.memory_space<vmem>>, vector<1x384x128xf32>
    %13 = vector.shape_cast %12 : vector<1x384x128xf32> to vector<384x128xf32>
    %c24_i32 = arith.constant 24 : i32
    %14 = arith.addi %1, %c24_i32 : i32
    %c0_i32_5 = arith.constant 0 : i32
    %15 = arith.addi %14, %c0_i32_5 : i32
    %16 = tpu.assume_multiple %15, 8 : i32
    %c0_6 = arith.constant 0 : index
    %17 = arith.index_cast %16 : i32 to index
    %c0_7 = arith.constant 0 : index
    %18 = vector.load %arg3[%c0_6, %17, %c0_7] : memref<1x448x128xf32, #tpu.memory_space<vmem>>, vector<1x384x128xf32>
    %19 = vector.shape_cast %18 : vector<1x384x128xf32> to vector<384x128xf32>
    %c0_i32_8 = arith.constant 0 : i32
    %20 = arith.addi %1, %c0_i32_8 : i32
    %c-1_i32 = arith.constant -1 : i32
    %21 = arith.addi %20, %c-1_i32 : i32
    %c0_9 = arith.constant 0 : index
    %22 = arith.index_cast %21 : i32 to index
    %c0_10 = arith.constant 0 : index
    %23 = vector.load %arg3[%c0_9, %22, %c0_10] : memref<1x448x128xf32, #tpu.memory_space<vmem>>, vector<1x384x128xf32>
    %24 = vector.shape_cast %23 : vector<1x384x128xf32> to vector<384x128xf32>
    %c0_i32_11 = arith.constant 0 : i32
    %25 = arith.addi %1, %c0_i32_11 : i32
    %c1_i32 = arith.constant 1 : i32
    %26 = arith.addi %25, %c1_i32 : i32
    %c0_12 = arith.constant 0 : index
    %27 = arith.index_cast %26 : i32 to index
    %c0_13 = arith.constant 0 : index
    %28 = vector.load %arg3[%c0_12, %27, %c0_13] : memref<1x448x128xf32, #tpu.memory_space<vmem>>, vector<1x384x128xf32>
    %29 = vector.shape_cast %28 : vector<1x384x128xf32> to vector<384x128xf32>
    %c-24_i32_14 = arith.constant -24 : i32
    %30 = arith.addi %1, %c-24_i32_14 : i32
    %c-1_i32_15 = arith.constant -1 : i32
    %31 = arith.addi %30, %c-1_i32_15 : i32
    %c0_16 = arith.constant 0 : index
    %32 = arith.index_cast %31 : i32 to index
    %c0_17 = arith.constant 0 : index
    %33 = vector.load %arg3[%c0_16, %32, %c0_17] : memref<1x448x128xf32, #tpu.memory_space<vmem>>, vector<1x384x128xf32>
    %34 = vector.shape_cast %33 : vector<1x384x128xf32> to vector<384x128xf32>
    %c-24_i32_18 = arith.constant -24 : i32
    %35 = arith.addi %1, %c-24_i32_18 : i32
    %c1_i32_19 = arith.constant 1 : i32
    %36 = arith.addi %35, %c1_i32_19 : i32
    %c0_20 = arith.constant 0 : index
    %37 = arith.index_cast %36 : i32 to index
    %c0_21 = arith.constant 0 : index
    %38 = vector.load %arg3[%c0_20, %37, %c0_21] : memref<1x448x128xf32, #tpu.memory_space<vmem>>, vector<1x384x128xf32>
    %39 = vector.shape_cast %38 : vector<1x384x128xf32> to vector<384x128xf32>
    %c24_i32_22 = arith.constant 24 : i32
    %40 = arith.addi %1, %c24_i32_22 : i32
    %c-1_i32_23 = arith.constant -1 : i32
    %41 = arith.addi %40, %c-1_i32_23 : i32
    %c0_24 = arith.constant 0 : index
    %42 = arith.index_cast %41 : i32 to index
    %c0_25 = arith.constant 0 : index
    %43 = vector.load %arg3[%c0_24, %42, %c0_25] : memref<1x448x128xf32, #tpu.memory_space<vmem>>, vector<1x384x128xf32>
    %44 = vector.shape_cast %43 : vector<1x384x128xf32> to vector<384x128xf32>
    %c24_i32_26 = arith.constant 24 : i32
    %45 = arith.addi %1, %c24_i32_26 : i32
    %c1_i32_27 = arith.constant 1 : i32
    %46 = arith.addi %45, %c1_i32_27 : i32
    %c0_28 = arith.constant 0 : index
    %47 = arith.index_cast %46 : i32 to index
    %c0_29 = arith.constant 0 : index
    %48 = vector.load %arg3[%c0_28, %47, %c0_29] : memref<1x448x128xf32, #tpu.memory_space<vmem>>, vector<1x384x128xf32>
    %49 = vector.shape_cast %48 : vector<1x384x128xf32> to vector<384x128xf32>
    %c0_30 = arith.constant 0 : index
    %c0_31 = arith.constant 0 : index
    %50 = vector.load %arg2[%c0_30, %c0_31] : memref<384x1xf32, #tpu.memory_space<vmem>>, vector<384x1xf32>
    %51 = vector.shape_cast %50 : vector<384x1xf32> to vector<384x1xf32>
    %52 = vector.broadcast %51 : vector<384x1xf32> to vector<384x128xf32>
    %cst = arith.constant 0.000000e+00 : f32
    %53 = vector.broadcast %cst : f32 to vector<384x128xf32>
    %54 = arith.cmpf one, %52, %53 : vector<384x128xf32>
    %55 = arith.select %54, %34, %24 : vector<384x128xi1>, vector<384x128xf32>
    %56 = arith.select %54, %39, %29 : vector<384x128xi1>, vector<384x128xf32>
    %57 = arith.select %54, %24, %44 : vector<384x128xi1>, vector<384x128xf32>
    %58 = arith.select %54, %29, %49 : vector<384x128xi1>, vector<384x128xf32>
    %c0_32 = arith.constant 0 : index
    %c0_33 = arith.constant 0 : index
    %c0_34 = arith.constant 0 : index
    %59 = vector.load %arg4[%c0_32, %c0_33, %c0_34] : memref<7x128x128xf32, #tpu.memory_space<vmem>>, vector<1x128x128xf32>
    %60 = vector.shape_cast %59 : vector<1x128x128xf32> to vector<128x128xf32>
    %cst_35 = arith.constant dense<0.000000e+00> : vector<384x128xf32>
    %61 = tpu.matmul %7, %60, %cst_35 {dimension_numbers = #tpu.dot_dimension_numbers<[1], [0], [0], [1], [0, 0, 1, 1], [], []>} : vector<384x128xf32>, vector<128x128xf32>, vector<384x128xf32> -> vector<384x128xf32>
    %c1 = arith.constant 1 : index
    %c0_36 = arith.constant 0 : index
    %c0_37 = arith.constant 0 : index
    %62 = vector.load %arg4[%c1, %c0_36, %c0_37] : memref<7x128x128xf32, #tpu.memory_space<vmem>>, vector<1x128x128xf32>
    %63 = vector.shape_cast %62 : vector<1x128x128xf32> to vector<128x128xf32>
    %cst_38 = arith.constant dense<0.000000e+00> : vector<384x128xf32>
    %64 = tpu.matmul %13, %63, %cst_38 {dimension_numbers = #tpu.dot_dimension_numbers<[1], [0], [0], [1], [0, 0, 1, 1], [], []>} : vector<384x128xf32>, vector<128x128xf32>, vector<384x128xf32> -> vector<384x128xf32>
    %65 = arith.addf %61, %64 : vector<384x128xf32>
    %c2 = arith.constant 2 : index
    %c0_39 = arith.constant 0 : index
    %c0_40 = arith.constant 0 : index
    %66 = vector.load %arg4[%c2, %c0_39, %c0_40] : memref<7x128x128xf32, #tpu.memory_space<vmem>>, vector<1x128x128xf32>
    %67 = vector.shape_cast %66 : vector<1x128x128xf32> to vector<128x128xf32>
    %cst_41 = arith.constant dense<0.000000e+00> : vector<384x128xf32>
    %68 = tpu.matmul %19, %67, %cst_41 {dimension_numbers = #tpu.dot_dimension_numbers<[1], [0], [0], [1], [0, 0, 1, 1], [], []>} : vector<384x128xf32>, vector<128x128xf32>, vector<384x128xf32> -> vector<384x128xf32>
    %69 = arith.addf %65, %68 : vector<384x128xf32>
    %c3 = arith.constant 3 : index
    %c0_42 = arith.constant 0 : index
    %c0_43 = arith.constant 0 : index
    %70 = vector.load %arg4[%c3, %c0_42, %c0_43] : memref<7x128x128xf32, #tpu.memory_space<vmem>>, vector<1x128x128xf32>
    %71 = vector.shape_cast %70 : vector<1x128x128xf32> to vector<128x128xf32>
    %cst_44 = arith.constant dense<0.000000e+00> : vector<384x128xf32>
    %72 = tpu.matmul %55, %71, %cst_44 {dimension_numbers = #tpu.dot_dimension_numbers<[1], [0], [0], [1], [0, 0, 1, 1], [], []>} : vector<384x128xf32>, vector<128x128xf32>, vector<384x128xf32> -> vector<384x128xf32>
    %73 = arith.addf %69, %72 : vector<384x128xf32>
    %c4 = arith.constant 4 : index
    %c0_45 = arith.constant 0 : index
    %c0_46 = arith.constant 0 : index
    %74 = vector.load %arg4[%c4, %c0_45, %c0_46] : memref<7x128x128xf32, #tpu.memory_space<vmem>>, vector<1x128x128xf32>
    %75 = vector.shape_cast %74 : vector<1x128x128xf32> to vector<128x128xf32>
    %cst_47 = arith.constant dense<0.000000e+00> : vector<384x128xf32>
    %76 = tpu.matmul %56, %75, %cst_47 {dimension_numbers = #tpu.dot_dimension_numbers<[1], [0], [0], [1], [0, 0, 1, 1], [], []>} : vector<384x128xf32>, vector<128x128xf32>, vector<384x128xf32> -> vector<384x128xf32>
    %77 = arith.addf %73, %76 : vector<384x128xf32>
    %c5 = arith.constant 5 : index
    %c0_48 = arith.constant 0 : index
    %c0_49 = arith.constant 0 : index
    %78 = vector.load %arg4[%c5, %c0_48, %c0_49] : memref<7x128x128xf32, #tpu.memory_space<vmem>>, vector<1x128x128xf32>
    %79 = vector.shape_cast %78 : vector<1x128x128xf32> to vector<128x128xf32>
    %cst_50 = arith.constant dense<0.000000e+00> : vector<384x128xf32>
    %80 = tpu.matmul %57, %79, %cst_50 {dimension_numbers = #tpu.dot_dimension_numbers<[1], [0], [0], [1], [0, 0, 1, 1], [], []>} : vector<384x128xf32>, vector<128x128xf32>, vector<384x128xf32> -> vector<384x128xf32>
    %81 = arith.addf %77, %80 : vector<384x128xf32>
    %c6 = arith.constant 6 : index
    %c0_51 = arith.constant 0 : index
    %c0_52 = arith.constant 0 : index
    %82 = vector.load %arg4[%c6, %c0_51, %c0_52] : memref<7x128x128xf32, #tpu.memory_space<vmem>>, vector<1x128x128xf32>
    %83 = vector.shape_cast %82 : vector<1x128x128xf32> to vector<128x128xf32>
    %cst_53 = arith.constant dense<0.000000e+00> : vector<384x128xf32>
    %84 = tpu.matmul %58, %83, %cst_53 {dimension_numbers = #tpu.dot_dimension_numbers<[1], [0], [0], [1], [0, 0, 1, 1], [], []>} : vector<384x128xf32>, vector<128x128xf32>, vector<384x128xf32> -> vector<384x128xf32>
    %85 = arith.addf %81, %84 : vector<384x128xf32>
    %c0_54 = arith.constant 0 : index
    %c0_55 = arith.constant 0 : index
    %86 = vector.load %arg5[%c0_54, %c0_55] : memref<1x128xf32, #tpu.memory_space<vmem>>, vector<1x128xf32>
    %87 = vector.broadcast %86 : vector<1x128xf32> to vector<384x128xf32>
    %88 = arith.addf %85, %87 : vector<384x128xf32>
    %89 = arith.addf %88, %7 : vector<384x128xf32>
    %cst_56 = arith.constant 0.000000e+00 : f32
    %90 = vector.broadcast %cst_56 : f32 to vector<384x128xf32>
    %91 = arith.maximumf %89, %90 : vector<384x128xf32>
    %c0_57 = arith.constant 0 : index
    %c0_58 = arith.constant 0 : index
    %c0_59 = arith.constant 0 : index
    %92 = vector.load %arg6[%c0_57, %c0_58, %c0_59] : memref<1x384x128xf32, #tpu.memory_space<vmem>>, vector<1x384x128xf32>
    %93 = vector.shape_cast %92 : vector<1x384x128xf32> to vector<384x128xf32>
    %94 = vector.shape_cast %91 : vector<384x128xf32> to vector<1x384x128xf32>
    tpu.vector_store %arg6[%c0_57, %c0_58, %c0_59], %94 {strides = array<i32>} : memref<1x384x128xf32, #tpu.memory_space<vmem>>, vector<1x384x128xf32>,
    return
  }
  func.func @transform_0(%arg0: i32, %arg1: i32) -> (i32, i32) {
    %c0_i32 = arith.constant 0 : i32
    %c0_i32_0 = arith.constant 0 : i32
    return %arg1, %c0_i32 : i32, i32
  }
  func.func @transform_1(%arg0: i32, %arg1: i32) -> (i32, i32, i32) {
    %c0_i32 = arith.constant 0 : i32
    %c0_i32_0 = arith.constant 0 : i32
    %c0_i32_1 = arith.constant 0 : i32
    return %arg0, %c0_i32, %c0_i32_0 : i32, i32, i32
  }
  func.func @transform_2(%arg0: i32, %arg1: i32) -> (i32, i32, i32) {
    %c0_i32 = arith.constant 0 : i32
    %c0_i32_0 = arith.constant 0 : i32
    %c0_i32_1 = arith.constant 0 : i32
    %c0_i32_2 = arith.constant 0 : i32
    return %c0_i32, %c0_i32_0, %c0_i32_1 : i32, i32, i32
  }
  func.func @transform_3(%arg0: i32, %arg1: i32) -> (i32, i32) {
    %c0_i32 = arith.constant 0 : i32
    %c0_i32_0 = arith.constant 0 : i32
    %c0_i32_1 = arith.constant 0 : i32
    return %c0_i32, %c0_i32_0 : i32, i32
  }
  func.func @transform_4(%arg0: i32, %arg1: i32) -> (i32, i32, i32) {
    %c0_i32 = arith.constant 0 : i32
    %c0_i32_0 = arith.constant 0 : i32
    return %arg0, %arg1, %c0_i32 : i32, i32, i32
  }
}

</mosaic_0001>

<llo_original>
// kernel: hex_block_forward.1
$region0: #{hex_block_forward.1}
  #allocation0 [shape = 'u32[]', space=smem, size = 0x4, offset = 0x4, fixed_abs, tag = 'smem constant byte address 0x4 - core index']
  #allocation1 [shape = 'u32[144,128]{1,0:T(1,128)}', space=vmem, size = 0x12000, scoped, tag = 'internal scratch']
  %s0 = inlined_call_operand.vmem [shape: f32[384,1], index: 0, kind: input, shape index: {}]
  %s1 = inlined_call_operand.vmem [shape: f32[2,448,128], index: 1, kind: input, shape index: {}]
  %s2 = inlined_call_operand.vmem [shape: f32[7,128,128], index: 2, kind: input, shape index: {}]
  %s3 = inlined_call_operand.vmem [shape: f32[1,128], index: 3, kind: input, shape index: {}]
  %s4 = inlined_call_operand.vmem [shape: f32[2,384,128], index: 4, kind: output, shape index: {}]
  %s5 = sld [smem:[#allocation0]]
  $region49: #{hex_block_forward.1} parent=0
    _
  %s7 = ssub.s32 1, %s5
  %s8 = scalar_select 0, %s7, %s5
  loop: start=0, step=1, limit=4
  $region2: #{hex_block_forward.1} parent=0 // loop_pre_header
    _
  $region3: #{hex_block_forward.1} parent=0 // loop_header
    %s10 = sphi 0, %s14
    %p11 = scmp.ge.s32.totalorder %s10, 4
    %s17 = sphi 0, %s29
    %s18 = sphi 0, %s25
    %s19 = sphi 0, %s17
    %s20 = sphi 0, %s18
    %s21 = sphi 0, %s19
    %s22 = sphi 0, %s20
    %s32 = sphi 0, %s34
    %s35 = sphi 0, %s32
    %s36 = sphi 0, %s35
    %s52 = sphi 0, %s36
    %s58 = sphi 0, %s60
    %s61 = sphi 0, %s58
    %s62 = sphi 0, %s61
    %s78 = sphi 0, %s62
    %s82 = sphi 0, %s82
    %s84 = sphi 0, %s82
    %s85 = sphi 0, %s84
    %s99 = sphi 0, %s85
    %s103 = sphi 0, %s103
    %s105 = sphi 0, %s103
    %s106 = sphi 0, %s105
    %s120 = sphi 0, %s106
    %s128 = sphi 0, %s130
    %s131 = sphi 0, %s128
    %s132 = sphi 0, %s131
    %s148 = sphi 0, %s132
  $region4: #{hex_block_forward.1} parent=0 // loop_header_branch
    %13 = sbr.rel (%p11) target = $region8
  $region5: #{hex_block_forward.1} parent=0 // loop_body
    %s15 = ssub.s32 %s10, 1
    %s16 = ssub.s32 %s10, 2
    %s23 = sadd.s32 1, %s18
    %p24 = scmp.ge.s32.totalorder %s23, 1
    %s25 = scalar_select %p24, 0, %s23
    %s26 = sadd.s32 1, %s17
    %s27 = scalar_select %p24, %s26, %s17
    %p28 = scmp.ge.s32.totalorder %s27, 2
    %s29 = scalar_select %p28, 0, %s27
    %s30 = ssub.s32 %s18, %s25
    %p31 = scmp.eq.s32.totalorder %s30, 0
    %s33 = sadd.s32 %s32, 1
    %s34 = scalar_select %p31, %s32, %s33
    %p37 = pneg %p31
    %p38 = scmp.eq.s32.totalorder %s10, 1
    %p39 = por %p37, %p38
    %p40 = scmp.ne.s32.totalorder %s32, %s35
    %p41 = scmp.eq.s32.totalorder %s10, 0
    %p42 = por %p40, %p41
    %p43 = scmp.ne.s32.totalorder %s32, %s35
    %p44 = scmp.eq.s32.totalorder %s15, 1
    %p45 = por %p43, %p44
    %p46 = scmp.ne.s32.totalorder %s35, %s36
    %p47 = scmp.eq.s32.totalorder %s15, 0
    %p48 = por %p46, %p47
    %p49 = scmp.ne.s32.totalorder %s35, %s36
    %p50 = scmp.eq.s32.totalorder %s16, 1
    %p51 = por %p49, %p50
    %p53 = scmp.ne.s32.totalorder %s36, %s52
    %p54 = scmp.eq.s32.totalorder %s16, 0
    %p55 = por %p53, %p54
    %s56 = ssub.s32 %s17, %s29
    %p57 = scmp.eq.s32.totalorder %s56, 0
    %s59 = sadd.s32 %s58, 1
    %s60 = scalar_select %p57, %s58, %s59
    %p63 = pneg %p57
    %p64 = scmp.eq.s32.totalorder %s10, 1
    %p65 = por %p63, %p64
    %p66 = scmp.ne.s32.totalorder %s58, %s61
    %p67 = scmp.eq.s32.totalorder %s10, 0
    %p68 = por %p66, %p67
    %p69 = scmp.ne.s32.totalorder %s58, %s61
    %p70 = scmp.eq.s32.totalorder %s15, 1
    %p71 = por %p69, %p70
    %p72 = scmp.ne.s32.totalorder %s61, %s62
    %p73 = scmp.eq.s32.totalorder %s15, 0
    %p74 = por %p72, %p73
    %p75 = scmp.ne.s32.totalorder %s61, %s62
    %p76 = scmp.eq.s32.totalorder %s16, 1
    %p77 = por %p75, %p76
    %p79 = scmp.ne.s32.totalorder %s62, %s78
    %p80 = scmp.eq.s32.totalorder %s16, 0
    %p81 = por %p79, %p80
    %s83 = sadd.s32 %s82, 1
    %p86 = scmp.eq.s32.totalorder %s10, 1
    %p87 = scmp.ne.s32.totalorder %s82, %s84
    %p88 = scmp.eq.s32.totalorder %s10, 0
    %p89 = por %p87, %p88
    %p90 = scmp.ne.s32.totalorder %s82, %s84
    %p91 = scmp.eq.s32.totalorder %s15, 1
    %p92 = por %p90, %p91
    %p93 = scmp.ne.s32.totalorder %s84, %s85
    %p94 = scmp.eq.s32.totalorder %s15, 0
    %p95 = por %p93, %p94
    %p96 = scmp.ne.s32.totalorder %s84, %s85
    %p97 = scmp.eq.s32.totalorder %s16, 1
    %p98 = por %p96, %p97
    %p100 = scmp.ne.s32.totalorder %s85, %s99
    %p101 = scmp.eq.s32.totalorder %s16, 0
    %p102 = por %p100, %p101
    %s104 = sadd.s32 %s103, 1
    %p107 = scmp.eq.s32.totalorder %s10, 1
    %p108 = scmp.ne.s32.totalorder %s103, %s105
    %p109 = scmp.eq.s32.totalorder %s10, 0
    %p110 = por %p108, %p109
    %p111 = scmp.ne.s32.totalorder %s103, %s105
    %p112 = scmp.eq.s32.totalorder %s15, 1
    %p113 = por %p111, %p112
    %p114 = scmp.ne.s32.totalorder %s105, %s106
    %p115 = scmp.eq.s32.totalorder %s15, 0
    %p116 = por %p114, %p115
    %p117 = scmp.ne.s32.totalorder %s105, %s106
    %p118 = scmp.eq.s32.totalorder %s16, 1
    %p119 = por %p117, %p118
    %p121 = scmp.ne.s32.totalorder %s106, %s120
    %p122 = scmp.eq.s32.totalorder %s16, 0
    %p123 = por %p121, %p122
    %s124 = ssub.s32 %s17, %s29
    %s125 = ssub.s32 %s18, %s25
    %s126 = sor.u32 %s124, %s125
    %p127 = scmp.eq.s32.totalorder %s126, 0
    %s129 = sadd.s32 %s128, 1
    %s130 = scalar_select %p127, %s128, %s129
    %p133 = pneg %p127
    %p134 = scmp.eq.s32.totalorder %s10, 1
    %p135 = por %p133, %p134
    %p136 = scmp.ne.s32.totalorder %s128, %s131
    %p137 = scmp.eq.s32.totalorder %s10, 0
    %p138 = por %p136, %p137
    %p139 = scmp.ne.s32.totalorder %s128, %s131
    %p140 = scmp.eq.s32.totalorder %s15, 1
    %p141 = por %p139, %p140
    %p142 = scmp.ne.s32.totalorder %s131, %s132
    %p143 = scmp.eq.s32.totalorder %s15, 0
    %p144 = por %p142, %p143
    %p145 = scmp.ne.s32.totalorder %s131, %s132
    %p146 = scmp.eq.s32.totalorder %s16, 1
    %p147 = por %p145, %p146
    %p149 = scmp.ne.s32.totalorder %s132, %s148
    %p150 = scmp.eq.s32.totalorder %s16, 0
    %p151 = por %p149, %p150
    %p152 = scmp.le.s32.totalorder 1, %s10
    %p153 = scmp.lt.s32.totalorder %s10, 3
    %p154 = pnand %p152, %p153
    %p155 = pneg %p154
    // Predicated region
    $region9: #{hex_block_forward.1} parent=5 // pred_check
      _
    $region10: #{hex_block_forward.1} parent=5 // pred_check_branch
      %157 = sbr.rel (%p154) target = $region12
    $region11: #{hex_block_forward.1} parent=5 // pred_region
      %s158 = ssub.s32 %s10, 1
      // Predicated region
      $region13: #{hex_block_forward.1} parent=11 // pred_check
        %p159 = pneg %p48
      $region14: #{hex_block_forward.1} parent=11 // pred_check_branch
        %161 = sbr.rel (%p159) target = $region16
      $region15: #{hex_block_forward.1} parent=11 // pred_region
        %s162 = smul.u32 48, %s20
        %p163 = scmp.lt.s32.totalorder %s162, 47
        %s164 = scalar_select %p163, %s162, 47
        %s165 = smul.addr %s164, 8
        %s166 = scalar_lea.vmem %s0, %s165
        %s167 = smul.u32 48, %s20
      $region16: #{hex_block_forward.1} parent=11 // pred_fallthru
        _
      // Predicated region
      $region17: #{hex_block_forward.1} parent=11 // pred_check
        %p168 = pneg %p74
      $region18: #{hex_block_forward.1} parent=11 // pred_check_branch
        %170 = sbr.rel (%p168) target = $region20
      $region19: #{hex_block_forward.1} parent=11 // pred_region
        %p171 = scmp.lt.s32.totalorder %s19, 1
        %s172 = scalar_select %p171, %s19, 1
        %s173 = smul.addr %s172, 56
        %s174 = smul.addr %s173, 8
        %s175 = scalar_lea.vmem %s1, %s174
      $region20: #{hex_block_forward.1} parent=11 // pred_fallthru
        _
      // Predicated region
      $region21: #{hex_block_forward.1} parent=11 // pred_check
        %p176 = pneg %p95
      $region22: #{hex_block_forward.1} parent=11 // pred_check_branch
        %178 = sbr.rel (%p176) target = $region24
      $region23: #{hex_block_forward.1} parent=11 // pred_region
        _
      $region24: #{hex_block_forward.1} parent=11 // pred_fallthru
        _
      // Predicated region
      $region25: #{hex_block_forward.1} parent=11 // pred_check
        %p179 = pneg %p116
      $region26: #{hex_block_forward.1} parent=11 // pred_check_branch
        %181 = sbr.rel (%p179) target = $region28
      $region27: #{hex_block_forward.1} parent=11 // pred_region
        _
      $region28: #{hex_block_forward.1} parent=11 // pred_fallthru
        _
    $region12: #{hex_block_forward.1} parent=5 // pred_fallthru
      _
    %p182 = scmp.lt.s32.totalorder %s10, 2
    // Predicated region
    $region29: #{hex_block_forward.1} parent=5 // pred_check
      %p183 = pneg %p182
    $region30: #{hex_block_forward.1} parent=5 // pred_check_branch
      %185 = sbr.rel (%p183) target = $region32
    $region31: #{hex_block_forward.1} parent=5 // pred_region
      _
    $region32: #{hex_block_forward.1} parent=5 // pred_fallthru
      _
    %p186 = scmp.le.s32.totalorder 1, %s10
    %p187 = scmp.lt.s32.totalorder %s10, 3
    %p188 = pnand %p186, %p187
    %p189 = pneg %p188
    // Predicated region
    $region33: #{hex_block_forward.1} parent=5 // pred_check
      _
    $region34: #{hex_block_forward.1} parent=5 // pred_check_branch
      %191 = sbr.rel (%p188) target = $region36
    $region35: #{hex_block_forward.1} parent=5 // pred_region
      %s192 = ssub.s32 %s10, 1
      %s193 = smul.u32 48, %s20
      %p194 = scmp.lt.s32.totalorder %s193, 47
      %s195 = scalar_select %p194, %s193, 47
      %s196 = smul.addr %s195, 8
      %s197 = scalar_lea.vmem %s0, %s196
      %p198 = pneg %p48
      %p199 = pneg %p45
      %p200 = scmp.lt.s32.totalorder %s19, 1
      %s201 = scalar_select %p200, %s19, 1
      %s202 = smul.addr %s201, 56
      %s203 = smul.addr %s202, 8
      %s204 = scalar_lea.vmem %s1, %s203
      %p205 = pneg %p74
      %p206 = pneg %p71
      %p207 = pneg %p95
      %p208 = pneg %p92
      %p209 = pneg %p116
      %p210 = pneg %p113
      %p211 = pneg %p144
      %p212 = pneg %p141
      %s213 = smul.u32 48, %s20
      %p214 = scmp.lt.s32.totalorder %s19, 1
      %s215 = scalar_select %p214, %s19, 1
      %p216 = scmp.lt.s32.totalorder %s213, 47
      %s217 = scalar_select %p216, %s213, 47
      %s218 = smul.addr %s215, 48
      %s219 = sadd.s32 %s217, %s218
      %s220 = smul.addr %s219, 8
      %s221 = scalar_lea.vmem %s4, %s220
      %s222 = smul.u32 48, %s20
      %p223 = scmp.lt.s32.totalorder %s222, 47
      %s224 = scalar_select %p223, %s222, 47
      %s225 = smul.addr %s224, 8
      %s226 = scalar_lea.vmem %s0, %s225
      %s227 = smul.u32 48, %s20
      %p228 = scmp.lt.s32.totalorder %s19, 1
      %s229 = scalar_select %p228, %s19, 1
      %s230 = smul.addr %s229, 56
      %s231 = smul.addr %s230, 8
      %s232 = scalar_lea.vmem %s1, %s231
      %s233 = smul.u32 48, %s20
      %p234 = scmp.lt.s32.totalorder %s19, 1
      %s235 = scalar_select %p234, %s19, 1
      %p236 = scmp.lt.s32.totalorder %s233, 47
      %s237 = scalar_select %p236, %s233, 47
      %s238 = smul.addr %s235, 48
      %s239 = sadd.s32 %s237, %s238
      %s240 = smul.addr %s239, 8
      %s241 = scalar_lea.vmem %s4, %s240
      %s242 = smul.u32 48, %s20
      %s243 = smul.u32 %s20, 384
      %s244 = sadd.s32 %s243, 32
      %s245 = scalar_lea.vmem %s232, %s244
      %v246 = vld [vmem:[%s245] sm:$0xff]
      %v247 = vld [vmem:[%s245 + $0x8] sm:$0xff]
      %v248 = vld [vmem:[%s245 + $0x10] sm:$0xff]
      %v249 = vld [vmem:[%s245 + $0x18] sm:$0xff]
      %v250 = vld [vmem:[%s245 + $0x20] sm:$0xff]
      %v251 = vld [vmem:[%s245 + $0x28] sm:$0xff]
      %v252 = vld [vmem:[%s245 + $0x30] sm:$0xff]
      %v253 = vld [vmem:[%s245 + $0x38] sm:$0xff]
      %v254 = vld [vmem:[%s245 + $0x40] sm:$0xff]
      %v255 = vld [vmem:[%s245 + $0x48] sm:$0xff]
      %v256 = vld [vmem:[%s245 + $0x50] sm:$0xff]
      %v257 = vld [vmem:[%s245 + $0x58] sm:$0xff]
      %v258 = vld [vmem:[%s245 + $0x60] sm:$0xff]
      %v259 = vld [vmem:[%s245 + $0x68] sm:$0xff]
      %v260 = vld [vmem:[%s245 + $0x70] sm:$0xff]
      %v261 = vld [vmem:[%s245 + $0x78] sm:$0xff]
      %v262 = vld [vmem:[%s245 + $0x80] sm:$0xff]
      %v263 = vld [vmem:[%s245 + $0x88] sm:$0xff]
      %v264 = vld [vmem:[%s245 + $0x90] sm:$0xff]
      %v265 = vld [vmem:[%s245 + $0x98] sm:$0xff]
      %v266 = vld [vmem:[%s245 + $0xa0] sm:$0xff]
      %v267 = vld [vmem:[%s245 + $0xa8] sm:$0xff]
      %v268 = vld [vmem:[%s245 + $0xb0] sm:$0xff]
      %v269 = vld [vmem:[%s245 + $0xb8] sm:$0xff]
      %v270 = vld [vmem:[%s245 + $0xc0] sm:$0xff]
      %v271 = vld [vmem:[%s245 + $0xc8] sm:$0xff]
      %v272 = vld [vmem:[%s245 + $0xd0] sm:$0xff]
      %v273 = vld [vmem:[%s245 + $0xd8] sm:$0xff]
      %v274 = vld [vmem:[%s245 + $0xe0] sm:$0xff]
      %v275 = vld [vmem:[%s245 + $0xe8] sm:$0xff]
      %v276 = vld [vmem:[%s245 + $0xf0] sm:$0xff]
      %v277 = vld [vmem:[%s245 + $0xf8] sm:$0xff]
      %v278 = vld [vmem:[%s245 + $0x100] sm:$0xff]
      %v279 = vld [vmem:[%s245 + $0x108] sm:$0xff]
      %v280 = vld [vmem:[%s245 + $0x110] sm:$0xff]
      %v281 = vld [vmem:[%s245 + $0x118] sm:$0xff]
      %v282 = vld [vmem:[%s245 + $0x120] sm:$0xff]
      %v283 = vld [vmem:[%s245 + $0x128] sm:$0xff]
      %v284 = vld [vmem:[%s245 + $0x130] sm:$0xff]
      %v285 = vld [vmem:[%s245 + $0x138] sm:$0xff]
      %v286 = vld [vmem:[%s245 + $0x140] sm:$0xff]
      %v287 = vld [vmem:[%s245 + $0x148] sm:$0xff]
      %v288 = vld [vmem:[%s245 + $0x150] sm:$0xff]
      %v289 = vld [vmem:[%s245 + $0x158] sm:$0xff]
      %v290 = vld [vmem:[%s245 + $0x160] sm:$0xff]
      %v291 = vld [vmem:[%s245 + $0x168] sm:$0xff]
      %v292 = vld [vmem:[%s245 + $0x170] sm:$0xff]
      %v293 = vld [vmem:[%s245 + $0x178] sm:$0xff]
      %s294 = sadd.s32 %s243, 8
      %s295 = scalar_lea.vmem %s232, %s294
      %v296 = vld [vmem:[%s295] sm:$0xff]
      %v297 = vld [vmem:[%s295 + $0x8] sm:$0xff]
      %v298 = vld [vmem:[%s295 + $0x10] sm:$0xff]
      %v299 = vld [vmem:[%s295 + $0x18] sm:$0xff]
      %v300 = vld [vmem:[%s295 + $0x20] sm:$0xff]
      %v301 = vld [vmem:[%s295 + $0x28] sm:$0xff]
      %v302 = vld [vmem:[%s295 + $0x30] sm:$0xff]
      %v303 = vld [vmem:[%s295 + $0x38] sm:$0xff]
      %v304 = vld [vmem:[%s295 + $0x40] sm:$0xff]
      %v305 = vld [vmem:[%s295 + $0x48] sm:$0xff]
      %v306 = vld [vmem:[%s295 + $0x50] sm:$0xff]
      %v307 = vld [vmem:[%s295 + $0x58] sm:$0xff]
      %v308 = vld [vmem:[%s295 + $0x60] sm:$0xff]
      %v309 = vld [vmem:[%s295 + $0x68] sm:$0xff]
      %v310 = vld [vmem:[%s295 + $0x70] sm:$0xff]
      %v311 = vld [vmem:[%s295 + $0x78] sm:$0xff]
      %v312 = vld [vmem:[%s295 + $0x80] sm:$0xff]
      %v313 = vld [vmem:[%s295 + $0x88] sm:$0xff]
      %v314 = vld [vmem:[%s295 + $0x90] sm:$0xff]
      %v315 = vld [vmem:[%s295 + $0x98] sm:$0xff]
      %v316 = vld [vmem:[%s295 + $0xa0] sm:$0xff]
      %v317 = vld [vmem:[%s295 + $0xa8] sm:$0xff]
      %v318 = vld [vmem:[%s295 + $0xb0] sm:$0xff]
      %v319 = vld [vmem:[%s295 + $0xb8] sm:$0xff]
      %v320 = vld [vmem:[%s295 + $0xc0] sm:$0xff]
      %v321 = vld [vmem:[%s295 + $0xc8] sm:$0xff]
      %v322 = vld [vmem:[%s295 + $0xd0] sm:$0xff]
      %v323 = vld [vmem:[%s295 + $0xd8] sm:$0xff]
      %v324 = vld [vmem:[%s295 + $0xe0] sm:$0xff]
      %v325 = vld [vmem:[%s295 + $0xe8] sm:$0xff]
      %v326 = vld [vmem:[%s295 + $0xf0] sm:$0xff]
      %v327 = vld [vmem:[%s295 + $0xf8] sm:$0xff]
      %v328 = vld [vmem:[%s295 + $0x100] sm:$0xff]
      %v329 = vld [vmem:[%s295 + $0x108] sm:$0xff]
      %v330 = vld [vmem:[%s295 + $0x110] sm:$0xff]
      %v331 = vld [vmem:[%s295 + $0x118] sm:$0xff]
      %v332 = vld [vmem:[%s295 + $0x120] sm:$0xff]
      %v333 = vld [vmem:[%s295 + $0x128] sm:$0xff]
      %v334 = vld [vmem:[%s295 + $0x130] sm:$0xff]
      %v335 = vld [vmem:[%s295 + $0x138] sm:$0xff]
      %v336 = vld [vmem:[%s295 + $0x140] sm:$0xff]
      %v337 = vld [vmem:[%s295 + $0x148] sm:$0xff]
      %v338 = vld [vmem:[%s295 + $0x150] sm:$0xff]
      %v339 = vld [vmem:[%s295 + $0x158] sm:$0xff]
      %v340 = vld [vmem:[%s295 + $0x160] sm:$0xff]
      %v341 = vld [vmem:[%s295 + $0x168] sm:$0xff]
      %v342 = vld [vmem:[%s295 + $0x170] sm:$0xff]
      %v343 = vld [vmem:[%s295 + $0x178] sm:$0xff]
      %s344 = sadd.s32 %s243, 56
      %s345 = scalar_lea.vmem %s232, %s344
      %v346 = vld [vmem:[%s345] sm:$0xff]
      %v347 = vld [vmem:[%s345 + $0x8] sm:$0xff]
      %v348 = vld [vmem:[%s345 + $0x10] sm:$0xff]
      %v349 = vld [vmem:[%s345 + $0x18] sm:$0xff]
      %v350 = vld [vmem:[%s345 + $0x20] sm:$0xff]
      %v351 = vld [vmem:[%s345 + $0x28] sm:$0xff]
      %v352 = vld [vmem:[%s345 + $0x30] sm:$0xff]
      %v353 = vld [vmem:[%s345 + $0x38] sm:$0xff]
      %v354 = vld [vmem:[%s345 + $0x40] sm:$0xff]
      %v355 = vld [vmem:[%s345 + $0x48] sm:$0xff]
      %v356 = vld [vmem:[%s345 + $0x50] sm:$0xff]
      %v357 = vld [vmem:[%s345 + $0x58] sm:$0xff]
      %v358 = vld [vmem:[%s345 + $0x60] sm:$0xff]
      %v359 = vld [vmem:[%s345 + $0x68] sm:$0xff]
      %v360 = vld [vmem:[%s345 + $0x70] sm:$0xff]
      %v361 = vld [vmem:[%s345 + $0x78] sm:$0xff]
      %v362 = vld [vmem:[%s345 + $0x80] sm:$0xff]
      %v363 = vld [vmem:[%s345 + $0x88] sm:$0xff]
      %v364 = vld [vmem:[%s345 + $0x90] sm:$0xff]
      %v365 = vld [vmem:[%s345 + $0x98] sm:$0xff]
      %v366 = vld [vmem:[%s345 + $0xa0] sm:$0xff]
      %v367 = vld [vmem:[%s345 + $0xa8] sm:$0xff]
      %v368 = vld [vmem:[%s345 + $0xb0] sm:$0xff]
      %v369 = vld [vmem:[%s345 + $0xb8] sm:$0xff]
      %v370 = vld [vmem:[%s345 + $0xc0] sm:$0xff]
      %v371 = vld [vmem:[%s345 + $0xc8] sm:$0xff]
      %v372 = vld [vmem:[%s345 + $0xd0] sm:$0xff]
      %v373 = vld [vmem:[%s345 + $0xd8] sm:$0xff]
      %v374 = vld [vmem:[%s345 + $0xe0] sm:$0xff]
      %v375 = vld [vmem:[%s345 + $0xe8] sm:$0xff]
      %v376 = vld [vmem:[%s345 + $0xf0] sm:$0xff]
      %v377 = vld [vmem:[%s345 + $0xf8] sm:$0xff]
      %v378 = vld [vmem:[%s345 + $0x100] sm:$0xff]
      %v379 = vld [vmem:[%s345 + $0x108] sm:$0xff]
      %v380 = vld [vmem:[%s345 + $0x110] sm:$0xff]
      %v381 = vld [vmem:[%s345 + $0x118] sm:$0xff]
      %v382 = vld [vmem:[%s345 + $0x120] sm:$0xff]
      %v383 = vld [vmem:[%s345 + $0x128] sm:$0xff]
      %v384 = vld [vmem:[%s345 + $0x130] sm:$0xff]
      %v385 = vld [vmem:[%s345 + $0x138] sm:$0xff]
      %v386 = vld [vmem:[%s345 + $0x140] sm:$0xff]
      %v387 = vld [vmem:[%s345 + $0x148] sm:$0xff]
      %v388 = vld [vmem:[%s345 + $0x150] sm:$0xff]
      %v389 = vld [vmem:[%s345 + $0x158] sm:$0xff]
      %v390 = vld [vmem:[%s345 + $0x160] sm:$0xff]
      %v391 = vld [vmem:[%s345 + $0x168] sm:$0xff]
      %v392 = vld [vmem:[%s345 + $0x170] sm:$0xff]
      %v393 = vld [vmem:[%s345 + $0x178] sm:$0xff]
      %s394 = sadd.s32 %s243, 31
      %s395 = scalar_lea.vmem %s232, %s394
      %v396 = vld [vmem:[%s395] sm:$0xff]
      %v397 = vld [vmem:[%s395 + $0x8] sm:$0xff]
      %v398 = vld [vmem:[%s395 + $0x10] sm:$0xff]
      %v399 = vld [vmem:[%s395 + $0x18] sm:$0xff]
      %v400 = vld [vmem:[%s395 + $0x20] sm:$0xff]
      %v401 = vld [vmem:[%s395 + $0x28] sm:$0xff]
      %v402 = vld [vmem:[%s395 + $0x30] sm:$0xff]
      %v403 = vld [vmem:[%s395 + $0x38] sm:$0xff]
      %v404 = vld [vmem:[%s395 + $0x40] sm:$0xff]
      %v405 = vld [vmem:[%s395 + $0x48] sm:$0xff]
      %v406 = vld [vmem:[%s395 + $0x50] sm:$0xff]
      %v407 = vld [vmem:[%s395 + $0x58] sm:$0xff]
      %v408 = vld [vmem:[%s395 + $0x60] sm:$0xff]
      %v409 = vld [vmem:[%s395 + $0x68] sm:$0xff]
      %v410 = vld [vmem:[%s395 + $0x70] sm:$0xff]
      %v411 = vld [vmem:[%s395 + $0x78] sm:$0xff]
      %v412 = vld [vmem:[%s395 + $0x80] sm:$0xff]
      %v413 = vld [vmem:[%s395 + $0x88] sm:$0xff]
      %v414 = vld [vmem:[%s395 + $0x90] sm:$0xff]
      %v415 = vld [vmem:[%s395 + $0x98] sm:$0xff]
      %v416 = vld [vmem:[%s395 + $0xa0] sm:$0xff]
      %v417 = vld [vmem:[%s395 + $0xa8] sm:$0xff]
      %v418 = vld [vmem:[%s395 + $0xb0] sm:$0xff]
      %v419 = vld [vmem:[%s395 + $0xb8] sm:$0xff]
      %v420 = vld [vmem:[%s395 + $0xc0] sm:$0xff]
      %v421 = vld [vmem:[%s395 + $0xc8] sm:$0xff]
      %v422 = vld [vmem:[%s395 + $0xd0] sm:$0xff]
      %v423 = vld [vmem:[%s395 + $0xd8] sm:$0xff]
      %v424 = vld [vmem:[%s395 + $0xe0] sm:$0xff]
      %v425 = vld [vmem:[%s395 + $0xe8] sm:$0xff]
      %v426 = vld [vmem:[%s395 + $0xf0] sm:$0xff]
      %v427 = vld [vmem:[%s395 + $0xf8] sm:$0xff]
      %v428 = vld [vmem:[%s395 + $0x100] sm:$0xff]
      %v429 = vld [vmem:[%s395 + $0x108] sm:$0xff]
      %v430 = vld [vmem:[%s395 + $0x110] sm:$0xff]
      %v431 = vld [vmem:[%s395 + $0x118] sm:$0xff]
      %v432 = vld [vmem:[%s395 + $0x120] sm:$0xff]
      %v433 = vld [vmem:[%s395 + $0x128] sm:$0xff]
      %v434 = vld [vmem:[%s395 + $0x130] sm:$0xff]
      %v435 = vld [vmem:[%s395 + $0x138] sm:$0xff]
      %v436 = vld [vmem:[%s395 + $0x140] sm:$0xff]
      %v437 = vld [vmem:[%s395 + $0x148] sm:$0xff]
      %v438 = vld [vmem:[%s395 + $0x150] sm:$0xff]
      %v439 = vld [vmem:[%s395 + $0x158] sm:$0xff]
      %v440 = vld [vmem:[%s395 + $0x160] sm:$0xff]
      %v441 = vld [vmem:[%s395 + $0x168] sm:$0xff]
      %v442 = vld [vmem:[%s395 + $0x170] sm:$0xff]
      %v443 = vld [vmem:[%s395 + $0x178] sm:$0xff]
      %s444 = sadd.s32 %s243, 33
      %s445 = scalar_lea.vmem %s232, %s444
      %v446 = vld [vmem:[%s445] sm:$0xff]
      %v447 = vld [vmem:[%s445 + $0x8] sm:$0xff]
      %v448 = vld [vmem:[%s445 + $0x10] sm:$0xff]
      %v449 = vld [vmem:[%s445 + $0x18] sm:$0xff]
      %v450 = vld [vmem:[%s445 + $0x20] sm:$0xff]
      %v451 = vld [vmem:[%s445 + $0x28] sm:$0xff]
      %v452 = vld [vmem:[%s445 + $0x30] sm:$0xff]
      %v453 = vld [vmem:[%s445 + $0x38] sm:$0xff]
      %v454 = vld [vmem:[%s445 + $0x40] sm:$0xff]
      %v455 = vld [vmem:[%s445 + $0x48] sm:$0xff]
      %v456 = vld [vmem:[%s445 + $0x50] sm:$0xff]
      %v457 = vld [vmem:[%s445 + $0x58] sm:$0xff]
      %v458 = vld [vmem:[%s445 + $0x60] sm:$0xff]
      %v459 = vld [vmem:[%s445 + $0x68] sm:$0xff]
      %v460 = vld [vmem:[%s445 + $0x70] sm:$0xff]
      %v461 = vld [vmem:[%s445 + $0x78] sm:$0xff]
      %v462 = vld [vmem:[%s445 + $0x80] sm:$0xff]
      %v463 = vld [vmem:[%s445 + $0x88] sm:$0xff]
      %v464 = vld [vmem:[%s445 + $0x90] sm:$0xff]
      %v465 = vld [vmem:[%s445 + $0x98] sm:$0xff]
      %v466 = vld [vmem:[%s445 + $0xa0] sm:$0xff]
      %v467 = vld [vmem:[%s445 + $0xa8] sm:$0xff]
      %v468 = vld [vmem:[%s445 + $0xb0] sm:$0xff]
      %v469 = vld [vmem:[%s445 + $0xb8] sm:$0xff]
      %v470 = vld [vmem:[%s445 + $0xc0] sm:$0xff]
      %v471 = vld [vmem:[%s445 + $0xc8] sm:$0xff]
      %v472 = vld [vmem:[%s445 + $0xd0] sm:$0xff]
      %v473 = vld [vmem:[%s445 + $0xd8] sm:$0xff]
      %v474 = vld [vmem:[%s445 + $0xe0] sm:$0xff]
      %v475 = vld [vmem:[%s445 + $0xe8] sm:$0xff]
      %v476 = vld [vmem:[%s445 + $0xf0] sm:$0xff]
      %v477 = vld [vmem:[%s445 + $0xf8] sm:$0xff]
      %v478 = vld [vmem:[%s445 + $0x100] sm:$0xff]
      %v479 = vld [vmem:[%s445 + $0x108] sm:$0xff]
      %v480 = vld [vmem:[%s445 + $0x110] sm:$0xff]
      %v481 = vld [vmem:[%s445 + $0x118] sm:$0xff]
      %v482 = vld [vmem:[%s445 + $0x120] sm:$0xff]
      %v483 = vld [vmem:[%s445 + $0x128] sm:$0xff]
      %v484 = vld [vmem:[%s445 + $0x130] sm:$0xff]
      %v485 = vld [vmem:[%s445 + $0x138] sm:$0xff]
      %v486 = vld [vmem:[%s445 + $0x140] sm:$0xff]
      %v487 = vld [vmem:[%s445 + $0x148] sm:$0xff]
      %v488 = vld [vmem:[%s445 + $0x150] sm:$0xff]
      %v489 = vld [vmem:[%s445 + $0x158] sm:$0xff]
      %v490 = vld [vmem:[%s445 + $0x160] sm:$0xff]
      %v491 = vld [vmem:[%s445 + $0x168] sm:$0xff]
      %v492 = vld [vmem:[%s445 + $0x170] sm:$0xff]
      %v493 = vld [vmem:[%s445 + $0x178] sm:$0xff]
      %s494 = sadd.s32 %s243, 7
      %s495 = scalar_lea.vmem %s232, %s494
      %v496 = vld [vmem:[%s495] sm:$0xff]
      %v497 = vld [vmem:[%s495 + $0x8] sm:$0xff]
      %v498 = vld [vmem:[%s495 + $0x10] sm:$0xff]
      %v499 = vld [vmem:[%s495 + $0x18] sm:$0xff]
      %v500 = vld [vmem:[%s495 + $0x20] sm:$0xff]
      %v501 = vld [vmem:[%s495 + $0x28] sm:$0xff]
      %v502 = vld [vmem:[%s495 + $0x30] sm:$0xff]
      %v503 = vld [vmem:[%s495 + $0x38] sm:$0xff]
      %v504 = vld [vmem:[%s495 + $0x40] sm:$0xff]
      %v505 = vld [vmem:[%s495 + $0x48] sm:$0xff]
      %v506 = vld [vmem:[%s495 + $0x50] sm:$0xff]
      %v507 = vld [vmem:[%s495 + $0x58] sm:$0xff]
      %v508 = vld [vmem:[%s495 + $0x60] sm:$0xff]
      %v509 = vld [vmem:[%s495 + $0x68] sm:$0xff]
      %v510 = vld [vmem:[%s495 + $0x70] sm:$0xff]
      %v511 = vld [vmem:[%s495 + $0x78] sm:$0xff]
      %v512 = vld [vmem:[%s495 + $0x80] sm:$0xff]
      %v513 = vld [vmem:[%s495 + $0x88] sm:$0xff]
      %v514 = vld [vmem:[%s495 + $0x90] sm:$0xff]
      %v515 = vld [vmem:[%s495 + $0x98] sm:$0xff]
      %v516 = vld [vmem:[%s495 + $0xa0] sm:$0xff]
      %v517 = vld [vmem:[%s495 + $0xa8] sm:$0xff]
      %v518 = vld [vmem:[%s495 + $0xb0] sm:$0xff]
      %v519 = vld [vmem:[%s495 + $0xb8] sm:$0xff]
      %v520 = vld [vmem:[%s495 + $0xc0] sm:$0xff]
      %v521 = vld [vmem:[%s495 + $0xc8] sm:$0xff]
      %v522 = vld [vmem:[%s495 + $0xd0] sm:$0xff]
      %v523 = vld [vmem:[%s495 + $0xd8] sm:$0xff]
      %v524 = vld [vmem:[%s495 + $0xe0] sm:$0xff]
      %v525 = vld [vmem:[%s495 + $0xe8] sm:$0xff]
      %v526 = vld [vmem:[%s495 + $0xf0] sm:$0xff]
      %v527 = vld [vmem:[%s495 + $0xf8] sm:$0xff]
      %v528 = vld [vmem:[%s495 + $0x100] sm:$0xff]
      %v529 = vld [vmem:[%s495 + $0x108] sm:$0xff]
      %v530 = vld [vmem:[%s495 + $0x110] sm:$0xff]
      %v531 = vld [vmem:[%s495 + $0x118] sm:$0xff]
      %v532 = vld [vmem:[%s495 + $0x120] sm:$0xff]
      %v533 = vld [vmem:[%s495 + $0x128] sm:$0xff]
      %v534 = vld [vmem:[%s495 + $0x130] sm:$0xff]
      %v535 = vld [vmem:[%s495 + $0x138] sm:$0xff]
      %v536 = vld [vmem:[%s495 + $0x140] sm:$0xff]
      %v537 = vld [vmem:[%s495 + $0x148] sm:$0xff]
      %v538 = vld [vmem:[%s495 + $0x150] sm:$0xff]
      %v539 = vld [vmem:[%s495 + $0x158] sm:$0xff]
      %v540 = vld [vmem:[%s495 + $0x160] sm:$0xff]
      %v541 = vld [vmem:[%s495 + $0x168] sm:$0xff]
      %v542 = vld [vmem:[%s495 + $0x170] sm:$0xff]
      %v543 = vld [vmem:[%s495 + $0x178] sm:$0xff]
      %s544 = sadd.s32 %s243, 9
      %s545 = scalar_lea.vmem %s232, %s544
      %v546 = vld [vmem:[%s545] sm:$0xff]
      %v547 = vld [vmem:[%s545 + $0x8] sm:$0xff]
      %v548 = vld [vmem:[%s545 + $0x10] sm:$0xff]
      %v549 = vld [vmem:[%s545 + $0x18] sm:$0xff]
      %v550 = vld [vmem:[%s545 + $0x20] sm:$0xff]
      %v551 = vld [vmem:[%s545 + $0x28] sm:$0xff]
      %v552 = vld [vmem:[%s545 + $0x30] sm:$0xff]
      %v553 = vld [vmem:[%s545 + $0x38] sm:$0xff]
      %v554 = vld [vmem:[%s545 + $0x40] sm:$0xff]
      %v555 = vld [vmem:[%s545 + $0x48] sm:$0xff]
      %v556 = vld [vmem:[%s545 + $0x50] sm:$0xff]
      %v557 = vld [vmem:[%s545 + $0x58] sm:$0xff]
      %v558 = vld [vmem:[%s545 + $0x60] sm:$0xff]
      %v559 = vld [vmem:[%s545 + $0x68] sm:$0xff]
      %v560 = vld [vmem:[%s545 + $0x70] sm:$0xff]
      %v561 = vld [vmem:[%s545 + $0x78] sm:$0xff]
      %v562 = vld [vmem:[%s545 + $0x80] sm:$0xff]
      %v563 = vld [vmem:[%s545 + $0x88] sm:$0xff]
      %v564 = vld [vmem:[%s545 + $0x90] sm:$0xff]
      %v565 = vld [vmem:[%s545 + $0x98] sm:$0xff]
      %v566 = vld [vmem:[%s545 + $0xa0] sm:$0xff]
      %v567 = vld [vmem:[%s545 + $0xa8] sm:$0xff]
      %v568 = vld [vmem:[%s545 + $0xb0] sm:$0xff]
      %v569 = vld [vmem:[%s545 + $0xb8] sm:$0xff]
      %v570 = vld [vmem:[%s545 + $0xc0] sm:$0xff]
      %v571 = vld [vmem:[%s545 + $0xc8] sm:$0xff]
      %v572 = vld [vmem:[%s545 + $0xd0] sm:$0xff]
      %v573 = vld [vmem:[%s545 + $0xd8] sm:$0xff]
      %v574 = vld [vmem:[%s545 + $0xe0] sm:$0xff]
      %v575 = vld [vmem:[%s545 + $0xe8] sm:$0xff]
      %v576 = vld [vmem:[%s545 + $0xf0] sm:$0xff]
      %v577 = vld [vmem:[%s545 + $0xf8] sm:$0xff]
      %v578 = vld [vmem:[%s545 + $0x100] sm:$0xff]
      %v579 = vld [vmem:[%s545 + $0x108] sm:$0xff]
      %v580 = vld [vmem:[%s545 + $0x110] sm:$0xff]
      %v581 = vld [vmem:[%s545 + $0x118] sm:$0xff]
      %v582 = vld [vmem:[%s545 + $0x120] sm:$0xff]
      %v583 = vld [vmem:[%s545 + $0x128] sm:$0xff]
      %v584 = vld [vmem:[%s545 + $0x130] sm:$0xff]
      %v585 = vld [vmem:[%s545 + $0x138] sm:$0xff]
      %v586 = vld [vmem:[%s545 + $0x140] sm:$0xff]
      %v587 = vld [vmem:[%s545 + $0x148] sm:$0xff]
      %v588 = vld [vmem:[%s545 + $0x150] sm:$0xff]
      %v589 = vld [vmem:[%s545 + $0x158] sm:$0xff]
      %v590 = vld [vmem:[%s545 + $0x160] sm:$0xff]
      %v591 = vld [vmem:[%s545 + $0x168] sm:$0xff]
      %v592 = vld [vmem:[%s545 + $0x170] sm:$0xff]
      %v593 = vld [vmem:[%s545 + $0x178] sm:$0xff]
      %s594 = sadd.s32 %s243, 55
      %s595 = scalar_lea.vmem %s232, %s594
      %v596 = vld [vmem:[%s595] sm:$0xff]
      %v597 = vld [vmem:[%s595 + $0x8] sm:$0xff]
      %v598 = vld [vmem:[%s595 + $0x10] sm:$0xff]
      %v599 = vld [vmem:[%s595 + $0x18] sm:$0xff]
      %v600 = vld [vmem:[%s595 + $0x20] sm:$0xff]
      %v601 = vld [vmem:[%s595 + $0x28] sm:$0xff]
      %v602 = vld [vmem:[%s595 + $0x30] sm:$0xff]
      %v603 = vld [vmem:[%s595 + $0x38] sm:$0xff]
      %v604 = vld [vmem:[%s595 + $0x40] sm:$0xff]
      %v605 = vld [vmem:[%s595 + $0x48] sm:$0xff]
      %v606 = vld [vmem:[%s595 + $0x50] sm:$0xff]
      %v607 = vld [vmem:[%s595 + $0x58] sm:$0xff]
      %v608 = vld [vmem:[%s595 + $0x60] sm:$0xff]
      %v609 = vld [vmem:[%s595 + $0x68] sm:$0xff]
      %v610 = vld [vmem:[%s595 + $0x70] sm:$0xff]
      %v611 = vld [vmem:[%s595 + $0x78] sm:$0xff]
      %v612 = vld [vmem:[%s595 + $0x80] sm:$0xff]
      %v613 = vld [vmem:[%s595 + $0x88] sm:$0xff]
      %v614 = vld [vmem:[%s595 + $0x90] sm:$0xff]
      %v615 = vld [vmem:[%s595 + $0x98] sm:$0xff]
      %v616 = vld [vmem:[%s595 + $0xa0] sm:$0xff]
      %v617 = vld [vmem:[%s595 + $0xa8] sm:$0xff]
      %v618 = vld [vmem:[%s595 + $0xb0] sm:$0xff]
      %v619 = vld [vmem:[%s595 + $0xb8] sm:$0xff]
      %v620 = vld [vmem:[%s595 + $0xc0] sm:$0xff]
      %v621 = vld [vmem:[%s595 + $0xc8] sm:$0xff]
      %v622 = vld [vmem:[%s595 + $0xd0] sm:$0xff]
      %v623 = vld [vmem:[%s595 + $0xd8] sm:$0xff]
      %v624 = vld [vmem:[%s595 + $0xe0] sm:$0xff]
      %v625 = vld [vmem:[%s595 + $0xe8] sm:$0xff]
      %v626 = vld [vmem:[%s595 + $0xf0] sm:$0xff]
      %v627 = vld [vmem:[%s595 + $0xf8] sm:$0xff]
      %v628 = vld [vmem:[%s595 + $0x100] sm:$0xff]
      %v629 = vld [vmem:[%s595 + $0x108] sm:$0xff]
      %v630 = vld [vmem:[%s595 + $0x110] sm:$0xff]
      %v631 = vld [vmem:[%s595 + $0x118] sm:$0xff]
      %v632 = vld [vmem:[%s595 + $0x120] sm:$0xff]
      %v633 = vld [vmem:[%s595 + $0x128] sm:$0xff]
      %v634 = vld [vmem:[%s595 + $0x130] sm:$0xff]
      %v635 = vld [vmem:[%s595 + $0x138] sm:$0xff]
      %v636 = vld [vmem:[%s595 + $0x140] sm:$0xff]
      %v637 = vld [vmem:[%s595 + $0x148] sm:$0xff]
      %v638 = vld [vmem:[%s595 + $0x150] sm:$0xff]
      %v639 = vld [vmem:[%s595 + $0x158] sm:$0xff]
      %v640 = vld [vmem:[%s595 + $0x160] sm:$0xff]
      %v641 = vld [vmem:[%s595 + $0x168] sm:$0xff]
      %v642 = vld [vmem:[%s595 + $0x170] sm:$0xff]
      %v643 = vld [vmem:[%s595 + $0x178] sm:$0xff]
      %s644 = sadd.s32 %s243, 57
      %s645 = scalar_lea.vmem %s232, %s644
      %v646 = vld [vmem:[%s645] sm:$0xff]
      %v647 = vld [vmem:[%s645 + $0x8] sm:$0xff]
      %v648 = vld [vmem:[%s645 + $0x10] sm:$0xff]
      %v649 = vld [vmem:[%s645 + $0x18] sm:$0xff]
      %v650 = vld [vmem:[%s645 + $0x20] sm:$0xff]
      %v651 = vld [vmem:[%s645 + $0x28] sm:$0xff]
      %v652 = vld [vmem:[%s645 + $0x30] sm:$0xff]
      %v653 = vld [vmem:[%s645 + $0x38] sm:$0xff]
      %v654 = vld [vmem:[%s645 + $0x40] sm:$0xff]
      %v655 = vld [vmem:[%s645 + $0x48] sm:$0xff]
      %v656 = vld [vmem:[%s645 + $0x50] sm:$0xff]
      %v657 = vld [vmem:[%s645 + $0x58] sm:$0xff]
      %v658 = vld [vmem:[%s645 + $0x60] sm:$0xff]
      %v659 = vld [vmem:[%s645 + $0x68] sm:$0xff]
      %v660 = vld [vmem:[%s645 + $0x70] sm:$0xff]
      %v661 = vld [vmem:[%s645 + $0x78] sm:$0xff]
      %v662 = vld [vmem:[%s645 + $0x80] sm:$0xff]
      %v663 = vld [vmem:[%s645 + $0x88] sm:$0xff]
      %v664 = vld [vmem:[%s645 + $0x90] sm:$0xff]
      %v665 = vld [vmem:[%s645 + $0x98] sm:$0xff]
      %v666 = vld [vmem:[%s645 + $0xa0] sm:$0xff]
      %v667 = vld [vmem:[%s645 + $0xa8] sm:$0xff]
      %v668 = vld [vmem:[%s645 + $0xb0] sm:$0xff]
      %v669 = vld [vmem:[%s645 + $0xb8] sm:$0xff]
      %v670 = vld [vmem:[%s645 + $0xc0] sm:$0xff]
      %v671 = vld [vmem:[%s645 + $0xc8] sm:$0xff]
      %v672 = vld [vmem:[%s645 + $0xd0] sm:$0xff]
      %v673 = vld [vmem:[%s645 + $0xd8] sm:$0xff]
      %v674 = vld [vmem:[%s645 + $0xe0] sm:$0xff]
      %v675 = vld [vmem:[%s645 + $0xe8] sm:$0xff]
      %v676 = vld [vmem:[%s645 + $0xf0] sm:$0xff]
      %v677 = vld [vmem:[%s645 + $0xf8] sm:$0xff]
      %v678 = vld [vmem:[%s645 + $0x100] sm:$0xff]
      %v679 = vld [vmem:[%s645 + $0x108] sm:$0xff]
      %v680 = vld [vmem:[%s645 + $0x110] sm:$0xff]
      %v681 = vld [vmem:[%s645 + $0x118] sm:$0xff]
      %v682 = vld [vmem:[%s645 + $0x120] sm:$0xff]
      %v683 = vld [vmem:[%s645 + $0x128] sm:$0xff]
      %v684 = vld [vmem:[%s645 + $0x130] sm:$0xff]
      %v685 = vld [vmem:[%s645 + $0x138] sm:$0xff]
      %v686 = vld [vmem:[%s645 + $0x140] sm:$0xff]
      %v687 = vld [vmem:[%s645 + $0x148] sm:$0xff]
      %v688 = vld [vmem:[%s645 + $0x150] sm:$0xff]
      %v689 = vld [vmem:[%s645 + $0x158] sm:$0xff]
      %v690 = vld [vmem:[%s645 + $0x160] sm:$0xff]
      %v691 = vld [vmem:[%s645 + $0x168] sm:$0xff]
      %v692 = vld [vmem:[%s645 + $0x170] sm:$0xff]
      %v693 = vld [vmem:[%s645 + $0x178] sm:$0xff]
      %v694 = vld [vmem:[%s226] sm:$0xff]
      %v695 = vld [vmem:[%s226 + $0x8] sm:$0xff]
      %v696 = vld [vmem:[%s226 + $0x10] sm:$0xff]
      %v697 = vld [vmem:[%s226 + $0x18] sm:$0xff]
      %v698 = vld [vmem:[%s226 + $0x20] sm:$0xff]
      %v699 = vld [vmem:[%s226 + $0x28] sm:$0xff]
      %v700 = vld [vmem:[%s226 + $0x30] sm:$0xff]
      %v701 = vld [vmem:[%s226 + $0x38] sm:$0xff]
      %v702 = vld [vmem:[%s226 + $0x40] sm:$0xff]
      %v703 = vld [vmem:[%s226 + $0x48] sm:$0xff]
      %v704 = vld [vmem:[%s226 + $0x50] sm:$0xff]
      %v705 = vld [vmem:[%s226 + $0x58] sm:$0xff]
      %v706 = vld [vmem:[%s226 + $0x60] sm:$0xff]
      %v707 = vld [vmem:[%s226 + $0x68] sm:$0xff]
      %v708 = vld [vmem:[%s226 + $0x70] sm:$0xff]
      %v709 = vld [vmem:[%s226 + $0x78] sm:$0xff]
      %v710 = vld [vmem:[%s226 + $0x80] sm:$0xff]
      %v711 = vld [vmem:[%s226 + $0x88] sm:$0xff]
      %v712 = vld [vmem:[%s226 + $0x90] sm:$0xff]
      %v713 = vld [vmem:[%s226 + $0x98] sm:$0xff]
      %v714 = vld [vmem:[%s226 + $0xa0] sm:$0xff]
      %v715 = vld [vmem:[%s226 + $0xa8] sm:$0xff]
      %v716 = vld [vmem:[%s226 + $0xb0] sm:$0xff]
      %v717 = vld [vmem:[%s226 + $0xb8] sm:$0xff]
      %v718 = vld [vmem:[%s226 + $0xc0] sm:$0xff]
      %v719 = vld [vmem:[%s226 + $0xc8] sm:$0xff]
      %v720 = vld [vmem:[%s226 + $0xd0] sm:$0xff]
      %v721 = vld [vmem:[%s226 + $0xd8] sm:$0xff]
      %v722 = vld [vmem:[%s226 + $0xe0] sm:$0xff]
      %v723 = vld [vmem:[%s226 + $0xe8] sm:$0xff]
      %v724 = vld [vmem:[%s226 + $0xf0] sm:$0xff]
      %v725 = vld [vmem:[%s226 + $0xf8] sm:$0xff]
      %v726 = vld [vmem:[%s226 + $0x100] sm:$0xff]
      %v727 = vld [vmem:[%s226 + $0x108] sm:$0xff]
      %v728 = vld [vmem:[%s226 + $0x110] sm:$0xff]
      %v729 = vld [vmem:[%s226 + $0x118] sm:$0xff]
      %v730 = vld [vmem:[%s226 + $0x120] sm:$0xff]
      %v731 = vld [vmem:[%s226 + $0x128] sm:$0xff]
      %v732 = vld [vmem:[%s226 + $0x130] sm:$0xff]
      %v733 = vld [vmem:[%s226 + $0x138] sm:$0xff]
      %v734 = vld [vmem:[%s226 + $0x140] sm:$0xff]
      %v735 = vld [vmem:[%s226 + $0x148] sm:$0xff]
      %v736 = vld [vmem:[%s226 + $0x150] sm:$0xff]
      %v737 = vld [vmem:[%s226 + $0x158] sm:$0xff]
      %v738 = vld [vmem:[%s226 + $0x160] sm:$0xff]
      %v739 = vld [vmem:[%s226 + $0x168] sm:$0xff]
      %v740 = vld [vmem:[%s226 + $0x170] sm:$0xff]
      %v741 = vld [vmem:[%s226 + $0x178] sm:$0xff]
      %743 = vset.pattern.permute.xlu0 0
      %744 = vperm.xlu0 %743, %v694
      %v745 = vpop.permute.xlu0 %744
      %748 = vset.pattern.permute.xlu0 0
      %749 = vperm.xlu0 %748, %v695
      %v750 = vpop.permute.xlu0 %749
      %753 = vset.pattern.permute.xlu0 0
      %754 = vperm.xlu0 %753, %v696
      %v755 = vpop.permute.xlu0 %754
      %758 = vset.pattern.permute.xlu0 0
      %759 = vperm.xlu0 %758, %v697
      %v760 = vpop.permute.xlu0 %759
      %763 = vset.pattern.permute.xlu0 0
      %764 = vperm.xlu0 %763, %v698
      %v765 = vpop.permute.xlu0 %764
      %768 = vset.pattern.permute.xlu0 0
      %769 = vperm.xlu0 %768, %v699
      %v770 = vpop.permute.xlu0 %769
      %773 = vset.pattern.permute.xlu0 0
      %774 = vperm.xlu0 %773, %v700
      %v775 = vpop.permute.xlu0 %774
      %778 = vset.pattern.permute.xlu0 0
      %779 = vperm.xlu0 %778, %v701
      %v780 = vpop.permute.xlu0 %779
      %783 = vset.pattern.permute.xlu0 0
      %784 = vperm.xlu0 %783, %v702
      %v785 = vpop.permute.xlu0 %784
      %788 = vset.pattern.permute.xlu0 0
      %789 = vperm.xlu0 %788, %v703
      %v790 = vpop.permute.xlu0 %789
      %793 = vset.pattern.permute.xlu0 0
      %794 = vperm.xlu0 %793, %v704
      %v795 = vpop.permute.xlu0 %794
      %798 = vset.pattern.permute.xlu0 0
      %799 = vperm.xlu0 %798, %v705
      %v800 = vpop.permute.xlu0 %799
      %803 = vset.pattern.permute.xlu0 0
      %804 = vperm.xlu0 %803, %v706
      %v805 = vpop.permute.xlu0 %804
      %808 = vset.pattern.permute.xlu0 0
      %809 = vperm.xlu0 %808, %v707
      %v810 = vpop.permute.xlu0 %809
      %813 = vset.pattern.permute.xlu0 0
      %814 = vperm.xlu0 %813, %v708
      %v815 = vpop.permute.xlu0 %814
      %818 = vset.pattern.permute.xlu0 0
      %819 = vperm.xlu0 %818, %v709
      %v820 = vpop.permute.xlu0 %819
      %823 = vset.pattern.permute.xlu0 0
      %824 = vperm.xlu0 %823, %v710
      %v825 = vpop.permute.xlu0 %824
      %828 = vset.pattern.permute.xlu0 0
      %829 = vperm.xlu0 %828, %v711
      %v830 = vpop.permute.xlu0 %829
      %833 = vset.pattern.permute.xlu0 0
      %834 = vperm.xlu0 %833, %v712
      %v835 = vpop.permute.xlu0 %834
      %838 = vset.pattern.permute.xlu0 0
      %839 = vperm.xlu0 %838, %v713
      %v840 = vpop.permute.xlu0 %839
      %843 = vset.pattern.permute.xlu0 0
      %844 = vperm.xlu0 %843, %v714
      %v845 = vpop.permute.xlu0 %844
      %848 = vset.pattern.permute.xlu0 0
      %849 = vperm.xlu0 %848, %v715
      %v850 = vpop.permute.xlu0 %849
      %853 = vset.pattern.permute.xlu0 0
      %854 = vperm.xlu0 %853, %v716
      %v855 = vpop.permute.xlu0 %854
      %858 = vset.pattern.permute.xlu0 0
      %859 = vperm.xlu0 %858, %v717
      %v860 = vpop.permute.xlu0 %859
      %863 = vset.pattern.permute.xlu0 0
      %864 = vperm.xlu0 %863, %v718
      %v865 = vpop.permute.xlu0 %864
      %868 = vset.pattern.permute.xlu0 0
      %869 = vperm.xlu0 %868, %v719
      %v870 = vpop.permute.xlu0 %869
      %873 = vset.pattern.permute.xlu0 0
      %874 = vperm.xlu0 %873, %v720
      %v875 = vpop.permute.xlu0 %874
      %878 = vset.pattern.permute.xlu0 0
      %879 = vperm.xlu0 %878, %v721
      %v880 = vpop.permute.xlu0 %879
      %883 = vset.pattern.permute.xlu0 0
      %884 = vperm.xlu0 %883, %v722
      %v885 = vpop.permute.xlu0 %884
      %888 = vset.pattern.permute.xlu0 0
      %889 = vperm.xlu0 %888, %v723
      %v890 = vpop.permute.xlu0 %889
      %893 = vset.pattern.permute.xlu0 0
      %894 = vperm.xlu0 %893, %v724
      %v895 = vpop.permute.xlu0 %894
      %898 = vset.pattern.permute.xlu0 0
      %899 = vperm.xlu0 %898, %v725
      %v900 = vpop.permute.xlu0 %899
      %903 = vset.pattern.permute.xlu0 0
      %904 = vperm.xlu0 %903, %v726
      %v905 = vpop.permute.xlu0 %904
      %908 = vset.pattern.permute.xlu0 0
      %909 = vperm.xlu0 %908, %v727
      %v910 = vpop.permute.xlu0 %909
      %913 = vset.pattern.permute.xlu0 0
      %914 = vperm.xlu0 %913, %v728
      %v915 = vpop.permute.xlu0 %914
      %918 = vset.pattern.permute.xlu0 0
      %919 = vperm.xlu0 %918, %v729
      %v920 = vpop.permute.xlu0 %919
      %923 = vset.pattern.permute.xlu0 0
      %924 = vperm.xlu0 %923, %v730
      %v925 = vpop.permute.xlu0 %924
      %928 = vset.pattern.permute.xlu0 0
      %929 = vperm.xlu0 %928, %v731
      %v930 = vpop.permute.xlu0 %929
      %933 = vset.pattern.permute.xlu0 0
      %934 = vperm.xlu0 %933, %v732
      %v935 = vpop.permute.xlu0 %934
      %938 = vset.pattern.permute.xlu0 0
      %939 = vperm.xlu0 %938, %v733
      %v940 = vpop.permute.xlu0 %939
      %943 = vset.pattern.permute.xlu0 0
      %944 = vperm.xlu0 %943, %v734
      %v945 = vpop.permute.xlu0 %944
      %948 = vset.pattern.permute.xlu0 0
      %949 = vperm.xlu0 %948, %v735
      %v950 = vpop.permute.xlu0 %949
      %953 = vset.pattern.permute.xlu0 0
      %954 = vperm.xlu0 %953, %v736
      %v955 = vpop.permute.xlu0 %954
      %958 = vset.pattern.permute.xlu0 0
      %959 = vperm.xlu0 %958, %v737
      %v960 = vpop.permute.xlu0 %959
      %963 = vset.pattern.permute.xlu0 0
      %964 = vperm.xlu0 %963, %v738
      %v965 = vpop.permute.xlu0 %964
      %968 = vset.pattern.permute.xlu0 0
      %969 = vperm.xlu0 %968, %v739
      %v970 = vpop.permute.xlu0 %969
      %973 = vset.pattern.permute.xlu0 0
      %974 = vperm.xlu0 %973, %v740
      %v975 = vpop.permute.xlu0 %974
      %978 = vset.pattern.permute.xlu0 0
      %979 = vperm.xlu0 %978, %v741
      %v980 = vpop.permute.xlu0 %979
      %vm982 = vcmp.ne.f32.partialorder %v745, 0.0
      %vm983 = vcmp.ne.f32.partialorder %v750, 0.0
      %vm984 = vcmp.ne.f32.partialorder %v755, 0.0
      %vm985 = vcmp.ne.f32.partialorder %v760, 0.0
      %vm986 = vcmp.ne.f32.partialorder %v765, 0.0
      %vm987 = vcmp.ne.f32.partialorder %v770, 0.0
      %vm988 = vcmp.ne.f32.partialorder %v775, 0.0
      %vm989 = vcmp.ne.f32.partialorder %v780, 0.0
      %vm990 = vcmp.ne.f32.partialorder %v785, 0.0
      %vm991 = vcmp.ne.f32.partialorder %v790, 0.0
      %vm992 = vcmp.ne.f32.partialorder %v795, 0.0
      %vm993 = vcmp.ne.f32.partialorder %v800, 0.0
      %vm994 = vcmp.ne.f32.partialorder %v805, 0.0
      %vm995 = vcmp.ne.f32.partialorder %v810, 0.0
      %vm996 = vcmp.ne.f32.partialorder %v815, 0.0
      %vm997 = vcmp.ne.f32.partialorder %v820, 0.0
      %vm998 = vcmp.ne.f32.partialorder %v825, 0.0
      %vm999 = vcmp.ne.f32.partialorder %v830, 0.0
      %vm1000 = vcmp.ne.f32.partialorder %v835, 0.0
      %vm1001 = vcmp.ne.f32.partialorder %v840, 0.0
      %vm1002 = vcmp.ne.f32.partialorder %v845, 0.0
      %vm1003 = vcmp.ne.f32.partialorder %v850, 0.0
      %vm1004 = vcmp.ne.f32.partialorder %v855, 0.0
      %vm1005 = vcmp.ne.f32.partialorder %v860, 0.0
      %vm1006 = vcmp.ne.f32.partialorder %v865, 0.0
      %vm1007 = vcmp.ne.f32.partialorder %v870, 0.0
      %vm1008 = vcmp.ne.f32.partialorder %v875, 0.0
      %vm1009 = vcmp.ne.f32.partialorder %v880, 0.0
      %vm1010 = vcmp.ne.f32.partialorder %v885, 0.0
      %vm1011 = vcmp.ne.f32.partialorder %v890, 0.0
      %vm1012 = vcmp.ne.f32.partialorder %v895, 0.0
      %vm1013 = vcmp.ne.f32.partialorder %v900, 0.0
      %vm1014 = vcmp.ne.f32.partialorder %v905, 0.0
      %vm1015 = vcmp.ne.f32.partialorder %v910, 0.0
      %vm1016 = vcmp.ne.f32.partialorder %v915, 0.0
      %vm1017 = vcmp.ne.f32.partialorder %v920, 0.0
      %vm1018 = vcmp.ne.f32.partialorder %v925, 0.0
      %vm1019 = vcmp.ne.f32.partialorder %v930, 0.0
      %vm1020 = vcmp.ne.f32.partialorder %v935, 0.0
      %vm1021 = vcmp.ne.f32.partialorder %v940, 0.0
      %vm1022 = vcmp.ne.f32.partialorder %v945, 0.0
      %vm1023 = vcmp.ne.f32.partialorder %v950, 0.0
      %vm1024 = vcmp.ne.f32.partialorder %v955, 0.0
      %vm1025 = vcmp.ne.f32.partialorder %v960, 0.0
      %vm1026 = vcmp.ne.f32.partialorder %v965, 0.0
      %vm1027 = vcmp.ne.f32.partialorder %v970, 0.0
      %vm1028 = vcmp.ne.f32.partialorder %v975, 0.0
      %vm1029 = vcmp.ne.f32.partialorder %v980, 0.0
      %v1030 = vsel %vm982, %v496, %v396
      %v1031 = vsel %vm983, %v497, %v397
      %v1032 = vsel %vm984, %v498, %v398
      %v1033 = vsel %vm985, %v499, %v399
      %v1034 = vsel %vm986, %v500, %v400
      %v1035 = vsel %vm987, %v501, %v401
      %v1036 = vsel %vm988, %v502, %v402
      %v1037 = vsel %vm989, %v503, %v403
      %v1038 = vsel %vm990, %v504, %v404
      %v1039 = vsel %vm991, %v505, %v405
      %v1040 = vsel %vm992, %v506, %v406
      %v1041 = vsel %vm993, %v507, %v407
      %v1042 = vsel %vm994, %v508, %v408
      %v1043 = vsel %vm995, %v509, %v409
      %v1044 = vsel %vm996, %v510, %v410
      %v1045 = vsel %vm997, %v511, %v411
      %v1046 = vsel %vm998, %v512, %v412
      %v1047 = vsel %vm999, %v513, %v413
      %v1048 = vsel %vm1000, %v514, %v414
      %v1049 = vsel %vm1001, %v515, %v415
      %v1050 = vsel %vm1002, %v516, %v416
      %v1051 = vsel %vm1003, %v517, %v417
      %v1052 = vsel %vm1004, %v518, %v418
      %v1053 = vsel %vm1005, %v519, %v419
      %v1054 = vsel %vm1006, %v520, %v420
      %v1055 = vsel %vm1007, %v521, %v421
      %v1056 = vsel %vm1008, %v522, %v422
      %v1057 = vsel %vm1009, %v523, %v423
      %v1058 = vsel %vm1010, %v524, %v424
      %v1059 = vsel %vm1011, %v525, %v425
      %v1060 = vsel %vm1012, %v526, %v426
      %v1061 = vsel %vm1013, %v527, %v427
      %v1062 = vsel %vm1014, %v528, %v428
      %v1063 = vsel %vm1015, %v529, %v429
      %v1064 = vsel %vm1016, %v530, %v430
      %v1065 = vsel %vm1017, %v531, %v431
      %v1066 = vsel %vm1018, %v532, %v432
      %v1067 = vsel %vm1019, %v533, %v433
      %v1068 = vsel %vm1020, %v534, %v434
      %v1069 = vsel %vm1021, %v535, %v435
      %v1070 = vsel %vm1022, %v536, %v436
      %v1071 = vsel %vm1023, %v537, %v437
      %v1072 = vsel %vm1024, %v538, %v438
      %v1073 = vsel %vm1025, %v539, %v439
      %v1074 = vsel %vm1026, %v540, %v440
      %v1075 = vsel %vm1027, %v541, %v441
      %v1076 = vsel %vm1028, %v542, %v442
      %v1077 = vsel %vm1029, %v543, %v443
      %v1078 = vsel %vm982, %v546, %v446
      %v1079 = vsel %vm983, %v547, %v447
      %v1080 = vsel %vm984, %v548, %v448
      %v1081 = vsel %vm985, %v549, %v449
      %v1082 = vsel %vm986, %v550, %v450
      %v1083 = vsel %vm987, %v551, %v451
      %v1084 = vsel %vm988, %v552, %v452
      %v1085 = vsel %vm989, %v553, %v453
      %v1086 = vsel %vm990, %v554, %v454
      %v1087 = vsel %vm991, %v555, %v455
      %v1088 = vsel %vm992, %v556, %v456
      %v1089 = vsel %vm993, %v557, %v457
      %v1090 = vsel %vm994, %v558, %v458
      %v1091 = vsel %vm995, %v559, %v459
      %v1092 = vsel %vm996, %v560, %v460
      %v1093 = vsel %vm997, %v561, %v461
      %v1094 = vsel %vm998, %v562, %v462
      %v1095 = vsel %vm999, %v563, %v463
      %v1096 = vsel %vm1000, %v564, %v464
      %v1097 = vsel %vm1001, %v565, %v465
      %v1098 = vsel %vm1002, %v566, %v466
      %v1099 = vsel %vm1003, %v567, %v467
      %v1100 = vsel %vm1004, %v568, %v468
      %v1101 = vsel %vm1005, %v569, %v469
      %v1102 = vsel %vm1006, %v570, %v470
      %v1103 = vsel %vm1007, %v571, %v471
      %v1104 = vsel %vm1008, %v572, %v472
      %v1105 = vsel %vm1009, %v573, %v473
      %v1106 = vsel %vm1010, %v574, %v474
      %v1107 = vsel %vm1011, %v575, %v475
      %v1108 = vsel %vm1012, %v576, %v476
      %v1109 = vsel %vm1013, %v577, %v477
      %v1110 = vsel %vm1014, %v578, %v478
      %v1111 = vsel %vm1015, %v579, %v479
      %v1112 = vsel %vm1016, %v580, %v480
      %v1113 = vsel %vm1017, %v581, %v481
      %v1114 = vsel %vm1018, %v582, %v482
      %v1115 = vsel %vm1019, %v583, %v483
      %v1116 = vsel %vm1020, %v584, %v484
      %v1117 = vsel %vm1021, %v585, %v485
      %v1118 = vsel %vm1022, %v586, %v486
      %v1119 = vsel %vm1023, %v587, %v487
      %v1120 = vsel %vm1024, %v588, %v488
      %v1121 = vsel %vm1025, %v589, %v489
      %v1122 = vsel %vm1026, %v590, %v490
      %v1123 = vsel %vm1027, %v591, %v491
      %v1124 = vsel %vm1028, %v592, %v492
      %v1125 = vsel %vm1029, %v593, %v493
      %v1126 = vsel %vm982, %v396, %v596
      %v1127 = vsel %vm983, %v397, %v597
      %v1128 = vsel %vm984, %v398, %v598
      %v1129 = vsel %vm985, %v399, %v599
      %v1130 = vsel %vm986, %v400, %v600
      %v1131 = vsel %vm987, %v401, %v601
      %v1132 = vsel %vm988, %v402, %v602
      %v1133 = vsel %vm989, %v403, %v603
      %v1134 = vsel %vm990, %v404, %v604
      %v1135 = vsel %vm991, %v405, %v605
      %v1136 = vsel %vm992, %v406, %v606
      %v1137 = vsel %vm993, %v407, %v607
      %v1138 = vsel %vm994, %v408, %v608
      %v1139 = vsel %vm995, %v409, %v609
      %v1140 = vsel %vm996, %v410, %v610
      %v1141 = vsel %vm997, %v411, %v611
      %v1142 = vsel %vm998, %v412, %v612
      %v1143 = vsel %vm999, %v413, %v613
      %v1144 = vsel %vm1000, %v414, %v614
      %v1145 = vsel %vm1001, %v415, %v615
      %v1146 = vsel %vm1002, %v416, %v616
      %v1147 = vsel %vm1003, %v417, %v617
      %v1148 = vsel %vm1004, %v418, %v618
      %v1149 = vsel %vm1005, %v419, %v619
      %v1150 = vsel %vm1006, %v420, %v620
      %v1151 = vsel %vm1007, %v421, %v621
      %v1152 = vsel %vm1008, %v422, %v622
      %v1153 = vsel %vm1009, %v423, %v623
      %v1154 = vsel %vm1010, %v424, %v624
      %v1155 = vsel %vm1011, %v425, %v625
      %v1156 = vsel %vm1012, %v426, %v626
      %v1157 = vsel %vm1013, %v427, %v627
      %v1158 = vsel %vm1014, %v428, %v628
      %v1159 = vsel %vm1015, %v429, %v629
      %v1160 = vsel %vm1016, %v430, %v630
      %v1161 = vsel %vm1017, %v431, %v631
      %v1162 = vsel %vm1018, %v432, %v632
      %v1163 = vsel %vm1019, %v433, %v633
      %v1164 = vsel %vm1020, %v434, %v634
      %v1165 = vsel %vm1021, %v435, %v635
      %v1166 = vsel %vm1022, %v436, %v636
      %v1167 = vsel %vm1023, %v437, %v637
      %v1168 = vsel %vm1024, %v438, %v638
      %v1169 = vsel %vm1025, %v439, %v639
      %v1170 = vsel %vm1026, %v440, %v640
      %v1171 = vsel %vm1027, %v441, %v641
      %v1172 = vsel %vm1028, %v442, %v642
      %v1173 = vsel %vm1029, %v443, %v643
      %v1174 = vsel %vm982, %v446, %v646
      %v1175 = vsel %vm983, %v447, %v647
      %v1176 = vsel %vm984, %v448, %v648
      %v1177 = vsel %vm985, %v449, %v649
      %v1178 = vsel %vm986, %v450, %v650
      %v1179 = vsel %vm987, %v451, %v651
      %v1180 = vsel %vm988, %v452, %v652
      %v1181 = vsel %vm989, %v453, %v653
      %v1182 = vsel %vm990, %v454, %v654
      %v1183 = vsel %vm991, %v455, %v655
      %v1184 = vsel %vm992, %v456, %v656
      %v1185 = vsel %vm993, %v457, %v657
      %v1186 = vsel %vm994, %v458, %v658
      %v1187 = vsel %vm995, %v459, %v659
      %v1188 = vsel %vm996, %v460, %v660
      %v1189 = vsel %vm997, %v461, %v661
      %v1190 = vsel %vm998, %v462, %v662
      %v1191 = vsel %vm999, %v463, %v663
      %v1192 = vsel %vm1000, %v464, %v664
      %v1193 = vsel %vm1001, %v465, %v665
      %v1194 = vsel %vm1002, %v466, %v666
      %v1195 = vsel %vm1003, %v467, %v667
      %v1196 = vsel %vm1004, %v468, %v668
      %v1197 = vsel %vm1005, %v469, %v669
      %v1198 = vsel %vm1006, %v470, %v670
      %v1199 = vsel %vm1007, %v471, %v671
      %v1200 = vsel %vm1008, %v472, %v672
      %v1201 = vsel %vm1009, %v473, %v673
      %v1202 = vsel %vm1010, %v474, %v674
      %v1203 = vsel %vm1011, %v475, %v675
      %v1204 = vsel %vm1012, %v476, %v676
      %v1205 = vsel %vm1013, %v477, %v677
      %v1206 = vsel %vm1014, %v478, %v678
      %v1207 = vsel %vm1015, %v479, %v679
      %v1208 = vsel %vm1016, %v480, %v680
      %v1209 = vsel %vm1017, %v481, %v681
      %v1210 = vsel %vm1018, %v482, %v682
      %v1211 = vsel %vm1019, %v483, %v683
      %v1212 = vsel %vm1020, %v484, %v684
      %v1213 = vsel %vm1021, %v485, %v685
      %v1214 = vsel %vm1022, %v486, %v686
      %v1215 = vsel %vm1023, %v487, %v687
      %v1216 = vsel %vm1024, %v488, %v688
      %v1217 = vsel %vm1025, %v489, %v689
      %v1218 = vsel %vm1026, %v490, %v690
      %v1219 = vsel %vm1027, %v491, %v691
      %v1220 = vsel %vm1028, %v492, %v692
      %v1221 = vsel %vm1029, %v493, %v693
      %v1222 = vld [vmem:[%s2] sm:$0xff]
      %v1223 = vld [vmem:[%s2 + $0x8] sm:$0xff]
      %v1224 = vld [vmem:[%s2 + $0x10] sm:$0xff]
      %v1225 = vld [vmem:[%s2 + $0x18] sm:$0xff]
      %v1226 = vld [vmem:[%s2 + $0x20] sm:$0xff]
      %v1227 = vld [vmem:[%s2 + $0x28] sm:$0xff]
      %v1228 = vld [vmem:[%s2 + $0x30] sm:$0xff]
      %v1229 = vld [vmem:[%s2 + $0x38] sm:$0xff]
      %v1230 = vld [vmem:[%s2 + $0x40] sm:$0xff]
      %v1231 = vld [vmem:[%s2 + $0x48] sm:$0xff]
      %v1232 = vld [vmem:[%s2 + $0x50] sm:$0xff]
      %v1233 = vld [vmem:[%s2 + $0x58] sm:$0xff]
      %v1234 = vld [vmem:[%s2 + $0x60] sm:$0xff]
      %v1235 = vld [vmem:[%s2 + $0x68] sm:$0xff]
      %v1236 = vld [vmem:[%s2 + $0x70] sm:$0xff]
      %v1237 = vld [vmem:[%s2 + $0x78] sm:$0xff]
      %s1238 = scalar_lea.vmem %s2, 128
      %v1239 = vld [vmem:[%s1238] sm:$0xff]
      %v1240 = vld [vmem:[%s1238 + $0x8] sm:$0xff]
      %v1241 = vld [vmem:[%s1238 + $0x10] sm:$0xff]
      %v1242 = vld [vmem:[%s1238 + $0x18] sm:$0xff]
      %v1243 = vld [vmem:[%s1238 + $0x20] sm:$0xff]
      %v1244 = vld [vmem:[%s1238 + $0x28] sm:$0xff]
      %v1245 = vld [vmem:[%s1238 + $0x30] sm:$0xff]
      %v1246 = vld [vmem:[%s1238 + $0x38] sm:$0xff]
      %v1247 = vld [vmem:[%s1238 + $0x40] sm:$0xff]
      %v1248 = vld [vmem:[%s1238 + $0x48] sm:$0xff]
      %v1249 = vld [vmem:[%s1238 + $0x50] sm:$0xff]
      %v1250 = vld [vmem:[%s1238 + $0x58] sm:$0xff]
      %v1251 = vld [vmem:[%s1238 + $0x60] sm:$0xff]
      %v1252 = vld [vmem:[%s1238 + $0x68] sm:$0xff]
      %v1253 = vld [vmem:[%s1238 + $0x70] sm:$0xff]
      %v1254 = vld [vmem:[%s1238 + $0x78] sm:$0xff]
      %1255 = vmatprep.subr.mxu0 0.0
      %1256 = vmatpush1.msra.mxu0 %v1239
      %1257 = vmatprep.subr.mxu0 0.0
      %1258 = vmatpush1.msra.mxu0 %v1240
      %1259 = vmatprep.subr.mxu0 0.0
      %1260 = vmatpush1.msra.mxu0 %v1241
      %1261 = vmatprep.subr.mxu0 0.0
      %1262 = vmatpush1.msra.mxu0 %v1242
      %1263 = vmatprep.subr.mxu0 0.0
      %1264 = vmatpush1.msra.mxu0 %v1243
      %1265 = vmatprep.subr.mxu0 0.0
      %1266 = vmatpush1.msra.mxu0 %v1244
      %1267 = vmatprep.subr.mxu0 0.0
      %1268 = vmatpush1.msra.mxu0 %v1245
      %1269 = vmatprep.subr.mxu0 0.0
      %1270 = vmatpush1.msra.mxu0 %v1246
      %1271 = vmatprep.subr.mxu0 0.0
      %1272 = vmatpush1.msra.mxu0 %v1247
      %1273 = vmatprep.subr.mxu0 0.0
      %1274 = vmatpush1.msra.mxu0 %v1248
      %1275 = vmatprep.subr.mxu0 0.0
      %1276 = vmatpush1.msra.mxu0 %v1249
      %1277 = vmatprep.subr.mxu0 0.0
      %1278 = vmatpush1.msra.mxu0 %v1250
      %1279 = vmatprep.subr.mxu0 0.0
      %1280 = vmatpush1.msra.mxu0 %v1251
      %1281 = vmatprep.subr.mxu0 0.0
      %1282 = vmatpush1.msra.mxu0 %v1252
      %1283 = vmatprep.subr.mxu0 0.0
      %1284 = vmatpush1.msra.mxu0 %v1253
      %1285 = vmatprep.subr.mxu0 0.0
      %1286 = vmatpush1.msra.mxu0 %v1254
      %1287 = vmatprep.subr.mxu0 0.0
      %1288 = vmatpush1.msra.mxu0 0.0
      %1289 = vmatprep.subr.mxu0 0.0
      %1290 = vmatpush1.msra.mxu0 0.0
      %1291 = vmatprep.subr.mxu0 0.0
      %1292 = vmatpush1.msra.mxu0 0.0
      %1293 = vmatprep.subr.mxu0 0.0
      %1294 = vmatpush1.msra.mxu0 0.0
      %1295 = vmatprep.subr.mxu0 0.0
      %1296 = vmatpush1.msra.mxu0 0.0
      %1297 = vmatprep.subr.mxu0 0.0
      %1298 = vmatpush1.msra.mxu0 0.0
      %1299 = vmatprep.subr.mxu0 0.0
      %1300 = vmatpush1.msra.mxu0 0.0
      %1301 = vmatprep.subr.mxu0 0.0
      %1302 = vmatpush1.msra.mxu0 0.0
      %1303 = vmatprep.subr.mxu0 0.0
      %1304 = vmatpush1.msra.mxu0 0.0
      %1305 = vmatprep.subr.mxu0 0.0
      %1306 = vmatpush1.msra.mxu0 0.0
      %1307 = vmatprep.subr.mxu0 0.0
      %1308 = vmatpush1.msra.mxu0 0.0
      %1309 = vmatprep.subr.mxu0 0.0
      %1310 = vmatpush1.msra.mxu0 0.0
      %1311 = vmatprep.subr.mxu0 0.0
      %1312 = vmatpush1.msra.mxu0 0.0
      %1313 = vmatprep.subr.mxu0 0.0
      %1314 = vmatpush1.msra.mxu0 0.0
      %1315 = vmatprep.subr.mxu0 0.0
      %1316 = vmatpush1.msra.mxu0 0.0
      %1317 = vmatprep.subr.mxu0 0.0
      %1318 = vmatpush1.msra.mxu0 0.0
      %1319 = vmatprep.mubr.f32.mxu0 0.0
      %1320 = vmatmul.mubr.f32.gmra.mrb[0].mxu0 %v296
      %v1321 = vpop.f32.mrb[0].mxu0
      %v1322 = vadd.f32 0.0, %v1321
      %v1323 = vpop.f32.mrb[0].mxu0
      %1324 = vmatprep.mubr.f32.mxu0 0.0
      %1325 = vmatmul.mubr.f32.gmra.mrb[0].mxu0 %v297
      %v1326 = vpop.f32.mrb[0].mxu0
      %v1327 = vadd.f32 0.0, %v1326
      %v1328 = vpop.f32.mrb[0].mxu0
      %1329 = vmatprep.mubr.f32.mxu0 0.0
      %1330 = vmatmul.mubr.f32.gmra.mrb[0].mxu0 %v298
      %v1331 = vpop.f32.mrb[0].mxu0
      %v1332 = vadd.f32 0.0, %v1331
      %v1333 = vpop.f32.mrb[0].mxu0
      %1334 = vmatprep.mubr.f32.mxu0 0.0
      %1335 = vmatmul.mubr.f32.gmra.mrb[0].mxu0 %v299
      %v1336 = vpop.f32.mrb[0].mxu0
      %v1337 = vadd.f32 0.0, %v1336
      %v1338 = vpop.f32.mrb[0].mxu0
      %1339 = vmatprep.mubr.f32.mxu0 0.0
      %1340 = vmatmul.mubr.f32.gmra.mrb[0].mxu0 %v300
      %v1341 = vpop.f32.mrb[0].mxu0
      %v1342 = vadd.f32 0.0, %v1341
      %v1343 = vpop.f32.mrb[0].mxu0
      %1344 = vmatprep.mubr.f32.mxu0 0.0
      %1345 = vmatmul.mubr.f32.gmra.mrb[0].mxu0 %v301
      %v1346 = vpop.f32.mrb[0].mxu0
      %v1347 = vadd.f32 0.0, %v1346
      %v1348 = vpop.f32.mrb[0].mxu0
      %1349 = vmatprep.mubr.f32.mxu0 0.0
      %1350 = vmatmul.mubr.f32.gmra.mrb[0].mxu0 %v302
      %v1351 = vpop.f32.mrb[0].mxu0
      %v1352 = vadd.f32 0.0, %v1351
      %v1353 = vpop.f32.mrb[0].mxu0
      %1354 = vmatprep.mubr.f32.mxu0 0.0
      %1355 = vmatmul.mubr.f32.gmra.mrb[0].mxu0 %v303
      %v1356 = vpop.f32.mrb[0].mxu0
      %v1357 = vadd.f32 0.0, %v1356
      %v1358 = vpop.f32.mrb[0].mxu0
      %1359 = vmatprep.mubr.f32.mxu0 0.0
      %1360 = vmatmul.mubr.f32.gmra.mrb[0].mxu0 %v304
      %v1361 = vpop.f32.mrb[0].mxu0
      %v1362 = vadd.f32 0.0, %v1361
      %v1363 = vpop.f32.mrb[0].mxu0
      %1364 = vmatprep.mubr.f32.mxu0 0.0
      %1365 = vmatmul.mubr.f32.gmra.mrb[0].mxu0 %v305
      %v1366 = vpop.f32.mrb[0].mxu0
      %v1367 = vadd.f32 0.0, %v1366
      %v1368 = vpop.f32.mrb[0].mxu0
      %1369 = vmatprep.mubr.f32.mxu0 0.0
      %1370 = vmatmul.mubr.f32.gmra.mrb[0].mxu0 %v306
      %v1371 = vpop.f32.mrb[0].mxu0
      %v1372 = vadd.f32 0.0, %v1371
      %v1373 = vpop.f32.mrb[0].mxu0
      %1374 = vmatprep.mubr.f32.mxu0 0.0
      %1375 = vmatmul.mubr.f32.gmra.mrb[0].mxu0 %v307
      %v1376 = vpop.f32.mrb[0].mxu0
      %v1377 = vadd.f32 0.0, %v1376
      %v1378 = vpop.f32.mrb[0].mxu0
      %1379 = vmatprep.mubr.f32.mxu0 0.0
      %1380 = vmatmul.mubr.f32.gmra.mrb[0].mxu0 %v308
      %v1381 = vpop.f32.mrb[0].mxu0
      %v1382 = vadd.f32 0.0, %v1381
      %v1383 = vpop.f32.mrb[0].mxu0
      %1384 = vmatprep.mubr.f32.mxu0 0.0
      %1385 = vmatmul.mubr.f32.gmra.mrb[0].mxu0 %v309
      %v1386 = vpop.f32.mrb[0].mxu0
      %v1387 = vadd.f32 0.0, %v1386
      %v1388 = vpop.f32.mrb[0].mxu0
      %1389 = vmatprep.mubr.f32.mxu0 0.0
      %1390 = vmatmul.mubr.f32.gmra.mrb[0].mxu0 %v310
      %v1391 = vpop.f32.mrb[0].mxu0
      %v1392 = vadd.f32 0.0, %v1391
      %v1393 = vpop.f32.mrb[0].mxu0
      %1394 = vmatprep.mubr.f32.mxu0 0.0
      %1395 = vmatmul.mubr.f32.gmra.mrb[0].mxu0 %v311
      %v1396 = vpop.f32.mrb[0].mxu0
      %v1397 = vadd.f32 0.0, %v1396
      %v1398 = vpop.f32.mrb[0].mxu0
      %1399 = vmatprep.mubr.f32.mxu0 0.0
      %1400 = vmatmul.mubr.f32.gmra.mrb[0].mxu0 %v312
      %v1401 = vpop.f32.mrb[0].mxu0
      %v1402 = vadd.f32 0.0, %v1401
      %v1403 = vpop.f32.mrb[0].mxu0
      %1404 = vmatprep.mubr.f32.mxu0 0.0
      %1405 = vmatmul.mubr.f32.gmra.mrb[0].mxu0 %v313
      %v1406 = vpop.f32.mrb[0].mxu0
      %v1407 = vadd.f32 0.0, %v1406
      %v1408 = vpop.f32.mrb[0].mxu0
      %1409 = vmatprep.mubr.f32.mxu0 0.0
      %1410 = vmatmul.mubr.f32.gmra.mrb[0].mxu0 %v314
      %v1411 = vpop.f32.mrb[0].mxu0
      %v1412 = vadd.f32 0.0, %v1411
      %v1413 = vpop.f32.mrb[0].mxu0
      %1414 = vmatprep.mubr.f32.mxu0 0.0
      %1415 = vmatmul.mubr.f32.gmra.mrb[0].mxu0 %v315
      %v1416 = vpop.f32.mrb[0].mxu0
      %v1417 = vadd.f32 0.0, %v1416
      %v1418 = vpop.f32.mrb[0].mxu0
      %1419 = vmatprep.mubr.f32.mxu0 0.0
      %1420 = vmatmul.mubr.f32.gmra.mrb[0].mxu0 %v316
      %v1421 = vpop.f32.mrb[0].mxu0
      %v1422 = vadd.f32 0.0, %v1421
      %v1423 = vpop.f32.mrb[0].mxu0
      %1424 = vmatprep.mubr.f32.mxu0 0.0
      %1425 = vmatmul.mubr.f32.gmra.mrb[0].mxu0 %v317
      %v1426 = vpop.f32.mrb[0].mxu0
      %v1427 = vadd.f32 0.0, %v1426
      %v1428 = vpop.f32.mrb[0].mxu0
      %1429 = vmatprep.mubr.f32.mxu0 0.0
      %1430 = vmatmul.mubr.f32.gmra.mrb[0].mxu0 %v318
      %v1431 = vpop.f32.mrb[0].mxu0
      %v1432 = vadd.f32 0.0, %v1431
      %v1433 = vpop.f32.mrb[0].mxu0
      %1434 = vmatprep.mubr.f32.mxu0 0.0
      %1435 = vmatmul.mubr.f32.gmra.mrb[0].mxu0 %v319
      %v1436 = vpop.f32.mrb[0].mxu0
      %v1437 = vadd.f32 0.0, %v1436
      %v1438 = vpop.f32.mrb[0].mxu0
      %1439 = vmatprep.mubr.f32.mxu0 0.0
      %1440 = vmatmul.mubr.f32.gmra.mrb[0].mxu0 %v320
      %v1441 = vpop.f32.mrb[0].mxu0
      %v1442 = vadd.f32 0.0, %v1441
      %v1443 = vpop.f32.mrb[0].mxu0
      %1444 = vmatprep.mubr.f32.mxu0 0.0
      %1445 = vmatmul.mubr.f32.gmra.mrb[0].mxu0 %v321
      %v1446 = vpop.f32.mrb[0].mxu0
      %v1447 = vadd.f32 0.0, %v1446
      %v1448 = vpop.f32.mrb[0].mxu0
      %1449 = vmatprep.mubr.f32.mxu0 0.0
      %1450 = vmatmul.mubr.f32.gmra.mrb[0].mxu0 %v322
      %v1451 = vpop.f32.mrb[0].mxu0
      %v1452 = vadd.f32 0.0, %v1451
      %v1453 = vpop.f32.mrb[0].mxu0
      %1454 = vmatprep.mubr.f32.mxu0 0.0
      %1455 = vmatmul.mubr.f32.gmra.mrb[0].mxu0 %v323
      %v1456 = vpop.f32.mrb[0].mxu0
      %v1457 = vadd.f32 0.0, %v1456
      %v1458 = vpop.f32.mrb[0].mxu0
      %1459 = vmatprep.mubr.f32.mxu0 0.0
      %1460 = vmatmul.mubr.f32.gmra.mrb[0].mxu0 %v324
      %v1461 = vpop.f32.mrb[0].mxu0
      %v1462 = vadd.f32 0.0, %v1461
      %v1463 = vpop.f32.mrb[0].mxu0
      %1464 = vmatprep.mubr.f32.mxu0 0.0
      %1465 = vmatmul.mubr.f32.gmra.mrb[0].mxu0 %v325
      %v1466 = vpop.f32.mrb[0].mxu0
      %v1467 = vadd.f32 0.0, %v1466
      %v1468 = vpop.f32.mrb[0].mxu0
      %1469 = vmatprep.mubr.f32.mxu0 0.0
      %1470 = vmatmul.mubr.f32.gmra.mrb[0].mxu0 %v326
      %v1471 = vpop.f32.mrb[0].mxu0
      %v1472 = vadd.f32 0.0, %v1471
      %v1473 = vpop.f32.mrb[0].mxu0
      %1474 = vmatprep.mubr.f32.mxu0 0.0
      %1475 = vmatmul.mubr.f32.gmra.mrb[0].mxu0 %v327
      %v1476 = vpop.f32.mrb[0].mxu0
      %v1477 = vadd.f32 0.0, %v1476
      %v1478 = vpop.f32.mrb[0].mxu0
      %1479 = vmatprep.mubr.f32.mxu0 0.0
      %1480 = vmatmul.mubr.f32.gmra.mrb[0].mxu0 %v328
      %v1481 = vpop.f32.mrb[0].mxu0
      %v1482 = vadd.f32 0.0, %v1481
      %v1483 = vpop.f32.mrb[0].mxu0
      %1484 = vmatprep.mubr.f32.mxu0 0.0
      %1485 = vmatmul.mubr.f32.gmra.mrb[0].mxu0 %v329
      %v1486 = vpop.f32.mrb[0].mxu0
      %v1487 = vadd.f32 0.0, %v1486
      %v1488 = vpop.f32.mrb[0].mxu0
      %1489 = vmatprep.mubr.f32.mxu0 0.0
      %1490 = vmatmul.mubr.f32.gmra.mrb[0].mxu0 %v330
      %v1491 = vpop.f32.mrb[0].mxu0
      %v1492 = vadd.f32 0.0, %v1491
      %v1493 = vpop.f32.mrb[0].mxu0
      %1494 = vmatprep.mubr.f32.mxu0 0.0
      %1495 = vmatmul.mubr.f32.gmra.mrb[0].mxu0 %v331
      %v1496 = vpop.f32.mrb[0].mxu0
      %v1497 = vadd.f32 0.0, %v1496
      %v1498 = vpop.f32.mrb[0].mxu0
      %1499 = vmatprep.mubr.f32.mxu0 0.0
      %1500 = vmatmul.mubr.f32.gmra.mrb[0].mxu0 %v332
      %v1501 = vpop.f32.mrb[0].mxu0
      %v1502 = vadd.f32 0.0, %v1501
      %v1503 = vpop.f32.mrb[0].mxu0
      %1504 = vmatprep.mubr.f32.mxu0 0.0
      %1505 = vmatmul.mubr.f32.gmra.mrb[0].mxu0 %v333
      %v1506 = vpop.f32.mrb[0].mxu0
      %v1507 = vadd.f32 0.0, %v1506
      %v1508 = vpop.f32.mrb[0].mxu0
      %1509 = vmatprep.mubr.f32.mxu0 0.0
      %1510 = vmatmul.mubr.f32.gmra.mrb[0].mxu0 %v334
      %v1511 = vpop.f32.mrb[0].mxu0
      %v1512 = vadd.f32 0.0, %v1511
      %v1513 = vpop.f32.mrb[0].mxu0
      %1514 = vmatprep.mubr.f32.mxu0 0.0
      %1515 = vmatmul.mubr.f32.gmra.mrb[0].mxu0 %v335
      %v1516 = vpop.f32.mrb[0].mxu0
      %v1517 = vadd.f32 0.0, %v1516
      %v1518 = vpop.f32.mrb[0].mxu0
      %1519 = vmatprep.mubr.f32.mxu0 0.0
      %1520 = vmatmul.mubr.f32.gmra.mrb[0].mxu0 %v336
      %v1521 = vpop.f32.mrb[0].mxu0
      %v1522 = vadd.f32 0.0, %v1521
      %v1523 = vpop.f32.mrb[0].mxu0
      %1524 = vmatprep.mubr.f32.mxu0 0.0
      %1525 = vmatmul.mubr.f32.gmra.mrb[0].mxu0 %v337
      %v1526 = vpop.f32.mrb[0].mxu0
      %v1527 = vadd.f32 0.0, %v1526
      %v1528 = vpop.f32.mrb[0].mxu0
      %1529 = vmatprep.mubr.f32.mxu0 0.0
      %1530 = vmatmul.mubr.f32.gmra.mrb[0].mxu0 %v338
      %v1531 = vpop.f32.mrb[0].mxu0
      %v1532 = vadd.f32 0.0, %v1531
      %v1533 = vpop.f32.mrb[0].mxu0
      %1534 = vmatprep.mubr.f32.mxu0 0.0
      %1535 = vmatmul.mubr.f32.gmra.mrb[0].mxu0 %v339
      %v1536 = vpop.f32.mrb[0].mxu0
      %v1537 = vadd.f32 0.0, %v1536
      %v1538 = vpop.f32.mrb[0].mxu0
      %1539 = vmatprep.mubr.f32.mxu0 0.0
      %1540 = vmatmul.mubr.f32.gmra.mrb[0].mxu0 %v340
      %v1541 = vpop.f32.mrb[0].mxu0
      %v1542 = vadd.f32 0.0, %v1541
      %v1543 = vpop.f32.mrb[0].mxu0
      %1544 = vmatprep.mubr.f32.mxu0 0.0
      %1545 = vmatmul.mubr.f32.gmra.mrb[0].mxu0 %v341
      %v1546 = vpop.f32.mrb[0].mxu0
      %v1547 = vadd.f32 0.0, %v1546
      %v1548 = vpop.f32.mrb[0].mxu0
      %1549 = vmatprep.mubr.f32.mxu0 0.0
      %1550 = vmatmul.mubr.f32.gmra.mrb[0].mxu0 %v342
      %v1551 = vpop.f32.mrb[0].mxu0
      %v1552 = vadd.f32 0.0, %v1551
      %v1553 = vpop.f32.mrb[0].mxu0
      %1554 = vmatprep.mubr.f32.mxu0 0.0
      %1555 = vmatmul.mubr.f32.gmra.mrb[0].mxu0 %v343
      %v1556 = vpop.f32.mrb[0].mxu0
      %v1557 = vadd.f32 0.0, %v1556
      %v1558 = vpop.f32.mrb[0].mxu0
      %1559 = vdwg.mxu0
      %1560 = vmatprep.subr.mxu0 0.0
      %1561 = vmatpush1.msra.mxu0 %v1222
      %1562 = vmatprep.subr.mxu0 0.0
      %1563 = vmatpush1.msra.mxu0 %v1223
      %1564 = vmatprep.subr.mxu0 0.0
      %1565 = vmatpush1.msra.mxu0 %v1224
      %1566 = vmatprep.subr.mxu0 0.0
      %1567 = vmatpush1.msra.mxu0 %v1225
      %1568 = vmatprep.subr.mxu0 0.0
      %1569 = vmatpush1.msra.mxu0 %v1226
      %1570 = vmatprep.subr.mxu0 0.0
      %1571 = vmatpush1.msra.mxu0 %v1227
      %1572 = vmatprep.subr.mxu0 0.0
      %1573 = vmatpush1.msra.mxu0 %v1228
      %1574 = vmatprep.subr.mxu0 0.0
      %1575 = vmatpush1.msra.mxu0 %v1229
      %1576 = vmatprep.subr.mxu0 0.0
      %1577 = vmatpush1.msra.mxu0 %v1230
      %1578 = vmatprep.subr.mxu0 0.0
      %1579 = vmatpush1.msra.mxu0 %v1231
      %1580 = vmatprep.subr.mxu0 0.0
      %1581 = vmatpush1.msra.mxu0 %v1232
      %1582 = vmatprep.subr.mxu0 0.0
      %1583 = vmatpush1.msra.mxu0 %v1233
      %1584 = vmatprep.subr.mxu0 0.0
      %1585 = vmatpush1.msra.mxu0 %v1234
      %1586 = vmatprep.subr.mxu0 0.0
      %1587 = vmatpush1.msra.mxu0 %v1235
      %1588 = vmatprep.subr.mxu0 0.0
      %1589 = vmatpush1.msra.mxu0 %v1236
      %1590 = vmatprep.subr.mxu0 0.0
      %1591 = vmatpush1.msra.mxu0 %v1237
      %1592 = vmatprep.subr.mxu0 0.0
      %1593 = vmatpush1.msra.mxu0 0.0
      %1594 = vmatprep.subr.mxu0 0.0
      %1595 = vmatpush1.msra.mxu0 0.0
      %1596 = vmatprep.subr.mxu0 0.0
      %1597 = vmatpush1.msra.mxu0 0.0
      %1598 = vmatprep.subr.mxu0 0.0
      %1599 = vmatpush1.msra.mxu0 0.0
      %1600 = vmatprep.subr.mxu0 0.0
      %1601 = vmatpush1.msra.mxu0 0.0
      %1602 = vmatprep.subr.mxu0 0.0
      %1603 = vmatpush1.msra.mxu0 0.0
      %1604 = vmatprep.subr.mxu0 0.0
      %1605 = vmatpush1.msra.mxu0 0.0
      %1606 = vmatprep.subr.mxu0 0.0
      %1607 = vmatpush1.msra.mxu0 0.0
      %1608 = vmatprep.subr.mxu0 0.0
      %1609 = vmatpush1.msra.mxu0 0.0
      %1610 = vmatprep.subr.mxu0 0.0
      %1611 = vmatpush1.msra.mxu0 0.0
      %1612 = vmatprep.subr.mxu0 0.0
      %1613 = vmatpush1.msra.mxu0 0.0
      %1614 = vmatprep.subr.mxu0 0.0
      %1615 = vmatpush1.msra.mxu0 0.0
      %1616 = vmatprep.subr.mxu0 0.0
      %1617 = vmatpush1.msra.mxu0 0.0
      %1618 = vmatprep.subr.mxu0 0.0
      %1619 = vmatpush1.msra.mxu0 0.0
      %1620 = vmatprep.subr.mxu0 0.0
      %1621 = vmatpush1.msra.mxu0 0.0
      %1622 = vmatprep.subr.mxu0 0.0
      %1623 = vmatpush1.msra.mxu0 0.0
      %1624 = vmatprep.mubr.f32.mxu0 0.0
      %1625 = vmatmul.mubr.f32.gmra.mrb[0].mxu0 %v246
      %v1626 = vpop.f32.mrb[0].mxu0
      %v1627 = vadd.f32 %v1322, %v1626
      %v1628 = vpop.f32.mrb[0].mxu0
      %1629 = vmatprep.mubr.f32.mxu0 0.0
      %1630 = vmatmul.mubr.f32.gmra.mrb[0].mxu0 %v247
      %v1631 = vpop.f32.mrb[0].mxu0
      %v1632 = vadd.f32 %v1327, %v1631
      %v1633 = vpop.f32.mrb[0].mxu0
      %1634 = vmatprep.mubr.f32.mxu0 0.0
      %1635 = vmatmul.mubr.f32.gmra.mrb[0].mxu0 %v248
      %v1636 = vpop.f32.mrb[0].mxu0
      %v1637 = vadd.f32 %v1332, %v1636
      %v1638 = vpop.f32.mrb[0].mxu0
      %1639 = vmatprep.mubr.f32.mxu0 0.0
      %1640 = vmatmul.mubr.f32.gmra.mrb[0].mxu0 %v249
      %v1641 = vpop.f32.mrb[0].mxu0
      %v1642 = vadd.f32 %v1337, %v1641
      %v1643 = vpop.f32.mrb[0].mxu0
      %1644 = vmatprep.mubr.f32.mxu0 0.0
      %1645 = vmatmul.mubr.f32.gmra.mrb[0].mxu0 %v250
      %v1646 = vpop.f32.mrb[0].mxu0
      %v1647 = vadd.f32 %v1342, %v1646
      %v1648 = vpop.f32.mrb[0].mxu0
      %1649 = vmatprep.mubr.f32.mxu0 0.0
      %1650 = vmatmul.mubr.f32.gmra.mrb[0].mxu0 %v251
      %v1651 = vpop.f32.mrb[0].mxu0
      %v1652 = vadd.f32 %v1347, %v1651
      %v1653 = vpop.f32.mrb[0].mxu0
      %1654 = vmatprep.mubr.f32.mxu0 0.0
      %1655 = vmatmul.mubr.f32.gmra.mrb[0].mxu0 %v252
      %v1656 = vpop.f32.mrb[0].mxu0
      %v1657 = vadd.f32 %v1352, %v1656
      %v1658 = vpop.f32.mrb[0].mxu0
      %1659 = vmatprep.mubr.f32.mxu0 0.0
      %1660 = vmatmul.mubr.f32.gmra.mrb[0].mxu0 %v253
      %v1661 = vpop.f32.mrb[0].mxu0
      %v1662 = vadd.f32 %v1357, %v1661
      %v1663 = vpop.f32.mrb[0].mxu0
      %1664 = vmatprep.mubr.f32.mxu0 0.0
      %1665 = vmatmul.mubr.f32.gmra.mrb[0].mxu0 %v254
      %v1666 = vpop.f32.mrb[0].mxu0
      %v1667 = vadd.f32 %v1362, %v1666
      %v1668 = vpop.f32.mrb[0].mxu0
      %1669 = vmatprep.mubr.f32.mxu0 0.0
      %1670 = vmatmul.mubr.f32.gmra.mrb[0].mxu0 %v255
      %v1671 = vpop.f32.mrb[0].mxu0
      %v1672 = vadd.f32 %v1367, %v1671
      %v1673 = vpop.f32.mrb[0].mxu0
      %1674 = vmatprep.mubr.f32.mxu0 0.0
      %1675 = vmatmul.mubr.f32.gmra.mrb[0].mxu0 %v256
      %v1676 = vpop.f32.mrb[0].mxu0
      %v1677 = vadd.f32 %v1372, %v1676
      %v1678 = vpop.f32.mrb[0].mxu0
      %1679 = vmatprep.mubr.f32.mxu0 0.0
      %1680 = vmatmul.mubr.f32.gmra.mrb[0].mxu0 %v257
      %v1681 = vpop.f32.mrb[0].mxu0
      %v1682 = vadd.f32 %v1377, %v1681
      %v1683 = vpop.f32.mrb[0].mxu0
      %1684 = vmatprep.mubr.f32.mxu0 0.0
      %1685 = vmatmul.mubr.f32.gmra.mrb[0].mxu0 %v258
      %v1686 = vpop.f32.mrb[0].mxu0
      %v1687 = vadd.f32 %v1382, %v1686
      %v1688 = vpop.f32.mrb[0].mxu0
      %1689 = vmatprep.mubr.f32.mxu0 0.0
      %1690 = vmatmul.mubr.f32.gmra.mrb[0].mxu0 %v259
      %v1691 = vpop.f32.mrb[0].mxu0
      %v1692 = vadd.f32 %v1387, %v1691
      %v1693 = vpop.f32.mrb[0].mxu0
      %1694 = vmatprep.mubr.f32.mxu0 0.0
      %1695 = vmatmul.mubr.f32.gmra.mrb[0].mxu0 %v260
      %v1696 = vpop.f32.mrb[0].mxu0
      %v1697 = vadd.f32 %v1392, %v1696
      %v1698 = vpop.f32.mrb[0].mxu0
      %1699 = vmatprep.mubr.f32.mxu0 0.0
      %1700 = vmatmul.mubr.f32.gmra.mrb[0].mxu0 %v261
      %v1701 = vpop.f32.mrb[0].mxu0
      %v1702 = vadd.f32 %v1397, %v1701
      %v1703 = vpop.f32.mrb[0].mxu0
      %1704 = vmatprep.mubr.f32.mxu0 0.0
      %1705 = vmatmul.mubr.f32.gmra.mrb[0].mxu0 %v262
      %v1706 = vpop.f32.mrb[0].mxu0
      %v1707 = vadd.f32 %v1402, %v1706
      %v1708 = vpop.f32.mrb[0].mxu0
      %1709 = vmatprep.mubr.f32.mxu0 0.0
      %1710 = vmatmul.mubr.f32.gmra.mrb[0].mxu0 %v263
      %v1711 = vpop.f32.mrb[0].mxu0
      %v1712 = vadd.f32 %v1407, %v1711
      %v1713 = vpop.f32.mrb[0].mxu0
      %1714 = vmatprep.mubr.f32.mxu0 0.0
      %1715 = vmatmul.mubr.f32.gmra.mrb[0].mxu0 %v264
      %v1716 = vpop.f32.mrb[0].mxu0
      %v1717 = vadd.f32 %v1412, %v1716
      %v1718 = vpop.f32.mrb[0].mxu0
      %1719 = vmatprep.mubr.f32.mxu0 0.0
      %1720 = vmatmul.mubr.f32.gmra.mrb[0].mxu0 %v265
      %v1721 = vpop.f32.mrb[0].mxu0
      %v1722 = vadd.f32 %v1417, %v1721
      %v1723 = vpop.f32.mrb[0].mxu0
      %1724 = vmatprep.mubr.f32.mxu0 0.0
      %1725 = vmatmul.mubr.f32.gmra.mrb[0].mxu0 %v266
      %v1726 = vpop.f32.mrb[0].mxu0
      %v1727 = vadd.f32 %v1422, %v1726
      %v1728 = vpop.f32.mrb[0].mxu0
      %1729 = vmatprep.mubr.f32.mxu0 0.0
      %1730 = vmatmul.mubr.f32.gmra.mrb[0].mxu0 %v267
      %v1731 = vpop.f32.mrb[0].mxu0
      %v1732 = vadd.f32 %v1427, %v1731
      %v1733 = vpop.f32.mrb[0].mxu0
      %1734 = vmatprep.mubr.f32.mxu0 0.0
      %1735 = vmatmul.mubr.f32.gmra.mrb[0].mxu0 %v268
      %v1736 = vpop.f32.mrb[0].mxu0
      %v1737 = vadd.f32 %v1432, %v1736
      %v1738 = vpop.f32.mrb[0].mxu0
      %1739 = vmatprep.mubr.f32.mxu0 0.0
      %1740 = vmatmul.mubr.f32.gmra.mrb[0].mxu0 %v269
      %v1741 = vpop.f32.mrb[0].mxu0
      %v1742 = vadd.f32 %v1437, %v1741
      %v1743 = vpop.f32.mrb[0].mxu0
      %1744 = vmatprep.mubr.f32.mxu0 0.0
      %1745 = vmatmul.mubr.f32.gmra.mrb[0].mxu0 %v270
      %v1746 = vpop.f32.mrb[0].mxu0
      %v1747 = vadd.f32 %v1442, %v1746
      %v1748 = vpop.f32.mrb[0].mxu0
      %1749 = vmatprep.mubr.f32.mxu0 0.0
      %1750 = vmatmul.mubr.f32.gmra.mrb[0].mxu0 %v271
      %v1751 = vpop.f32.mrb[0].mxu0
      %v1752 = vadd.f32 %v1447, %v1751
      %v1753 = vpop.f32.mrb[0].mxu0
      %1754 = vmatprep.mubr.f32.mxu0 0.0
      %1755 = vmatmul.mubr.f32.gmra.mrb[0].mxu0 %v272
      %v1756 = vpop.f32.mrb[0].mxu0
      %v1757 = vadd.f32 %v1452, %v1756
      %v1758 = vpop.f32.mrb[0].mxu0
      %1759 = vmatprep.mubr.f32.mxu0 0.0
      %1760 = vmatmul.mubr.f32.gmra.mrb[0].mxu0 %v273
      %v1761 = vpop.f32.mrb[0].mxu0
      %v1762 = vadd.f32 %v1457, %v1761
      %v1763 = vpop.f32.mrb[0].mxu0
      %1764 = vmatprep.mubr.f32.mxu0 0.0
      %1765 = vmatmul.mubr.f32.gmra.mrb[0].mxu0 %v274
      %v1766 = vpop.f32.mrb[0].mxu0
      %v1767 = vadd.f32 %v1462, %v1766
      %v1768 = vpop.f32.mrb[0].mxu0
      %1769 = vmatprep.mubr.f32.mxu0 0.0
      %1770 = vmatmul.mubr.f32.gmra.mrb[0].mxu0 %v275
      %v1771 = vpop.f32.mrb[0].mxu0
      %v1772 = vadd.f32 %v1467, %v1771
      %v1773 = vpop.f32.mrb[0].mxu0
      %1774 = vmatprep.mubr.f32.mxu0 0.0
      %1775 = vmatmul.mubr.f32.gmra.mrb[0].mxu0 %v276
      %v1776 = vpop.f32.mrb[0].mxu0
      %v1777 = vadd.f32 %v1472, %v1776
      %v1778 = vpop.f32.mrb[0].mxu0
      %1779 = vmatprep.mubr.f32.mxu0 0.0
      %1780 = vmatmul.mubr.f32.gmra.mrb[0].mxu0 %v277
      %v1781 = vpop.f32.mrb[0].mxu0
      %v1782 = vadd.f32 %v1477, %v1781
      %v1783 = vpop.f32.mrb[0].mxu0
      %1784 = vmatprep.mubr.f32.mxu0 0.0
      %1785 = vmatmul.mubr.f32.gmra.mrb[0].mxu0 %v278
      %v1786 = vpop.f32.mrb[0].mxu0
      %v1787 = vadd.f32 %v1482, %v1786
      %v1788 = vpop.f32.mrb[0].mxu0
      %1789 = vmatprep.mubr.f32.mxu0 0.0
      %1790 = vmatmul.mubr.f32.gmra.mrb[0].mxu0 %v279
      %v1791 = vpop.f32.mrb[0].mxu0
      %v1792 = vadd.f32 %v1487, %v1791
      %v1793 = vpop.f32.mrb[0].mxu0
      %1794 = vmatprep.mubr.f32.mxu0 0.0
      %1795 = vmatmul.mubr.f32.gmra.mrb[0].mxu0 %v280
      %v1796 = vpop.f32.mrb[0].mxu0
      %v1797 = vadd.f32 %v1492, %v1796
      %v1798 = vpop.f32.mrb[0].mxu0
      %1799 = vmatprep.mubr.f32.mxu0 0.0
      %1800 = vmatmul.mubr.f32.gmra.mrb[0].mxu0 %v281
      %v1801 = vpop.f32.mrb[0].mxu0
      %v1802 = vadd.f32 %v1497, %v1801
      %v1803 = vpop.f32.mrb[0].mxu0
      %1804 = vmatprep.mubr.f32.mxu0 0.0
      %1805 = vmatmul.mubr.f32.gmra.mrb[0].mxu0 %v282
      %v1806 = vpop.f32.mrb[0].mxu0
      %v1807 = vadd.f32 %v1502, %v1806
      %v1808 = vpop.f32.mrb[0].mxu0
      %1809 = vmatprep.mubr.f32.mxu0 0.0
      %1810 = vmatmul.mubr.f32.gmra.mrb[0].mxu0 %v283
      %v1811 = vpop.f32.mrb[0].mxu0
      %v1812 = vadd.f32 %v1507, %v1811
      %v1813 = vpop.f32.mrb[0].mxu0
      %1814 = vmatprep.mubr.f32.mxu0 0.0
      %1815 = vmatmul.mubr.f32.gmra.mrb[0].mxu0 %v284
      %v1816 = vpop.f32.mrb[0].mxu0
      %v1817 = vadd.f32 %v1512, %v1816
      %v1818 = vpop.f32.mrb[0].mxu0
      %1819 = vmatprep.mubr.f32.mxu0 0.0
      %1820 = vmatmul.mubr.f32.gmra.mrb[0].mxu0 %v285
      %v1821 = vpop.f32.mrb[0].mxu0
      %v1822 = vadd.f32 %v1517, %v1821
      %v1823 = vpop.f32.mrb[0].mxu0
      %1824 = vmatprep.mubr.f32.mxu0 0.0
      %1825 = vmatmul.mubr.f32.gmra.mrb[0].mxu0 %v286
      %v1826 = vpop.f32.mrb[0].mxu0
      %v1827 = vadd.f32 %v1522, %v1826
      %v1828 = vpop.f32.mrb[0].mxu0
      %1829 = vmatprep.mubr.f32.mxu0 0.0
      %1830 = vmatmul.mubr.f32.gmra.mrb[0].mxu0 %v287
      %v1831 = vpop.f32.mrb[0].mxu0
      %v1832 = vadd.f32 %v1527, %v1831
      %v1833 = vpop.f32.mrb[0].mxu0
      %1834 = vmatprep.mubr.f32.mxu0 0.0
      %1835 = vmatmul.mubr.f32.gmra.mrb[0].mxu0 %v288
      %v1836 = vpop.f32.mrb[0].mxu0
      %v1837 = vadd.f32 %v1532, %v1836
      %v1838 = vpop.f32.mrb[0].mxu0
      %1839 = vmatprep.mubr.f32.mxu0 0.0
      %1840 = vmatmul.mubr.f32.gmra.mrb[0].mxu0 %v289
      %v1841 = vpop.f32.mrb[0].mxu0
      %v1842 = vadd.f32 %v1537, %v1841
      %v1843 = vpop.f32.mrb[0].mxu0
      %1844 = vmatprep.mubr.f32.mxu0 0.0
      %1845 = vmatmul.mubr.f32.gmra.mrb[0].mxu0 %v290
      %v1846 = vpop.f32.mrb[0].mxu0
      %v1847 = vadd.f32 %v1542, %v1846
      %v1848 = vpop.f32.mrb[0].mxu0
      %1849 = vmatprep.mubr.f32.mxu0 0.0
      %1850 = vmatmul.mubr.f32.gmra.mrb[0].mxu0 %v291
      %v1851 = vpop.f32.mrb[0].mxu0
      %v1852 = vadd.f32 %v1547, %v1851
      %v1853 = vpop.f32.mrb[0].mxu0
      %1854 = vmatprep.mubr.f32.mxu0 0.0
      %1855 = vmatmul.mubr.f32.gmra.mrb[0].mxu0 %v292
      %v1856 = vpop.f32.mrb[0].mxu0
      %v1857 = vadd.f32 %v1552, %v1856
      %v1858 = vpop.f32.mrb[0].mxu0
      %1859 = vmatprep.mubr.f32.mxu0 0.0
      %1860 = vmatmul.mubr.f32.gmra.mrb[0].mxu0 %v293
      %v1861 = vpop.f32.mrb[0].mxu0
      %v1862 = vadd.f32 %v1557, %v1861
      %v1863 = vpop.f32.mrb[0].mxu0
      %1864 = vdwg.mxu0
      %s1865 = scalar_lea.vmem %s2, 256
      %v1866 = vld [vmem:[%s1865] sm:$0xff]
      %v1867 = vld [vmem:[%s1865 + $0x8] sm:$0xff]
      %v1868 = vld [vmem:[%s1865 + $0x10] sm:$0xff]
      %v1869 = vld [vmem:[%s1865 + $0x18] sm:$0xff]
      %v1870 = vld [vmem:[%s1865 + $0x20] sm:$0xff]
      %v1871 = vld [vmem:[%s1865 + $0x28] sm:$0xff]
      %v1872 = vld [vmem:[%s1865 + $0x30] sm:$0xff]
      %v1873 = vld [vmem:[%s1865 + $0x38] sm:$0xff]
      %v1874 = vld [vmem:[%s1865 + $0x40] sm:$0xff]
      %v1875 = vld [vmem:[%s1865 + $0x48] sm:$0xff]
      %v1876 = vld [vmem:[%s1865 + $0x50] sm:$0xff]
      %v1877 = vld [vmem:[%s1865 + $0x58] sm:$0xff]
      %v1878 = vld [vmem:[%s1865 + $0x60] sm:$0xff]
      %v1879 = vld [vmem:[%s1865 + $0x68] sm:$0xff]
      %v1880 = vld [vmem:[%s1865 + $0x70] sm:$0xff]
      %v1881 = vld [vmem:[%s1865 + $0x78] sm:$0xff]
      %1882 = vmatprep.subr.mxu0 0.0
      %1883 = vmatpush1.msra.mxu0 %v1866
      %1884 = vmatprep.subr.mxu0 0.0
      %1885 = vmatpush1.msra.mxu0 %v1867
      %1886 = vmatprep.subr.mxu0 0.0
      %1887 = vmatpush1.msra.mxu0 %v1868
      %1888 = vmatprep.subr.mxu0 0.0
      %1889 = vmatpush1.msra.mxu0 %v1869
      %1890 = vmatprep.subr.mxu0 0.0
      %1891 = vmatpush1.msra.mxu0 %v1870
      %1892 = vmatprep.subr.mxu0 0.0
      %1893 = vmatpush1.msra.mxu0 %v1871
      %1894 = vmatprep.subr.mxu0 0.0
      %1895 = vmatpush1.msra.mxu0 %v1872
      %1896 = vmatprep.subr.mxu0 0.0
      %1897 = vmatpush1.msra.mxu0 %v1873
      %1898 = vmatprep.subr.mxu0 0.0
      %1899 = vmatpush1.msra.mxu0 %v1874
      %1900 = vmatprep.subr.mxu0 0.0
      %1901 = vmatpush1.msra.mxu0 %v1875
      %1902 = vmatprep.subr.mxu0 0.0
      %1903 = vmatpush1.msra.mxu0 %v1876
      %1904 = vmatprep.subr.mxu0 0.0
      %1905 = vmatpush1.msra.mxu0 %v1877
      %1906 = vmatprep.subr.mxu0 0.0
      %1907 = vmatpush1.msra.mxu0 %v1878
      %1908 = vmatprep.subr.mxu0 0.0
      %1909 = vmatpush1.msra.mxu0 %v1879
      %1910 = vmatprep.subr.mxu0 0.0
      %1911 = vmatpush1.msra.mxu0 %v1880
      %1912 = vmatprep.subr.mxu0 0.0
      %1913 = vmatpush1.msra.mxu0 %v1881
      %1914 = vmatprep.subr.mxu0 0.0
      %1915 = vmatpush1.msra.mxu0 0.0
      %1916 = vmatprep.subr.mxu0 0.0
      %1917 = vmatpush1.msra.mxu0 0.0
      %1918 = vmatprep.subr.mxu0 0.0
      %1919 = vmatpush1.msra.mxu0 0.0
      %1920 = vmatprep.subr.mxu0 0.0
      %1921 = vmatpush1.msra.mxu0 0.0
      %1922 = vmatprep.subr.mxu0 0.0
      %1923 = vmatpush1.msra.mxu0 0.0
      %1924 = vmatprep.subr.mxu0 0.0
      %1925 = vmatpush1.msra.mxu0 0.0
      %1926 = vmatprep.subr.mxu0 0.0
      %1927 = vmatpush1.msra.mxu0 0.0
      %1928 = vmatprep.subr.mxu0 0.0
      %1929 = vmatpush1.msra.mxu0 0.0
      %1930 = vmatprep.subr.mxu0 0.0
      %1931 = vmatpush1.msra.mxu0 0.0
      %1932 = vmatprep.subr.mxu0 0.0
      %1933 = vmatpush1.msra.mxu0 0.0
      %1934 = vmatprep.subr.mxu0 0.0
      %1935 = vmatpush1.msra.mxu0 0.0
      %1936 = vmatprep.subr.mxu0 0.0
      %1937 = vmatpush1.msra.mxu0 0.0
      %1938 = vmatprep.subr.mxu0 0.0
      %1939 = vmatpush1.msra.mxu0 0.0
      %1940 = vmatprep.subr.mxu0 0.0
      %1941 = vmatpush1.msra.mxu0 0.0
      %1942 = vmatprep.subr.mxu0 0.0
      %1943 = vmatpush1.msra.mxu0 0.0
      %1944 = vmatprep.subr.mxu0 0.0
      %1945 = vmatpush1.msra.mxu0 0.0
      %1946 = vmatprep.mubr.f32.mxu0 0.0
      %1947 = vmatmul.mubr.f32.gmra.mrb[0].mxu0 %v346
      %v1948 = vpop.f32.mrb[0].mxu0
      %v1949 = vadd.f32 0.0, %v1948
      %v1950 = vpop.f32.mrb[0].mxu0
      %1951 = vmatprep.mubr.f32.mxu0 0.0
      %1952 = vmatmul.mubr.f32.gmra.mrb[0].mxu0 %v347
      %v1953 = vpop.f32.mrb[0].mxu0
      %v1954 = vadd.f32 0.0, %v1953
      %v1955 = vpop.f32.mrb[0].mxu0
      %1956 = vmatprep.mubr.f32.mxu0 0.0
      %1957 = vmatmul.mubr.f32.gmra.mrb[0].mxu0 %v348
      %v1958 = vpop.f32.mrb[0].mxu0
      %v1959 = vadd.f32 0.0, %v1958
      %v1960 = vpop.f32.mrb[0].mxu0
      %1961 = vmatprep.mubr.f32.mxu0 0.0
      %1962 = vmatmul.mubr.f32.gmra.mrb[0].mxu0 %v349
      %v1963 = vpop.f32.mrb[0].mxu0
      %v1964 = vadd.f32 0.0, %v1963
      %v1965 = vpop.f32.mrb[0].mxu0
      %1966 = vmatprep.mubr.f32.mxu0 0.0
      %1967 = vmatmul.mubr.f32.gmra.mrb[0].mxu0 %v350
      %v1968 = vpop.f32.mrb[0].mxu0
      %v1969 = vadd.f32 0.0, %v1968
      %v1970 = vpop.f32.mrb[0].mxu0
      %1971 = vmatprep.mubr.f32.mxu0 0.0
      %1972 = vmatmul.mubr.f32.gmra.mrb[0].mxu0 %v351
      %v1973 = vpop.f32.mrb[0].mxu0
      %v1974 = vadd.f32 0.0, %v1973
      %v1975 = vpop.f32.mrb[0].mxu0
      %1976 = vmatprep.mubr.f32.mxu0 0.0
      %1977 = vmatmul.mubr.f32.gmra.mrb[0].mxu0 %v352
      %v1978 = vpop.f32.mrb[0].mxu0
      %v1979 = vadd.f32 0.0, %v1978
      %v1980 = vpop.f32.mrb[0].mxu0
      %1981 = vmatprep.mubr.f32.mxu0 0.0
      %1982 = vmatmul.mubr.f32.gmra.mrb[0].mxu0 %v353
      %v1983 = vpop.f32.mrb[0].mxu0
      %v1984 = vadd.f32 0.0, %v1983
      %v1985 = vpop.f32.mrb[0].mxu0
      %1986 = vmatprep.mubr.f32.mxu0 0.0
      %1987 = vmatmul.mubr.f32.gmra.mrb[0].mxu0 %v354
      %v1988 = vpop.f32.mrb[0].mxu0
      %v1989 = vadd.f32 0.0, %v1988
      %v1990 = vpop.f32.mrb[0].mxu0
      %1991 = vmatprep.mubr.f32.mxu0 0.0
      %1992 = vmatmul.mubr.f32.gmra.mrb[0].mxu0 %v355
      %v1993 = vpop.f32.mrb[0].mxu0
      %v1994 = vadd.f32 0.0, %v1993
      %v1995 = vpop.f32.mrb[0].mxu0
      %1996 = vmatprep.mubr.f32.mxu0 0.0
      %1997 = vmatmul.mubr.f32.gmra.mrb[0].mxu0 %v356
      %v1998 = vpop.f32.mrb[0].mxu0
      %v1999 = vadd.f32 0.0, %v1998
      %v2000 = vpop.f32.mrb[0].mxu0
      %2001 = vmatprep.mubr.f32.mxu0 0.0
      %2002 = vmatmul.mubr.f32.gmra.mrb[0].mxu0 %v357
      %v2003 = vpop.f32.mrb[0].mxu0
      %v2004 = vadd.f32 0.0, %v2003
      %v2005 = vpop.f32.mrb[0].mxu0
      %2006 = vmatprep.mubr.f32.mxu0 0.0
      %2007 = vmatmul.mubr.f32.gmra.mrb[0].mxu0 %v358
      %v2008 = vpop.f32.mrb[0].mxu0
      %v2009 = vadd.f32 0.0, %v2008
      %v2010 = vpop.f32.mrb[0].mxu0
      %2011 = vmatprep.mubr.f32.mxu0 0.0
      %2012 = vmatmul.mubr.f32.gmra.mrb[0].mxu0 %v359
      %v2013 = vpop.f32.mrb[0].mxu0
      %v2014 = vadd.f32 0.0, %v2013
      %v2015 = vpop.f32.mrb[0].mxu0
      %2016 = vmatprep.mubr.f32.mxu0 0.0
      %2017 = vmatmul.mubr.f32.gmra.mrb[0].mxu0 %v360
      %v2018 = vpop.f32.mrb[0].mxu0
      %v2019 = vadd.f32 0.0, %v2018
      %v2020 = vpop.f32.mrb[0].mxu0
      %2021 = vmatprep.mubr.f32.mxu0 0.0
      %2022 = vmatmul.mubr.f32.gmra.mrb[0].mxu0 %v361
      %v2023 = vpop.f32.mrb[0].mxu0
      %v2024 = vadd.f32 0.0, %v2023
      %v2025 = vpop.f32.mrb[0].mxu0
      %2026 = vmatprep.mubr.f32.mxu0 0.0
      %2027 = vmatmul.mubr.f32.gmra.mrb[0].mxu0 %v362
      %v2028 = vpop.f32.mrb[0].mxu0
      %v2029 = vadd.f32 0.0, %v2028
      %v2030 = vpop.f32.mrb[0].mxu0
      %2031 = vmatprep.mubr.f32.mxu0 0.0
      %2032 = vmatmul.mubr.f32.gmra.mrb[0].mxu0 %v363
      %v2033 = vpop.f32.mrb[0].mxu0
      %v2034 = vadd.f32 0.0, %v2033
      %v2035 = vpop.f32.mrb[0].mxu0
      %2036 = vmatprep.mubr.f32.mxu0 0.0
      %2037 = vmatmul.mubr.f32.gmra.mrb[0].mxu0 %v364
      %v2038 = vpop.f32.mrb[0].mxu0
      %v2039 = vadd.f32 0.0, %v2038
      %v2040 = vpop.f32.mrb[0].mxu0
      %2041 = vmatprep.mubr.f32.mxu0 0.0
      %2042 = vmatmul.mubr.f32.gmra.mrb[0].mxu0 %v365
      %v2043 = vpop.f32.mrb[0].mxu0
      %v2044 = vadd.f32 0.0, %v2043
      %v2045 = vpop.f32.mrb[0].mxu0
      %2046 = vmatprep.mubr.f32.mxu0 0.0
      %2047 = vmatmul.mubr.f32.gmra.mrb[0].mxu0 %v366
      %v2048 = vpop.f32.mrb[0].mxu0
      %v2049 = vadd.f32 0.0, %v2048
      %v2050 = vpop.f32.mrb[0].mxu0
      %2051 = vmatprep.mubr.f32.mxu0 0.0
      %2052 = vmatmul.mubr.f32.gmra.mrb[0].mxu0 %v367
      %v2053 = vpop.f32.mrb[0].mxu0
      %v2054 = vadd.f32 0.0, %v2053
      %v2055 = vpop.f32.mrb[0].mxu0
      %2056 = vmatprep.mubr.f32.mxu0 0.0
      %2057 = vmatmul.mubr.f32.gmra.mrb[0].mxu0 %v368
      %v2058 = vpop.f32.mrb[0].mxu0
      %v2059 = vadd.f32 0.0, %v2058
      %v2060 = vpop.f32.mrb[0].mxu0
      %2061 = vmatprep.mubr.f32.mxu0 0.0
      %2062 = vmatmul.mubr.f32.gmra.mrb[0].mxu0 %v369
      %v2063 = vpop.f32.mrb[0].mxu0
      %v2064 = vadd.f32 0.0, %v2063
      %v2065 = vpop.f32.mrb[0].mxu0
      %2066 = vmatprep.mubr.f32.mxu0 0.0
      %2067 = vmatmul.mubr.f32.gmra.mrb[0].mxu0 %v370
      %v2068 = vpop.f32.mrb[0].mxu0
      %v2069 = vadd.f32 0.0, %v2068
      %v2070 = vpop.f32.mrb[0].mxu0
      %2071 = vmatprep.mubr.f32.mxu0 0.0
      %2072 = vmatmul.mubr.f32.gmra.mrb[0].mxu0 %v371
      %v2073 = vpop.f32.mrb[0].mxu0
      %v2074 = vadd.f32 0.0, %v2073
      %v2075 = vpop.f32.mrb[0].mxu0
      %2076 = vmatprep.mubr.f32.mxu0 0.0
      %2077 = vmatmul.mubr.f32.gmra.mrb[0].mxu0 %v372
      %v2078 = vpop.f32.mrb[0].mxu0
      %v2079 = vadd.f32 0.0, %v2078
      %v2080 = vpop.f32.mrb[0].mxu0
      %2081 = vmatprep.mubr.f32.mxu0 0.0
      %2082 = vmatmul.mubr.f32.gmra.mrb[0].mxu0 %v373
      %v2083 = vpop.f32.mrb[0].mxu0
      %v2084 = vadd.f32 0.0, %v2083
      %v2085 = vpop.f32.mrb[0].mxu0
      %2086 = vmatprep.mubr.f32.mxu0 0.0
      %2087 = vmatmul.mubr.f32.gmra.mrb[0].mxu0 %v374
      %v2088 = vpop.f32.mrb[0].mxu0
      %v2089 = vadd.f32 0.0, %v2088
      %v2090 = vpop.f32.mrb[0].mxu0
      %2091 = vmatprep.mubr.f32.mxu0 0.0
      %2092 = vmatmul.mubr.f32.gmra.mrb[0].mxu0 %v375
      %v2093 = vpop.f32.mrb[0].mxu0
      %v2094 = vadd.f32 0.0, %v2093
      %v2095 = vpop.f32.mrb[0].mxu0
      %2096 = vmatprep.mubr.f32.mxu0 0.0
      %2097 = vmatmul.mubr.f32.gmra.mrb[0].mxu0 %v376
      %v2098 = vpop.f32.mrb[0].mxu0
      %v2099 = vadd.f32 0.0, %v2098
      %v2100 = vpop.f32.mrb[0].mxu0
      %2101 = vmatprep.mubr.f32.mxu0 0.0
      %2102 = vmatmul.mubr.f32.gmra.mrb[0].mxu0 %v377
      %v2103 = vpop.f32.mrb[0].mxu0
      %v2104 = vadd.f32 0.0, %v2103
      %v2105 = vpop.f32.mrb[0].mxu0
      %2106 = vmatprep.mubr.f32.mxu0 0.0
      %2107 = vmatmul.mubr.f32.gmra.mrb[0].mxu0 %v378
      %v2108 = vpop.f32.mrb[0].mxu0
      %v2109 = vadd.f32 0.0, %v2108
      %v2110 = vpop.f32.mrb[0].mxu0
      %2111 = vmatprep.mubr.f32.mxu0 0.0
      %2112 = vmatmul.mubr.f32.gmra.mrb[0].mxu0 %v379
      %v2113 = vpop.f32.mrb[0].mxu0
      %v2114 = vadd.f32 0.0, %v2113
      %v2115 = vpop.f32.mrb[0].mxu0
      %2116 = vmatprep.mubr.f32.mxu0 0.0
      %2117 = vmatmul.mubr.f32.gmra.mrb[0].mxu0 %v380
      %v2118 = vpop.f32.mrb[0].mxu0
      %v2119 = vadd.f32 0.0, %v2118
      %v2120 = vpop.f32.mrb[0].mxu0
      %2121 = vmatprep.mubr.f32.mxu0 0.0
      %2122 = vmatmul.mubr.f32.gmra.mrb[0].mxu0 %v381
      %v2123 = vpop.f32.mrb[0].mxu0
      %v2124 = vadd.f32 0.0, %v2123
      %v2125 = vpop.f32.mrb[0].mxu0
      %2126 = vmatprep.mubr.f32.mxu0 0.0
      %2127 = vmatmul.mubr.f32.gmra.mrb[0].mxu0 %v382
      %v2128 = vpop.f32.mrb[0].mxu0
      %v2129 = vadd.f32 0.0, %v2128
      %v2130 = vpop.f32.mrb[0].mxu0
      %2131 = vmatprep.mubr.f32.mxu0 0.0
      %2132 = vmatmul.mubr.f32.gmra.mrb[0].mxu0 %v383
      %v2133 = vpop.f32.mrb[0].mxu0
      %v2134 = vadd.f32 0.0, %v2133
      %v2135 = vpop.f32.mrb[0].mxu0
      %2136 = vmatprep.mubr.f32.mxu0 0.0
      %2137 = vmatmul.mubr.f32.gmra.mrb[0].mxu0 %v384
      %v2138 = vpop.f32.mrb[0].mxu0
      %v2139 = vadd.f32 0.0, %v2138
      %v2140 = vpop.f32.mrb[0].mxu0
      %2141 = vmatprep.mubr.f32.mxu0 0.0
      %2142 = vmatmul.mubr.f32.gmra.mrb[0].mxu0 %v385
      %v2143 = vpop.f32.mrb[0].mxu0
      %v2144 = vadd.f32 0.0, %v2143
      %v2145 = vpop.f32.mrb[0].mxu0
      %2146 = vmatprep.mubr.f32.mxu0 0.0
      %2147 = vmatmul.mubr.f32.gmra.mrb[0].mxu0 %v386
      %v2148 = vpop.f32.mrb[0].mxu0
      %v2149 = vadd.f32 0.0, %v2148
      %v2150 = vpop.f32.mrb[0].mxu0
      %2151 = vmatprep.mubr.f32.mxu0 0.0
      %2152 = vmatmul.mubr.f32.gmra.mrb[0].mxu0 %v387
      %v2153 = vpop.f32.mrb[0].mxu0
      %v2154 = vadd.f32 0.0, %v2153
      %v2155 = vpop.f32.mrb[0].mxu0
      %2156 = vmatprep.mubr.f32.mxu0 0.0
      %2157 = vmatmul.mubr.f32.gmra.mrb[0].mxu0 %v388
      %v2158 = vpop.f32.mrb[0].mxu0
      %v2159 = vadd.f32 0.0, %v2158
      %v2160 = vpop.f32.mrb[0].mxu0
      %2161 = vmatprep.mubr.f32.mxu0 0.0
      %2162 = vmatmul.mubr.f32.gmra.mrb[0].mxu0 %v389
      %v2163 = vpop.f32.mrb[0].mxu0
      %v2164 = vadd.f32 0.0, %v2163
      %v2165 = vpop.f32.mrb[0].mxu0
      %2166 = vmatprep.mubr.f32.mxu0 0.0
      %2167 = vmatmul.mubr.f32.gmra.mrb[0].mxu0 %v390
      %v2168 = vpop.f32.mrb[0].mxu0
      %v2169 = vadd.f32 0.0, %v2168
      %v2170 = vpop.f32.mrb[0].mxu0
      %2171 = vmatprep.mubr.f32.mxu0 0.0
      %2172 = vmatmul.mubr.f32.gmra.mrb[0].mxu0 %v391
      %v2173 = vpop.f32.mrb[0].mxu0
      %v2174 = vadd.f32 0.0, %v2173
      %v2175 = vpop.f32.mrb[0].mxu0
      %2176 = vmatprep.mubr.f32.mxu0 0.0
      %2177 = vmatmul.mubr.f32.gmra.mrb[0].mxu0 %v392
      %v2178 = vpop.f32.mrb[0].mxu0
      %v2179 = vadd.f32 0.0, %v2178
      %v2180 = vpop.f32.mrb[0].mxu0
      %2181 = vmatprep.mubr.f32.mxu0 0.0
      %2182 = vmatmul.mubr.f32.gmra.mrb[0].mxu0 %v393
      %v2183 = vpop.f32.mrb[0].mxu0
      %v2184 = vadd.f32 0.0, %v2183
      %v2185 = vpop.f32.mrb[0].mxu0
      %2186 = vdwg.mxu0
      %v2187 = vadd.f32 %v1627, %v1949
      %v2188 = vadd.f32 %v1632, %v1954
      %v2189 = vadd.f32 %v1637, %v1959
      %v2190 = vadd.f32 %v1642, %v1964
      %v2191 = vadd.f32 %v1647, %v1969
      %v2192 = vadd.f32 %v1652, %v1974
      %v2193 = vadd.f32 %v1657, %v1979
      %v2194 = vadd.f32 %v1662, %v1984
      %v2195 = vadd.f32 %v1667, %v1989
      %v2196 = vadd.f32 %v1672, %v1994
      %v2197 = vadd.f32 %v1677, %v1999
      %v2198 = vadd.f32 %v1682, %v2004
      %v2199 = vadd.f32 %v1687, %v2009
      %v2200 = vadd.f32 %v1692, %v2014
      %v2201 = vadd.f32 %v1697, %v2019
      %v2202 = vadd.f32 %v1702, %v2024
      %v2203 = vadd.f32 %v1707, %v2029
      %v2204 = vadd.f32 %v1712, %v2034
      %v2205 = vadd.f32 %v1717, %v2039
      %v2206 = vadd.f32 %v1722, %v2044
      %v2207 = vadd.f32 %v1727, %v2049
      %v2208 = vadd.f32 %v1732, %v2054
      %v2209 = vadd.f32 %v1737, %v2059
      %v2210 = vadd.f32 %v1742, %v2064
      %v2211 = vadd.f32 %v1747, %v2069
      %v2212 = vadd.f32 %v1752, %v2074
      %v2213 = vadd.f32 %v1757, %v2079
      %v2214 = vadd.f32 %v1762, %v2084
      %v2215 = vadd.f32 %v1767, %v2089
      %v2216 = vadd.f32 %v1772, %v2094
      %v2217 = vadd.f32 %v1777, %v2099
      %v2218 = vadd.f32 %v1782, %v2104
      %v2219 = vadd.f32 %v1787, %v2109
      %v2220 = vadd.f32 %v1792, %v2114
      %v2221 = vadd.f32 %v1797, %v2119
      %v2222 = vadd.f32 %v1802, %v2124
      %v2223 = vadd.f32 %v1807, %v2129
      %v2224 = vadd.f32 %v1812, %v2134
      %v2225 = vadd.f32 %v1817, %v2139
      %v2226 = vadd.f32 %v1822, %v2144
      %v2227 = vadd.f32 %v1827, %v2149
      %v2228 = vadd.f32 %v1832, %v2154
      %v2229 = vadd.f32 %v1837, %v2159
      %v2230 = vadd.f32 %v1842, %v2164
      %v2231 = vadd.f32 %v1847, %v2169
      %v2232 = vadd.f32 %v1852, %v2174
      %v2233 = vadd.f32 %v1857, %v2179
      %v2234 = vadd.f32 %v1862, %v2184
      %s2235 = scalar_lea.vmem %s2, 384
      %v2236 = vld [vmem:[%s2235] sm:$0xff]
      %v2237 = vld [vmem:[%s2235 + $0x8] sm:$0xff]
      %v2238 = vld [vmem:[%s2235 + $0x10] sm:$0xff]
      %v2239 = vld [vmem:[%s2235 + $0x18] sm:$0xff]
      %v2240 = vld [vmem:[%s2235 + $0x20] sm:$0xff]
      %v2241 = vld [vmem:[%s2235 + $0x28] sm:$0xff]
      %v2242 = vld [vmem:[%s2235 + $0x30] sm:$0xff]
      %v2243 = vld [vmem:[%s2235 + $0x38] sm:$0xff]
      %v2244 = vld [vmem:[%s2235 + $0x40] sm:$0xff]
      %v2245 = vld [vmem:[%s2235 + $0x48] sm:$0xff]
      %v2246 = vld [vmem:[%s2235 + $0x50] sm:$0xff]
      %v2247 = vld [vmem:[%s2235 + $0x58] sm:$0xff]
      %v2248 = vld [vmem:[%s2235 + $0x60] sm:$0xff]
      %v2249 = vld [vmem:[%s2235 + $0x68] sm:$0xff]
      %v2250 = vld [vmem:[%s2235 + $0x70] sm:$0xff]
      %v2251 = vld [vmem:[%s2235 + $0x78] sm:$0xff]
      %2252 = vmatprep.subr.mxu0 0.0
      %2253 = vmatpush1.msra.mxu0 %v2236
      %2254 = vmatprep.subr.mxu0 0.0
      %2255 = vmatpush1.msra.mxu0 %v2237
      %2256 = vmatprep.subr.mxu0 0.0
      %2257 = vmatpush1.msra.mxu0 %v2238
      %2258 = vmatprep.subr.mxu0 0.0
      %2259 = vmatpush1.msra.mxu0 %v2239
      %2260 = vmatprep.subr.mxu0 0.0
      %2261 = vmatpush1.msra.mxu0 %v2240
      %2262 = vmatprep.subr.mxu0 0.0
      %2263 = vmatpush1.msra.mxu0 %v2241
      %2264 = vmatprep.subr.mxu0 0.0
      %2265 = vmatpush1.msra.mxu0 %v2242
      %2266 = vmatprep.subr.mxu0 0.0
      %2267 = vmatpush1.msra.mxu0 %v2243
      %2268 = vmatprep.subr.mxu0 0.0
      %2269 = vmatpush1.msra.mxu0 %v2244
      %2270 = vmatprep.subr.mxu0 0.0
      %2271 = vmatpush1.msra.mxu0 %v2245
      %2272 = vmatprep.subr.mxu0 0.0
      %2273 = vmatpush1.msra.mxu0 %v2246
      %2274 = vmatprep.subr.mxu0 0.0
      %2275 = vmatpush1.msra.mxu0 %v2247
      %2276 = vmatprep.subr.mxu0 0.0
      %2277 = vmatpush1.msra.mxu0 %v2248
      %2278 = vmatprep.subr.mxu0 0.0
      %2279 = vmatpush1.msra.mxu0 %v2249
      %2280 = vmatprep.subr.mxu0 0.0
      %2281 = vmatpush1.msra.mxu0 %v2250
      %2282 = vmatprep.subr.mxu0 0.0
      %2283 = vmatpush1.msra.mxu0 %v2251
      %2284 = vmatprep.subr.mxu0 0.0
      %2285 = vmatpush1.msra.mxu0 0.0
      %2286 = vmatprep.subr.mxu0 0.0
      %2287 = vmatpush1.msra.mxu0 0.0
      %2288 = vmatprep.subr.mxu0 0.0
      %2289 = vmatpush1.msra.mxu0 0.0
      %2290 = vmatprep.subr.mxu0 0.0
      %2291 = vmatpush1.msra.mxu0 0.0
      %2292 = vmatprep.subr.mxu0 0.0
      %2293 = vmatpush1.msra.mxu0 0.0
      %2294 = vmatprep.subr.mxu0 0.0
      %2295 = vmatpush1.msra.mxu0 0.0
      %2296 = vmatprep.subr.mxu0 0.0
      %2297 = vmatpush1.msra.mxu0 0.0
      %2298 = vmatprep.subr.mxu0 0.0
      %2299 = vmatpush1.msra.mxu0 0.0
      %2300 = vmatprep.subr.mxu0 0.0
      %2301 = vmatpush1.msra.mxu0 0.0
      %2302 = vmatprep.subr.mxu0 0.0
      %2303 = vmatpush1.msra.mxu0 0.0
      %2304 = vmatprep.subr.mxu0 0.0
      %2305 = vmatpush1.msra.mxu0 0.0
      %2306 = vmatprep.subr.mxu0 0.0
      %2307 = vmatpush1.msra.mxu0 0.0
      %2308 = vmatprep.subr.mxu0 0.0
      %2309 = vmatpush1.msra.mxu0 0.0
      %2310 = vmatprep.subr.mxu0 0.0
      %2311 = vmatpush1.msra.mxu0 0.0
      %2312 = vmatprep.subr.mxu0 0.0
      %2313 = vmatpush1.msra.mxu0 0.0
      %2314 = vmatprep.subr.mxu0 0.0
      %2315 = vmatpush1.msra.mxu0 0.0
      %2316 = vmatprep.mubr.f32.mxu0 0.0
      %2317 = vmatmul.mubr.f32.gmra.mrb[0].mxu0 %v1030
      %v2318 = vpop.f32.mrb[0].mxu0
      %v2319 = vadd.f32 0.0, %v2318
      %v2320 = vpop.f32.mrb[0].mxu0
      %2321 = vmatprep.mubr.f32.mxu0 0.0
      %2322 = vmatmul.mubr.f32.gmra.mrb[0].mxu0 %v1031
      %v2323 = vpop.f32.mrb[0].mxu0
      %v2324 = vadd.f32 0.0, %v2323
      %v2325 = vpop.f32.mrb[0].mxu0
      %2326 = vmatprep.mubr.f32.mxu0 0.0
      %2327 = vmatmul.mubr.f32.gmra.mrb[0].mxu0 %v1032
      %v2328 = vpop.f32.mrb[0].mxu0
      %v2329 = vadd.f32 0.0, %v2328
      %v2330 = vpop.f32.mrb[0].mxu0
      %2331 = vmatprep.mubr.f32.mxu0 0.0
      %2332 = vmatmul.mubr.f32.gmra.mrb[0].mxu0 %v1033
      %v2333 = vpop.f32.mrb[0].mxu0
      %v2334 = vadd.f32 0.0, %v2333
      %v2335 = vpop.f32.mrb[0].mxu0
      %2336 = vmatprep.mubr.f32.mxu0 0.0
      %2337 = vmatmul.mubr.f32.gmra.mrb[0].mxu0 %v1034
      %v2338 = vpop.f32.mrb[0].mxu0
      %v2339 = vadd.f32 0.0, %v2338
      %v2340 = vpop.f32.mrb[0].mxu0
      %2341 = vmatprep.mubr.f32.mxu0 0.0
      %2342 = vmatmul.mubr.f32.gmra.mrb[0].mxu0 %v1035
      %v2343 = vpop.f32.mrb[0].mxu0
      %v2344 = vadd.f32 0.0, %v2343
      %v2345 = vpop.f32.mrb[0].mxu0
      %2346 = vmatprep.mubr.f32.mxu0 0.0
      %2347 = vmatmul.mubr.f32.gmra.mrb[0].mxu0 %v1036
      %v2348 = vpop.f32.mrb[0].mxu0
      %v2349 = vadd.f32 0.0, %v2348
      %v2350 = vpop.f32.mrb[0].mxu0
      %2351 = vmatprep.mubr.f32.mxu0 0.0
      %2352 = vmatmul.mubr.f32.gmra.mrb[0].mxu0 %v1037
      %v2353 = vpop.f32.mrb[0].mxu0
      %v2354 = vadd.f32 0.0, %v2353
      %v2355 = vpop.f32.mrb[0].mxu0
      %2356 = vmatprep.mubr.f32.mxu0 0.0
      %2357 = vmatmul.mubr.f32.gmra.mrb[0].mxu0 %v1038
      %v2358 = vpop.f32.mrb[0].mxu0
      %v2359 = vadd.f32 0.0, %v2358
      %v2360 = vpop.f32.mrb[0].mxu0
      %2361 = vmatprep.mubr.f32.mxu0 0.0
      %2362 = vmatmul.mubr.f32.gmra.mrb[0].mxu0 %v1039
      %v2363 = vpop.f32.mrb[0].mxu0
      %v2364 = vadd.f32 0.0, %v2363
      %v2365 = vpop.f32.mrb[0].mxu0
      %2366 = vmatprep.mubr.f32.mxu0 0.0
      %2367 = vmatmul.mubr.f32.gmra.mrb[0].mxu0 %v1040
      %v2368 = vpop.f32.mrb[0].mxu0
      %v2369 = vadd.f32 0.0, %v2368
      %v2370 = vpop.f32.mrb[0].mxu0
      %2371 = vmatprep.mubr.f32.mxu0 0.0
      %2372 = vmatmul.mubr.f32.gmra.mrb[0].mxu0 %v1041
      %v2373 = vpop.f32.mrb[0].mxu0
      %v2374 = vadd.f32 0.0, %v2373
      %v2375 = vpop.f32.mrb[0].mxu0
      %2376 = vmatprep.mubr.f32.mxu0 0.0
      %2377 = vmatmul.mubr.f32.gmra.mrb[0].mxu0 %v1042
      %v2378 = vpop.f32.mrb[0].mxu0
      %v2379 = vadd.f32 0.0, %v2378
      %v2380 = vpop.f32.mrb[0].mxu0
      %2381 = vmatprep.mubr.f32.mxu0 0.0
      %2382 = vmatmul.mubr.f32.gmra.mrb[0].mxu0 %v1043
      %v2383 = vpop.f32.mrb[0].mxu0
      %v2384 = vadd.f32 0.0, %v2383
      %v2385 = vpop.f32.mrb[0].mxu0
      %2386 = vmatprep.mubr.f32.mxu0 0.0
      %2387 = vmatmul.mubr.f32.gmra.mrb[0].mxu0 %v1044
      %v2388 = vpop.f32.mrb[0].mxu0
      %v2389 = vadd.f32 0.0, %v2388
      %v2390 = vpop.f32.mrb[0].mxu0
      %2391 = vmatprep.mubr.f32.mxu0 0.0
      %2392 = vmatmul.mubr.f32.gmra.mrb[0].mxu0 %v1045
      %v2393 = vpop.f32.mrb[0].mxu0
      %v2394 = vadd.f32 0.0, %v2393
      %v2395 = vpop.f32.mrb[0].mxu0
      %2396 = vmatprep.mubr.f32.mxu0 0.0
      %2397 = vmatmul.mubr.f32.gmra.mrb[0].mxu0 %v1046
      %v2398 = vpop.f32.mrb[0].mxu0
      %v2399 = vadd.f32 0.0, %v2398
      %v2400 = vpop.f32.mrb[0].mxu0
      %2401 = vmatprep.mubr.f32.mxu0 0.0
      %2402 = vmatmul.mubr.f32.gmra.mrb[0].mxu0 %v1047
      %v2403 = vpop.f32.mrb[0].mxu0
      %v2404 = vadd.f32 0.0, %v2403
      %v2405 = vpop.f32.mrb[0].mxu0
      %2406 = vmatprep.mubr.f32.mxu0 0.0
      %2407 = vmatmul.mubr.f32.gmra.mrb[0].mxu0 %v1048
      %v2408 = vpop.f32.mrb[0].mxu0
      %v2409 = vadd.f32 0.0, %v2408
      %v2410 = vpop.f32.mrb[0].mxu0
      %2411 = vmatprep.mubr.f32.mxu0 0.0
      %2412 = vmatmul.mubr.f32.gmra.mrb[0].mxu0 %v1049
      %v2413 = vpop.f32.mrb[0].mxu0
      %v2414 = vadd.f32 0.0, %v2413
      %v2415 = vpop.f32.mrb[0].mxu0
      %2416 = vmatprep.mubr.f32.mxu0 0.0
      %2417 = vmatmul.mubr.f32.gmra.mrb[0].mxu0 %v1050
      %v2418 = vpop.f32.mrb[0].mxu0
      %v2419 = vadd.f32 0.0, %v2418
      %v2420 = vpop.f32.mrb[0].mxu0
      %2421 = vmatprep.mubr.f32.mxu0 0.0
      %2422 = vmatmul.mubr.f32.gmra.mrb[0].mxu0 %v1051
      %v2423 = vpop.f32.mrb[0].mxu0
      %v2424 = vadd.f32 0.0, %v2423
      %v2425 = vpop.f32.mrb[0].mxu0
      %2426 = vmatprep.mubr.f32.mxu0 0.0
      %2427 = vmatmul.mubr.f32.gmra.mrb[0].mxu0 %v1052
      %v2428 = vpop.f32.mrb[0].mxu0
      %v2429 = vadd.f32 0.0, %v2428
      %v2430 = vpop.f32.mrb[0].mxu0
      %2431 = vmatprep.mubr.f32.mxu0 0.0
      %2432 = vmatmul.mubr.f32.gmra.mrb[0].mxu0 %v1053
      %v2433 = vpop.f32.mrb[0].mxu0
      %v2434 = vadd.f32 0.0, %v2433
      %v2435 = vpop.f32.mrb[0].mxu0
      %2436 = vmatprep.mubr.f32.mxu0 0.0
      %2437 = vmatmul.mubr.f32.gmra.mrb[0].mxu0 %v1054
      %v2438 = vpop.f32.mrb[0].mxu0
      %v2439 = vadd.f32 0.0, %v2438
      %v2440 = vpop.f32.mrb[0].mxu0
      %2441 = vmatprep.mubr.f32.mxu0 0.0
      %2442 = vmatmul.mubr.f32.gmra.mrb[0].mxu0 %v1055
      %v2443 = vpop.f32.mrb[0].mxu0
      %v2444 = vadd.f32 0.0, %v2443
      %v2445 = vpop.f32.mrb[0].mxu0
      %2446 = vmatprep.mubr.f32.mxu0 0.0
      %2447 = vmatmul.mubr.f32.gmra.mrb[0].mxu0 %v1056
      %v2448 = vpop.f32.mrb[0].mxu0
      %v2449 = vadd.f32 0.0, %v2448
      %v2450 = vpop.f32.mrb[0].mxu0
      %2451 = vmatprep.mubr.f32.mxu0 0.0
      %2452 = vmatmul.mubr.f32.gmra.mrb[0].mxu0 %v1057
      %v2453 = vpop.f32.mrb[0].mxu0
      %v2454 = vadd.f32 0.0, %v2453
      %v2455 = vpop.f32.mrb[0].mxu0
      %2456 = vmatprep.mubr.f32.mxu0 0.0
      %2457 = vmatmul.mubr.f32.gmra.mrb[0].mxu0 %v1058
      %v2458 = vpop.f32.mrb[0].mxu0
      %v2459 = vadd.f32 0.0, %v2458
      %v2460 = vpop.f32.mrb[0].mxu0
      %2461 = vmatprep.mubr.f32.mxu0 0.0
      %2462 = vmatmul.mubr.f32.gmra.mrb[0].mxu0 %v1059
      %v2463 = vpop.f32.mrb[0].mxu0
      %v2464 = vadd.f32 0.0, %v2463
      %v2465 = vpop.f32.mrb[0].mxu0
      %2466 = vmatprep.mubr.f32.mxu0 0.0
      %2467 = vmatmul.mubr.f32.gmra.mrb[0].mxu0 %v1060
      %v2468 = vpop.f32.mrb[0].mxu0
      %v2469 = vadd.f32 0.0, %v2468
      %v2470 = vpop.f32.mrb[0].mxu0
      %2471 = vmatprep.mubr.f32.mxu0 0.0
      %2472 = vmatmul.mubr.f32.gmra.mrb[0].mxu0 %v1061
      %v2473 = vpop.f32.mrb[0].mxu0
      %v2474 = vadd.f32 0.0, %v2473
      %v2475 = vpop.f32.mrb[0].mxu0
      %2476 = vmatprep.mubr.f32.mxu0 0.0
      %2477 = vmatmul.mubr.f32.gmra.mrb[0].mxu0 %v1062
      %v2478 = vpop.f32.mrb[0].mxu0
      %v2479 = vadd.f32 0.0, %v2478
      %v2480 = vpop.f32.mrb[0].mxu0
      %2481 = vmatprep.mubr.f32.mxu0 0.0
      %2482 = vmatmul.mubr.f32.gmra.mrb[0].mxu0 %v1063
      %v2483 = vpop.f32.mrb[0].mxu0
      %v2484 = vadd.f32 0.0, %v2483
      %v2485 = vpop.f32.mrb[0].mxu0
      %2486 = vmatprep.mubr.f32.mxu0 0.0
      %2487 = vmatmul.mubr.f32.gmra.mrb[0].mxu0 %v1064
      %v2488 = vpop.f32.mrb[0].mxu0
      %v2489 = vadd.f32 0.0, %v2488
      %v2490 = vpop.f32.mrb[0].mxu0
      %2491 = vmatprep.mubr.f32.mxu0 0.0
      %2492 = vmatmul.mubr.f32.gmra.mrb[0].mxu0 %v1065
      %v2493 = vpop.f32.mrb[0].mxu0
      %v2494 = vadd.f32 0.0, %v2493
      %v2495 = vpop.f32.mrb[0].mxu0
      %2496 = vmatprep.mubr.f32.mxu0 0.0
      %2497 = vmatmul.mubr.f32.gmra.mrb[0].mxu0 %v1066
      %v2498 = vpop.f32.mrb[0].mxu0
      %v2499 = vadd.f32 0.0, %v2498
      %v2500 = vpop.f32.mrb[0].mxu0
      %2501 = vmatprep.mubr.f32.mxu0 0.0
      %2502 = vmatmul.mubr.f32.gmra.mrb[0].mxu0 %v1067
      %v2503 = vpop.f32.mrb[0].mxu0
      %v2504 = vadd.f32 0.0, %v2503
      %v2505 = vpop.f32.mrb[0].mxu0
      %2506 = vmatprep.mubr.f32.mxu0 0.0
      %2507 = vmatmul.mubr.f32.gmra.mrb[0].mxu0 %v1068
      %v2508 = vpop.f32.mrb[0].mxu0
      %v2509 = vadd.f32 0.0, %v2508
      %v2510 = vpop.f32.mrb[0].mxu0
      %2511 = vmatprep.mubr.f32.mxu0 0.0
      %2512 = vmatmul.mubr.f32.gmra.mrb[0].mxu0 %v1069
      %v2513 = vpop.f32.mrb[0].mxu0
      %v2514 = vadd.f32 0.0, %v2513
      %v2515 = vpop.f32.mrb[0].mxu0
      %2516 = vmatprep.mubr.f32.mxu0 0.0
      %2517 = vmatmul.mubr.f32.gmra.mrb[0].mxu0 %v1070
      %v2518 = vpop.f32.mrb[0].mxu0
      %v2519 = vadd.f32 0.0, %v2518
      %v2520 = vpop.f32.mrb[0].mxu0
      %2521 = vmatprep.mubr.f32.mxu0 0.0
      %2522 = vmatmul.mubr.f32.gmra.mrb[0].mxu0 %v1071
      %v2523 = vpop.f32.mrb[0].mxu0
      %v2524 = vadd.f32 0.0, %v2523
      %v2525 = vpop.f32.mrb[0].mxu0
      %2526 = vmatprep.mubr.f32.mxu0 0.0
      %2527 = vmatmul.mubr.f32.gmra.mrb[0].mxu0 %v1072
      %v2528 = vpop.f32.mrb[0].mxu0
      %v2529 = vadd.f32 0.0, %v2528
      %v2530 = vpop.f32.mrb[0].mxu0
      %2531 = vmatprep.mubr.f32.mxu0 0.0
      %2532 = vmatmul.mubr.f32.gmra.mrb[0].mxu0 %v1073
      %v2533 = vpop.f32.mrb[0].mxu0
      %v2534 = vadd.f32 0.0, %v2533
      %v2535 = vpop.f32.mrb[0].mxu0
      %2536 = vmatprep.mubr.f32.mxu0 0.0
      %2537 = vmatmul.mubr.f32.gmra.mrb[0].mxu0 %v1074
      %v2538 = vpop.f32.mrb[0].mxu0
      %v2539 = vadd.f32 0.0, %v2538
      %v2540 = vpop.f32.mrb[0].mxu0
      %2541 = vmatprep.mubr.f32.mxu0 0.0
      %2542 = vmatmul.mubr.f32.gmra.mrb[0].mxu0 %v1075
      %v2543 = vpop.f32.mrb[0].mxu0
      %v2544 = vadd.f32 0.0, %v2543
      %v2545 = vpop.f32.mrb[0].mxu0
      %2546 = vmatprep.mubr.f32.mxu0 0.0
      %2547 = vmatmul.mubr.f32.gmra.mrb[0].mxu0 %v1076
      %v2548 = vpop.f32.mrb[0].mxu0
      %v2549 = vadd.f32 0.0, %v2548
      %v2550 = vpop.f32.mrb[0].mxu0
      %2551 = vmatprep.mubr.f32.mxu0 0.0
      %2552 = vmatmul.mubr.f32.gmra.mrb[0].mxu0 %v1077
      %v2553 = vpop.f32.mrb[0].mxu0
      %v2554 = vadd.f32 0.0, %v2553
      %v2555 = vpop.f32.mrb[0].mxu0
      %2556 = vdwg.mxu0
      %v2557 = vadd.f32 %v2187, %v2319
      %v2558 = vadd.f32 %v2188, %v2324
      %v2559 = vadd.f32 %v2189, %v2329
      %v2560 = vadd.f32 %v2190, %v2334
      %v2561 = vadd.f32 %v2191, %v2339
      %v2562 = vadd.f32 %v2192, %v2344
      %v2563 = vadd.f32 %v2193, %v2349
      %v2564 = vadd.f32 %v2194, %v2354
      %v2565 = vadd.f32 %v2195, %v2359
      %v2566 = vadd.f32 %v2196, %v2364
      %v2567 = vadd.f32 %v2197, %v2369
      %v2568 = vadd.f32 %v2198, %v2374
      %v2569 = vadd.f32 %v2199, %v2379
      %v2570 = vadd.f32 %v2200, %v2384
      %v2571 = vadd.f32 %v2201, %v2389
      %v2572 = vadd.f32 %v2202, %v2394
      %v2573 = vadd.f32 %v2203, %v2399
      %v2574 = vadd.f32 %v2204, %v2404
      %v2575 = vadd.f32 %v2205, %v2409
      %v2576 = vadd.f32 %v2206, %v2414
      %v2577 = vadd.f32 %v2207, %v2419
      %v2578 = vadd.f32 %v2208, %v2424
      %v2579 = vadd.f32 %v2209, %v2429
      %v2580 = vadd.f32 %v2210, %v2434
      %v2581 = vadd.f32 %v2211, %v2439
      %v2582 = vadd.f32 %v2212, %v2444
      %v2583 = vadd.f32 %v2213, %v2449
      %v2584 = vadd.f32 %v2214, %v2454
      %v2585 = vadd.f32 %v2215, %v2459
      %v2586 = vadd.f32 %v2216, %v2464
      %v2587 = vadd.f32 %v2217, %v2469
      %v2588 = vadd.f32 %v2218, %v2474
      %v2589 = vadd.f32 %v2219, %v2479
      %v2590 = vadd.f32 %v2220, %v2484
      %v2591 = vadd.f32 %v2221, %v2489
      %v2592 = vadd.f32 %v2222, %v2494
      %v2593 = vadd.f32 %v2223, %v2499
      %v2594 = vadd.f32 %v2224, %v2504
      %v2595 = vadd.f32 %v2225, %v2509
      %v2596 = vadd.f32 %v2226, %v2514
      %v2597 = vadd.f32 %v2227, %v2519
      %v2598 = vadd.f32 %v2228, %v2524
      %v2599 = vadd.f32 %v2229, %v2529
      %v2600 = vadd.f32 %v2230, %v2534
      %v2601 = vadd.f32 %v2231, %v2539
      %v2602 = vadd.f32 %v2232, %v2544
      %v2603 = vadd.f32 %v2233, %v2549
      %v2604 = vadd.f32 %v2234, %v2554
      %s2605 = scalar_lea.vmem %s2, 512
      %v2606 = vld [vmem:[%s2605] sm:$0xff]
      %v2607 = vld [vmem:[%s2605 + $0x8] sm:$0xff]
      %v2608 = vld [vmem:[%s2605 + $0x10] sm:$0xff]
      %v2609 = vld [vmem:[%s2605 + $0x18] sm:$0xff]
      %v2610 = vld [vmem:[%s2605 + $0x20] sm:$0xff]
      %v2611 = vld [vmem:[%s2605 + $0x28] sm:$0xff]
      %v2612 = vld [vmem:[%s2605 + $0x30] sm:$0xff]
      %v2613 = vld [vmem:[%s2605 + $0x38] sm:$0xff]
      %v2614 = vld [vmem:[%s2605 + $0x40] sm:$0xff]
      %v2615 = vld [vmem:[%s2605 + $0x48] sm:$0xff]
      %v2616 = vld [vmem:[%s2605 + $0x50] sm:$0xff]
      %v2617 = vld [vmem:[%s2605 + $0x58] sm:$0xff]
      %v2618 = vld [vmem:[%s2605 + $0x60] sm:$0xff]
      %v2619 = vld [vmem:[%s2605 + $0x68] sm:$0xff]
      %v2620 = vld [vmem:[%s2605 + $0x70] sm:$0xff]
      %v2621 = vld [vmem:[%s2605 + $0x78] sm:$0xff]
      %2622 = vmatprep.subr.mxu0 0.0
      %2623 = vmatpush1.msra.mxu0 %v2606
      %2624 = vmatprep.subr.mxu0 0.0
      %2625 = vmatpush1.msra.mxu0 %v2607
      %2626 = vmatprep.subr.mxu0 0.0
      %2627 = vmatpush1.msra.mxu0 %v2608
      %2628 = vmatprep.subr.mxu0 0.0
      %2629 = vmatpush1.msra.mxu0 %v2609
      %2630 = vmatprep.subr.mxu0 0.0
      %2631 = vmatpush1.msra.mxu0 %v2610
      %2632 = vmatprep.subr.mxu0 0.0
      %2633 = vmatpush1.msra.mxu0 %v2611
      %2634 = vmatprep.subr.mxu0 0.0
      %2635 = vmatpush1.msra.mxu0 %v2612
      %2636 = vmatprep.subr.mxu0 0.0
      %2637 = vmatpush1.msra.mxu0 %v2613
      %2638 = vmatprep.subr.mxu0 0.0
      %2639 = vmatpush1.msra.mxu0 %v2614
      %2640 = vmatprep.subr.mxu0 0.0
      %2641 = vmatpush1.msra.mxu0 %v2615
      %2642 = vmatprep.subr.mxu0 0.0
      %2643 = vmatpush1.msra.mxu0 %v2616
      %2644 = vmatprep.subr.mxu0 0.0
      %2645 = vmatpush1.msra.mxu0 %v2617
      %2646 = vmatprep.subr.mxu0 0.0
      %2647 = vmatpush1.msra.mxu0 %v2618
      %2648 = vmatprep.subr.mxu0 0.0
      %2649 = vmatpush1.msra.mxu0 %v2619
      %2650 = vmatprep.subr.mxu0 0.0
      %2651 = vmatpush1.msra.mxu0 %v2620
      %2652 = vmatprep.subr.mxu0 0.0
      %2653 = vmatpush1.msra.mxu0 %v2621
      %2654 = vmatprep.subr.mxu0 0.0
      %2655 = vmatpush1.msra.mxu0 0.0
      %2656 = vmatprep.subr.mxu0 0.0
      %2657 = vmatpush1.msra.mxu0 0.0
      %2658 = vmatprep.subr.mxu0 0.0
      %2659 = vmatpush1.msra.mxu0 0.0
      %2660 = vmatprep.subr.mxu0 0.0
      %2661 = vmatpush1.msra.mxu0 0.0
      %2662 = vmatprep.subr.mxu0 0.0
      %2663 = vmatpush1.msra.mxu0 0.0
      %2664 = vmatprep.subr.mxu0 0.0
      %2665 = vmatpush1.msra.mxu0 0.0
      %2666 = vmatprep.subr.mxu0 0.0
      %2667 = vmatpush1.msra.mxu0 0.0
      %2668 = vmatprep.subr.mxu0 0.0
      %2669 = vmatpush1.msra.mxu0 0.0
      %2670 = vmatprep.subr.mxu0 0.0
      %2671 = vmatpush1.msra.mxu0 0.0
      %2672 = vmatprep.subr.mxu0 0.0
      %2673 = vmatpush1.msra.mxu0 0.0
      %2674 = vmatprep.subr.mxu0 0.0
      %2675 = vmatpush1.msra.mxu0 0.0
      %2676 = vmatprep.subr.mxu0 0.0
      %2677 = vmatpush1.msra.mxu0 0.0
      %2678 = vmatprep.subr.mxu0 0.0
      %2679 = vmatpush1.msra.mxu0 0.0
      %2680 = vmatprep.subr.mxu0 0.0
      %2681 = vmatpush1.msra.mxu0 0.0
      %2682 = vmatprep.subr.mxu0 0.0
      %2683 = vmatpush1.msra.mxu0 0.0
      %2684 = vmatprep.subr.mxu0 0.0
      %2685 = vmatpush1.msra.mxu0 0.0
      %2686 = vmatprep.mubr.f32.mxu0 0.0
      %2687 = vmatmul.mubr.f32.gmra.mrb[0].mxu0 %v1078
      %v2688 = vpop.f32.mrb[0].mxu0
      %v2689 = vadd.f32 0.0, %v2688
      %v2690 = vpop.f32.mrb[0].mxu0
      %2691 = vmatprep.mubr.f32.mxu0 0.0
      %2692 = vmatmul.mubr.f32.gmra.mrb[0].mxu0 %v1079
      %v2693 = vpop.f32.mrb[0].mxu0
      %v2694 = vadd.f32 0.0, %v2693
      %v2695 = vpop.f32.mrb[0].mxu0
      %2696 = vmatprep.mubr.f32.mxu0 0.0
      %2697 = vmatmul.mubr.f32.gmra.mrb[0].mxu0 %v1080
      %v2698 = vpop.f32.mrb[0].mxu0
      %v2699 = vadd.f32 0.0, %v2698
      %v2700 = vpop.f32.mrb[0].mxu0
      %2701 = vmatprep.mubr.f32.mxu0 0.0
      %2702 = vmatmul.mubr.f32.gmra.mrb[0].mxu0 %v1081
      %v2703 = vpop.f32.mrb[0].mxu0
      %v2704 = vadd.f32 0.0, %v2703
      %v2705 = vpop.f32.mrb[0].mxu0
      %2706 = vmatprep.mubr.f32.mxu0 0.0
      %2707 = vmatmul.mubr.f32.gmra.mrb[0].mxu0 %v1082
      %v2708 = vpop.f32.mrb[0].mxu0
      %v2709 = vadd.f32 0.0, %v2708
      %v2710 = vpop.f32.mrb[0].mxu0
      %2711 = vmatprep.mubr.f32.mxu0 0.0
      %2712 = vmatmul.mubr.f32.gmra.mrb[0].mxu0 %v1083
      %v2713 = vpop.f32.mrb[0].mxu0
      %v2714 = vadd.f32 0.0, %v2713
      %v2715 = vpop.f32.mrb[0].mxu0
      %2716 = vmatprep.mubr.f32.mxu0 0.0
      %2717 = vmatmul.mubr.f32.gmra.mrb[0].mxu0 %v1084
      %v2718 = vpop.f32.mrb[0].mxu0
      %v2719 = vadd.f32 0.0, %v2718
      %v2720 = vpop.f32.mrb[0].mxu0
      %2721 = vmatprep.mubr.f32.mxu0 0.0
      %2722 = vmatmul.mubr.f32.gmra.mrb[0].mxu0 %v1085
      %v2723 = vpop.f32.mrb[0].mxu0
      %v2724 = vadd.f32 0.0, %v2723
      %v2725 = vpop.f32.mrb[0].mxu0
      %2726 = vmatprep.mubr.f32.mxu0 0.0
      %2727 = vmatmul.mubr.f32.gmra.mrb[0].mxu0 %v1086
      %v2728 = vpop.f32.mrb[0].mxu0
      %v2729 = vadd.f32 0.0, %v2728
      %v2730 = vpop.f32.mrb[0].mxu0
      %2731 = vmatprep.mubr.f32.mxu0 0.0
      %2732 = vmatmul.mubr.f32.gmra.mrb[0].mxu0 %v1087
      %v2733 = vpop.f32.mrb[0].mxu0
      %v2734 = vadd.f32 0.0, %v2733
      %v2735 = vpop.f32.mrb[0].mxu0
      %2736 = vmatprep.mubr.f32.mxu0 0.0
      %2737 = vmatmul.mubr.f32.gmra.mrb[0].mxu0 %v1088
      %v2738 = vpop.f32.mrb[0].mxu0
      %v2739 = vadd.f32 0.0, %v2738
      %v2740 = vpop.f32.mrb[0].mxu0
      %2741 = vmatprep.mubr.f32.mxu0 0.0
      %2742 = vmatmul.mubr.f32.gmra.mrb[0].mxu0 %v1089
      %v2743 = vpop.f32.mrb[0].mxu0
      %v2744 = vadd.f32 0.0, %v2743
      %v2745 = vpop.f32.mrb[0].mxu0
      %2746 = vmatprep.mubr.f32.mxu0 0.0
      %2747 = vmatmul.mubr.f32.gmra.mrb[0].mxu0 %v1090
      %v2748 = vpop.f32.mrb[0].mxu0
      %v2749 = vadd.f32 0.0, %v2748
      %v2750 = vpop.f32.mrb[0].mxu0
      %2751 = vmatprep.mubr.f32.mxu0 0.0
      %2752 = vmatmul.mubr.f32.gmra.mrb[0].mxu0 %v1091
      %v2753 = vpop.f32.mrb[0].mxu0
      %v2754 = vadd.f32 0.0, %v2753
      %v2755 = vpop.f32.mrb[0].mxu0
      %2756 = vmatprep.mubr.f32.mxu0 0.0
      %2757 = vmatmul.mubr.f32.gmra.mrb[0].mxu0 %v1092
      %v2758 = vpop.f32.mrb[0].mxu0
      %v2759 = vadd.f32 0.0, %v2758
      %v2760 = vpop.f32.mrb[0].mxu0
      %2761 = vmatprep.mubr.f32.mxu0 0.0
      %2762 = vmatmul.mubr.f32.gmra.mrb[0].mxu0 %v1093
      %v2763 = vpop.f32.mrb[0].mxu0
      %v2764 = vadd.f32 0.0, %v2763
      %v2765 = vpop.f32.mrb[0].mxu0
      %2766 = vmatprep.mubr.f32.mxu0 0.0
      %2767 = vmatmul.mubr.f32.gmra.mrb[0].mxu0 %v1094
      %v2768 = vpop.f32.mrb[0].mxu0
      %v2769 = vadd.f32 0.0, %v2768
      %v2770 = vpop.f32.mrb[0].mxu0
      %2771 = vmatprep.mubr.f32.mxu0 0.0
      %2772 = vmatmul.mubr.f32.gmra.mrb[0].mxu0 %v1095
      %v2773 = vpop.f32.mrb[0].mxu0
      %v2774 = vadd.f32 0.0, %v2773
      %v2775 = vpop.f32.mrb[0].mxu0
      %2776 = vmatprep.mubr.f32.mxu0 0.0
      %2777 = vmatmul.mubr.f32.gmra.mrb[0].mxu0 %v1096
      %v2778 = vpop.f32.mrb[0].mxu0
      %v2779 = vadd.f32 0.0, %v2778
      %v2780 = vpop.f32.mrb[0].mxu0
      %2781 = vmatprep.mubr.f32.mxu0 0.0
      %2782 = vmatmul.mubr.f32.gmra.mrb[0].mxu0 %v1097
      %v2783 = vpop.f32.mrb[0].mxu0
      %v2784 = vadd.f32 0.0, %v2783
      %v2785 = vpop.f32.mrb[0].mxu0
      %2786 = vmatprep.mubr.f32.mxu0 0.0
      %2787 = vmatmul.mubr.f32.gmra.mrb[0].mxu0 %v1098
      %v2788 = vpop.f32.mrb[0].mxu0
      %v2789 = vadd.f32 0.0, %v2788
      %v2790 = vpop.f32.mrb[0].mxu0
      %2791 = vmatprep.mubr.f32.mxu0 0.0
      %2792 = vmatmul.mubr.f32.gmra.mrb[0].mxu0 %v1099
      %v2793 = vpop.f32.mrb[0].mxu0
      %v2794 = vadd.f32 0.0, %v2793
      %v2795 = vpop.f32.mrb[0].mxu0
      %2796 = vmatprep.mubr.f32.mxu0 0.0
      %2797 = vmatmul.mubr.f32.gmra.mrb[0].mxu0 %v1100
      %v2798 = vpop.f32.mrb[0].mxu0
      %v2799 = vadd.f32 0.0, %v2798
      %v2800 = vpop.f32.mrb[0].mxu0
      %2801 = vmatprep.mubr.f32.mxu0 0.0
      %2802 = vmatmul.mubr.f32.gmra.mrb[0].mxu0 %v1101
      %v2803 = vpop.f32.mrb[0].mxu0
      %v2804 = vadd.f32 0.0, %v2803
      %v2805 = vpop.f32.mrb[0].mxu0
      %2806 = vmatprep.mubr.f32.mxu0 0.0
      %2807 = vmatmul.mubr.f32.gmra.mrb[0].mxu0 %v1102
      %v2808 = vpop.f32.mrb[0].mxu0
      %v2809 = vadd.f32 0.0, %v2808
      %v2810 = vpop.f32.mrb[0].mxu0
      %2811 = vmatprep.mubr.f32.mxu0 0.0
      %2812 = vmatmul.mubr.f32.gmra.mrb[0].mxu0 %v1103
      %v2813 = vpop.f32.mrb[0].mxu0
      %v2814 = vadd.f32 0.0, %v2813
      %v2815 = vpop.f32.mrb[0].mxu0
      %2816 = vmatprep.mubr.f32.mxu0 0.0
      %2817 = vmatmul.mubr.f32.gmra.mrb[0].mxu0 %v1104
      %v2818 = vpop.f32.mrb[0].mxu0
      %v2819 = vadd.f32 0.0, %v2818
      %v2820 = vpop.f32.mrb[0].mxu0
      %2821 = vmatprep.mubr.f32.mxu0 0.0
      %2822 = vmatmul.mubr.f32.gmra.mrb[0].mxu0 %v1105
      %v2823 = vpop.f32.mrb[0].mxu0
      %v2824 = vadd.f32 0.0, %v2823
      %v2825 = vpop.f32.mrb[0].mxu0
      %2826 = vmatprep.mubr.f32.mxu0 0.0
      %2827 = vmatmul.mubr.f32.gmra.mrb[0].mxu0 %v1106
      %v2828 = vpop.f32.mrb[0].mxu0
      %v2829 = vadd.f32 0.0, %v2828
      %v2830 = vpop.f32.mrb[0].mxu0
      %2831 = vmatprep.mubr.f32.mxu0 0.0
      %2832 = vmatmul.mubr.f32.gmra.mrb[0].mxu0 %v1107
      %v2833 = vpop.f32.mrb[0].mxu0
      %v2834 = vadd.f32 0.0, %v2833
      %v2835 = vpop.f32.mrb[0].mxu0
      %2836 = vmatprep.mubr.f32.mxu0 0.0
      %2837 = vmatmul.mubr.f32.gmra.mrb[0].mxu0 %v1108
      %v2838 = vpop.f32.mrb[0].mxu0
      %v2839 = vadd.f32 0.0, %v2838
      %v2840 = vpop.f32.mrb[0].mxu0
      %2841 = vmatprep.mubr.f32.mxu0 0.0
      %2842 = vmatmul.mubr.f32.gmra.mrb[0].mxu0 %v1109
      %v2843 = vpop.f32.mrb[0].mxu0
      %v2844 = vadd.f32 0.0, %v2843
      %v2845 = vpop.f32.mrb[0].mxu0
      %2846 = vmatprep.mubr.f32.mxu0 0.0
      %2847 = vmatmul.mubr.f32.gmra.mrb[0].mxu0 %v1110
      %v2848 = vpop.f32.mrb[0].mxu0
      %v2849 = vadd.f32 0.0, %v2848
      %v2850 = vpop.f32.mrb[0].mxu0
      %2851 = vmatprep.mubr.f32.mxu0 0.0
      %2852 = vmatmul.mubr.f32.gmra.mrb[0].mxu0 %v1111
      %v2853 = vpop.f32.mrb[0].mxu0
      %v2854 = vadd.f32 0.0, %v2853
      %v2855 = vpop.f32.mrb[0].mxu0
      %2856 = vmatprep.mubr.f32.mxu0 0.0
      %2857 = vmatmul.mubr.f32.gmra.mrb[0].mxu0 %v1112
      %v2858 = vpop.f32.mrb[0].mxu0
      %v2859 = vadd.f32 0.0, %v2858
      %v2860 = vpop.f32.mrb[0].mxu0
      %2861 = vmatprep.mubr.f32.mxu0 0.0
      %2862 = vmatmul.mubr.f32.gmra.mrb[0].mxu0 %v1113
      %v2863 = vpop.f32.mrb[0].mxu0
      %v2864 = vadd.f32 0.0, %v2863
      %v2865 = vpop.f32.mrb[0].mxu0
      %2866 = vmatprep.mubr.f32.mxu0 0.0
      %2867 = vmatmul.mubr.f32.gmra.mrb[0].mxu0 %v1114
      %v2868 = vpop.f32.mrb[0].mxu0
      %v2869 = vadd.f32 0.0, %v2868
      %v2870 = vpop.f32.mrb[0].mxu0
      %2871 = vmatprep.mubr.f32.mxu0 0.0
      %2872 = vmatmul.mubr.f32.gmra.mrb[0].mxu0 %v1115
      %v2873 = vpop.f32.mrb[0].mxu0
      %v2874 = vadd.f32 0.0, %v2873
      %v2875 = vpop.f32.mrb[0].mxu0
      %2876 = vmatprep.mubr.f32.mxu0 0.0
      %2877 = vmatmul.mubr.f32.gmra.mrb[0].mxu0 %v1116
      %v2878 = vpop.f32.mrb[0].mxu0
      %v2879 = vadd.f32 0.0, %v2878
      %v2880 = vpop.f32.mrb[0].mxu0
      %2881 = vmatprep.mubr.f32.mxu0 0.0
      %2882 = vmatmul.mubr.f32.gmra.mrb[0].mxu0 %v1117
      %v2883 = vpop.f32.mrb[0].mxu0
      %v2884 = vadd.f32 0.0, %v2883
      %v2885 = vpop.f32.mrb[0].mxu0
      %2886 = vmatprep.mubr.f32.mxu0 0.0
      %2887 = vmatmul.mubr.f32.gmra.mrb[0].mxu0 %v1118
      %v2888 = vpop.f32.mrb[0].mxu0
      %v2889 = vadd.f32 0.0, %v2888
      %v2890 = vpop.f32.mrb[0].mxu0
      %2891 = vmatprep.mubr.f32.mxu0 0.0
      %2892 = vmatmul.mubr.f32.gmra.mrb[0].mxu0 %v1119
      %v2893 = vpop.f32.mrb[0].mxu0
      %v2894 = vadd.f32 0.0, %v2893
      %v2895 = vpop.f32.mrb[0].mxu0
      %2896 = vmatprep.mubr.f32.mxu0 0.0
      %2897 = vmatmul.mubr.f32.gmra.mrb[0].mxu0 %v1120
      %v2898 = vpop.f32.mrb[0].mxu0
      %v2899 = vadd.f32 0.0, %v2898
      %v2900 = vpop.f32.mrb[0].mxu0
      %2901 = vmatprep.mubr.f32.mxu0 0.0
      %2902 = vmatmul.mubr.f32.gmra.mrb[0].mxu0 %v1121
      %v2903 = vpop.f32.mrb[0].mxu0
      %v2904 = vadd.f32 0.0, %v2903
      %v2905 = vpop.f32.mrb[0].mxu0
      %2906 = vmatprep.mubr.f32.mxu0 0.0
      %2907 = vmatmul.mubr.f32.gmra.mrb[0].mxu0 %v1122
      %v2908 = vpop.f32.mrb[0].mxu0
      %v2909 = vadd.f32 0.0, %v2908
      %v2910 = vpop.f32.mrb[0].mxu0
      %2911 = vmatprep.mubr.f32.mxu0 0.0
      %2912 = vmatmul.mubr.f32.gmra.mrb[0].mxu0 %v1123
      %v2913 = vpop.f32.mrb[0].mxu0
      %v2914 = vadd.f32 0.0, %v2913
      %v2915 = vpop.f32.mrb[0].mxu0
      %2916 = vmatprep.mubr.f32.mxu0 0.0
      %2917 = vmatmul.mubr.f32.gmra.mrb[0].mxu0 %v1124
      %v2918 = vpop.f32.mrb[0].mxu0
      %v2919 = vadd.f32 0.0, %v2918
      %v2920 = vpop.f32.mrb[0].mxu0
      %2921 = vmatprep.mubr.f32.mxu0 0.0
      %2922 = vmatmul.mubr.f32.gmra.mrb[0].mxu0 %v1125
      %v2923 = vpop.f32.mrb[0].mxu0
      %v2924 = vadd.f32 0.0, %v2923
      %v2925 = vpop.f32.mrb[0].mxu0
      %2926 = vdwg.mxu0
      %v2927 = vadd.f32 %v2557, %v2689
      %v2928 = vadd.f32 %v2558, %v2694
      %v2929 = vadd.f32 %v2559, %v2699
      %v2930 = vadd.f32 %v2560, %v2704
      %v2931 = vadd.f32 %v2561, %v2709
      %v2932 = vadd.f32 %v2562, %v2714
      %v2933 = vadd.f32 %v2563, %v2719
      %v2934 = vadd.f32 %v2564, %v2724
      %v2935 = vadd.f32 %v2565, %v2729
      %v2936 = vadd.f32 %v2566, %v2734
      %v2937 = vadd.f32 %v2567, %v2739
      %v2938 = vadd.f32 %v2568, %v2744
      %v2939 = vadd.f32 %v2569, %v2749
      %v2940 = vadd.f32 %v2570, %v2754
      %v2941 = vadd.f32 %v2571, %v2759
      %v2942 = vadd.f32 %v2572, %v2764
      %v2943 = vadd.f32 %v2573, %v2769
      %v2944 = vadd.f32 %v2574, %v2774
      %v2945 = vadd.f32 %v2575, %v2779
      %v2946 = vadd.f32 %v2576, %v2784
      %v2947 = vadd.f32 %v2577, %v2789
      %v2948 = vadd.f32 %v2578, %v2794
      %v2949 = vadd.f32 %v2579, %v2799
      %v2950 = vadd.f32 %v2580, %v2804
      %v2951 = vadd.f32 %v2581, %v2809
      %v2952 = vadd.f32 %v2582, %v2814
      %v2953 = vadd.f32 %v2583, %v2819
      %v2954 = vadd.f32 %v2584, %v2824
      %v2955 = vadd.f32 %v2585, %v2829
      %v2956 = vadd.f32 %v2586, %v2834
      %v2957 = vadd.f32 %v2587, %v2839
      %v2958 = vadd.f32 %v2588, %v2844
      %v2959 = vadd.f32 %v2589, %v2849
      %v2960 = vadd.f32 %v2590, %v2854
      %v2961 = vadd.f32 %v2591, %v2859
      %v2962 = vadd.f32 %v2592, %v2864
      %v2963 = vadd.f32 %v2593, %v2869
      %v2964 = vadd.f32 %v2594, %v2874
      %v2965 = vadd.f32 %v2595, %v2879
      %v2966 = vadd.f32 %v2596, %v2884
      %v2967 = vadd.f32 %v2597, %v2889
      %v2968 = vadd.f32 %v2598, %v2894
      %v2969 = vadd.f32 %v2599, %v2899
      %v2970 = vadd.f32 %v2600, %v2904
      %v2971 = vadd.f32 %v2601, %v2909
      %v2972 = vadd.f32 %v2602, %v2914
      %v2973 = vadd.f32 %v2603, %v2919
      %v2974 = vadd.f32 %v2604, %v2924
      %s2975 = scalar_lea.vmem %s2, 640
      %v2976 = vld [vmem:[%s2975] sm:$0xff]
      %v2977 = vld [vmem:[%s2975 + $0x8] sm:$0xff]
      %v2978 = vld [vmem:[%s2975 + $0x10] sm:$0xff]
      %v2979 = vld [vmem:[%s2975 + $0x18] sm:$0xff]
      %v2980 = vld [vmem:[%s2975 + $0x20] sm:$0xff]
      %v2981 = vld [vmem:[%s2975 + $0x28] sm:$0xff]
      %v2982 = vld [vmem:[%s2975 + $0x30] sm:$0xff]
      %v2983 = vld [vmem:[%s2975 + $0x38] sm:$0xff]
      %v2984 = vld [vmem:[%s2975 + $0x40] sm:$0xff]
      %v2985 = vld [vmem:[%s2975 + $0x48] sm:$0xff]
      %v2986 = vld [vmem:[%s2975 + $0x50] sm:$0xff]
      %v2987 = vld [vmem:[%s2975 + $0x58] sm:$0xff]
      %v2988 = vld [vmem:[%s2975 + $0x60] sm:$0xff]
      %v2989 = vld [vmem:[%s2975 + $0x68] sm:$0xff]
      %v2990 = vld [vmem:[%s2975 + $0x70] sm:$0xff]
      %v2991 = vld [vmem:[%s2975 + $0x78] sm:$0xff]
      %2992 = vmatprep.subr.mxu0 0.0
      %2993 = vmatpush1.msra.mxu0 %v2976
      %2994 = vmatprep.subr.mxu0 0.0
      %2995 = vmatpush1.msra.mxu0 %v2977
      %2996 = vmatprep.subr.mxu0 0.0
      %2997 = vmatpush1.msra.mxu0 %v2978
      %2998 = vmatprep.subr.mxu0 0.0
      %2999 = vmatpush1.msra.mxu0 %v2979
      %3000 = vmatprep.subr.mxu0 0.0
      %3001 = vmatpush1.msra.mxu0 %v2980
      %3002 = vmatprep.subr.mxu0 0.0
      %3003 = vmatpush1.msra.mxu0 %v2981
      %3004 = vmatprep.subr.mxu0 0.0
      %3005 = vmatpush1.msra.mxu0 %v2982
      %3006 = vmatprep.subr.mxu0 0.0
      %3007 = vmatpush1.msra.mxu0 %v2983
      %3008 = vmatprep.subr.mxu0 0.0
      %3009 = vmatpush1.msra.mxu0 %v2984
      %3010 = vmatprep.subr.mxu0 0.0
      %3011 = vmatpush1.msra.mxu0 %v2985
      %3012 = vmatprep.subr.mxu0 0.0
      %3013 = vmatpush1.msra.mxu0 %v2986
      %3014 = vmatprep.subr.mxu0 0.0
      %3015 = vmatpush1.msra.mxu0 %v2987
      %3016 = vmatprep.subr.mxu0 0.0
      %3017 = vmatpush1.msra.mxu0 %v2988
      %3018 = vmatprep.subr.mxu0 0.0
      %3019 = vmatpush1.msra.mxu0 %v2989
      %3020 = vmatprep.subr.mxu0 0.0
      %3021 = vmatpush1.msra.mxu0 %v2990
      %3022 = vmatprep.subr.mxu0 0.0
      %3023 = vmatpush1.msra.mxu0 %v2991
      %3024 = vmatprep.subr.mxu0 0.0
      %3025 = vmatpush1.msra.mxu0 0.0
      %3026 = vmatprep.subr.mxu0 0.0
      %3027 = vmatpush1.msra.mxu0 0.0
      %3028 = vmatprep.subr.mxu0 0.0
      %3029 = vmatpush1.msra.mxu0 0.0
      %3030 = vmatprep.subr.mxu0 0.0
      %3031 = vmatpush1.msra.mxu0 0.0
      %3032 = vmatprep.subr.mxu0 0.0
      %3033 = vmatpush1.msra.mxu0 0.0
      %3034 = vmatprep.subr.mxu0 0.0
      %3035 = vmatpush1.msra.mxu0 0.0
      %3036 = vmatprep.subr.mxu0 0.0
      %3037 = vmatpush1.msra.mxu0 0.0
      %3038 = vmatprep.subr.mxu0 0.0
      %3039 = vmatpush1.msra.mxu0 0.0
      %3040 = vmatprep.subr.mxu0 0.0
      %3041 = vmatpush1.msra.mxu0 0.0
      %3042 = vmatprep.subr.mxu0 0.0
      %3043 = vmatpush1.msra.mxu0 0.0
      %3044 = vmatprep.subr.mxu0 0.0
      %3045 = vmatpush1.msra.mxu0 0.0
      %3046 = vmatprep.subr.mxu0 0.0
      %3047 = vmatpush1.msra.mxu0 0.0
      %3048 = vmatprep.subr.mxu0 0.0
      %3049 = vmatpush1.msra.mxu0 0.0
      %3050 = vmatprep.subr.mxu0 0.0
      %3051 = vmatpush1.msra.mxu0 0.0
      %3052 = vmatprep.subr.mxu0 0.0
      %3053 = vmatpush1.msra.mxu0 0.0
      %3054 = vmatprep.subr.mxu0 0.0
      %3055 = vmatpush1.msra.mxu0 0.0
      %3056 = vmatprep.mubr.f32.mxu0 0.0
      %3057 = vmatmul.mubr.f32.gmra.mrb[0].mxu0 %v1126
      %v3058 = vpop.f32.mrb[0].mxu0
      %v3059 = vadd.f32 0.0, %v3058
      %v3060 = vpop.f32.mrb[0].mxu0
      %3061 = vmatprep.mubr.f32.mxu0 0.0
      %3062 = vmatmul.mubr.f32.gmra.mrb[0].mxu0 %v1127
      %v3063 = vpop.f32.mrb[0].mxu0
      %v3064 = vadd.f32 0.0, %v3063
      %v3065 = vpop.f32.mrb[0].mxu0
      %3066 = vmatprep.mubr.f32.mxu0 0.0
      %3067 = vmatmul.mubr.f32.gmra.mrb[0].mxu0 %v1128
      %v3068 = vpop.f32.mrb[0].mxu0
      %v3069 = vadd.f32 0.0, %v3068
      %v3070 = vpop.f32.mrb[0].mxu0
      %3071 = vmatprep.mubr.f32.mxu0 0.0
      %3072 = vmatmul.mubr.f32.gmra.mrb[0].mxu0 %v1129
      %v3073 = vpop.f32.mrb[0].mxu0
      %v3074 = vadd.f32 0.0, %v3073
      %v3075 = vpop.f32.mrb[0].mxu0
      %3076 = vmatprep.mubr.f32.mxu0 0.0
      %3077 = vmatmul.mubr.f32.gmra.mrb[0].mxu0 %v1130
      %v3078 = vpop.f32.mrb[0].mxu0
      %v3079 = vadd.f32 0.0, %v3078
      %v3080 = vpop.f32.mrb[0].mxu0
      %3081 = vmatprep.mubr.f32.mxu0 0.0
      %3082 = vmatmul.mubr.f32.gmra.mrb[0].mxu0 %v1131
      %v3083 = vpop.f32.mrb[0].mxu0
      %v3084 = vadd.f32 0.0, %v3083
      %v3085 = vpop.f32.mrb[0].mxu0
      %3086 = vmatprep.mubr.f32.mxu0 0.0
      %3087 = vmatmul.mubr.f32.gmra.mrb[0].mxu0 %v1132
      %v3088 = vpop.f32.mrb[0].mxu0
      %v3089 = vadd.f32 0.0, %v3088
      %v3090 = vpop.f32.mrb[0].mxu0
      %3091 = vmatprep.mubr.f32.mxu0 0.0
      %3092 = vmatmul.mubr.f32.gmra.mrb[0].mxu0 %v1133
      %v3093 = vpop.f32.mrb[0].mxu0
      %v3094 = vadd.f32 0.0, %v3093
      %v3095 = vpop.f32.mrb[0].mxu0
      %3096 = vmatprep.mubr.f32.mxu0 0.0
      %3097 = vmatmul.mubr.f32.gmra.mrb[0].mxu0 %v1134
      %v3098 = vpop.f32.mrb[0].mxu0
      %v3099 = vadd.f32 0.0, %v3098
      %v3100 = vpop.f32.mrb[0].mxu0
      %3101 = vmatprep.mubr.f32.mxu0 0.0
      %3102 = vmatmul.mubr.f32.gmra.mrb[0].mxu0 %v1135
      %v3103 = vpop.f32.mrb[0].mxu0
      %v3104 = vadd.f32 0.0, %v3103
      %v3105 = vpop.f32.mrb[0].mxu0
      %3106 = vmatprep.mubr.f32.mxu0 0.0
      %3107 = vmatmul.mubr.f32.gmra.mrb[0].mxu0 %v1136
      %v3108 = vpop.f32.mrb[0].mxu0
      %v3109 = vadd.f32 0.0, %v3108
      %v3110 = vpop.f32.mrb[0].mxu0
      %3111 = vmatprep.mubr.f32.mxu0 0.0
      %3112 = vmatmul.mubr.f32.gmra.mrb[0].mxu0 %v1137
      %v3113 = vpop.f32.mrb[0].mxu0
      %v3114 = vadd.f32 0.0, %v3113
      %v3115 = vpop.f32.mrb[0].mxu0
      %3116 = vmatprep.mubr.f32.mxu0 0.0
      %3117 = vmatmul.mubr.f32.gmra.mrb[0].mxu0 %v1138
      %v3118 = vpop.f32.mrb[0].mxu0
      %v3119 = vadd.f32 0.0, %v3118
      %v3120 = vpop.f32.mrb[0].mxu0
      %3121 = vmatprep.mubr.f32.mxu0 0.0
      %3122 = vmatmul.mubr.f32.gmra.mrb[0].mxu0 %v1139
      %v3123 = vpop.f32.mrb[0].mxu0
      %v3124 = vadd.f32 0.0, %v3123
      %v3125 = vpop.f32.mrb[0].mxu0
      %3126 = vmatprep.mubr.f32.mxu0 0.0
      %3127 = vmatmul.mubr.f32.gmra.mrb[0].mxu0 %v1140
      %v3128 = vpop.f32.mrb[0].mxu0
      %v3129 = vadd.f32 0.0, %v3128
      %v3130 = vpop.f32.mrb[0].mxu0
      %3131 = vmatprep.mubr.f32.mxu0 0.0
      %3132 = vmatmul.mubr.f32.gmra.mrb[0].mxu0 %v1141
      %v3133 = vpop.f32.mrb[0].mxu0
      %v3134 = vadd.f32 0.0, %v3133
      %v3135 = vpop.f32.mrb[0].mxu0
      %3136 = vmatprep.mubr.f32.mxu0 0.0
      %3137 = vmatmul.mubr.f32.gmra.mrb[0].mxu0 %v1142
      %v3138 = vpop.f32.mrb[0].mxu0
      %v3139 = vadd.f32 0.0, %v3138
      %v3140 = vpop.f32.mrb[0].mxu0
      %3141 = vmatprep.mubr.f32.mxu0 0.0
      %3142 = vmatmul.mubr.f32.gmra.mrb[0].mxu0 %v1143
      %v3143 = vpop.f32.mrb[0].mxu0
      %v3144 = vadd.f32 0.0, %v3143
      %v3145 = vpop.f32.mrb[0].mxu0
      %3146 = vmatprep.mubr.f32.mxu0 0.0
      %3147 = vmatmul.mubr.f32.gmra.mrb[0].mxu0 %v1144
      %v3148 = vpop.f32.mrb[0].mxu0
      %v3149 = vadd.f32 0.0, %v3148
      %v3150 = vpop.f32.mrb[0].mxu0
      %3151 = vmatprep.mubr.f32.mxu0 0.0
      %3152 = vmatmul.mubr.f32.gmra.mrb[0].mxu0 %v1145
      %v3153 = vpop.f32.mrb[0].mxu0
      %v3154 = vadd.f32 0.0, %v3153
      %v3155 = vpop.f32.mrb[0].mxu0
      %3156 = vmatprep.mubr.f32.mxu0 0.0
      %3157 = vmatmul.mubr.f32.gmra.mrb[0].mxu0 %v1146
      %v3158 = vpop.f32.mrb[0].mxu0
      %v3159 = vadd.f32 0.0, %v3158
      %v3160 = vpop.f32.mrb[0].mxu0
      %3161 = vmatprep.mubr.f32.mxu0 0.0
      %3162 = vmatmul.mubr.f32.gmra.mrb[0].mxu0 %v1147
      %v3163 = vpop.f32.mrb[0].mxu0
      %v3164 = vadd.f32 0.0, %v3163
      %v3165 = vpop.f32.mrb[0].mxu0
      %3166 = vmatprep.mubr.f32.mxu0 0.0
      %3167 = vmatmul.mubr.f32.gmra.mrb[0].mxu0 %v1148
      %v3168 = vpop.f32.mrb[0].mxu0
      %v3169 = vadd.f32 0.0, %v3168
      %v3170 = vpop.f32.mrb[0].mxu0
      %3171 = vmatprep.mubr.f32.mxu0 0.0
      %3172 = vmatmul.mubr.f32.gmra.mrb[0].mxu0 %v1149
      %v3173 = vpop.f32.mrb[0].mxu0
      %v3174 = vadd.f32 0.0, %v3173
      %v3175 = vpop.f32.mrb[0].mxu0
      %3176 = vmatprep.mubr.f32.mxu0 0.0
      %3177 = vmatmul.mubr.f32.gmra.mrb[0].mxu0 %v1150
      %v3178 = vpop.f32.mrb[0].mxu0
      %v3179 = vadd.f32 0.0, %v3178
      %v3180 = vpop.f32.mrb[0].mxu0
      %3181 = vmatprep.mubr.f32.mxu0 0.0
      %3182 = vmatmul.mubr.f32.gmra.mrb[0].mxu0 %v1151
      %v3183 = vpop.f32.mrb[0].mxu0
      %v3184 = vadd.f32 0.0, %v3183
      %v3185 = vpop.f32.mrb[0].mxu0
      %3186 = vmatprep.mubr.f32.mxu0 0.0
      %3187 = vmatmul.mubr.f32.gmra.mrb[0].mxu0 %v1152
      %v3188 = vpop.f32.mrb[0].mxu0
      %v3189 = vadd.f32 0.0, %v3188
      %v3190 = vpop.f32.mrb[0].mxu0
      %3191 = vmatprep.mubr.f32.mxu0 0.0
      %3192 = vmatmul.mubr.f32.gmra.mrb[0].mxu0 %v1153
      %v3193 = vpop.f32.mrb[0].mxu0
      %v3194 = vadd.f32 0.0, %v3193
      %v3195 = vpop.f32.mrb[0].mxu0
      %3196 = vmatprep.mubr.f32.mxu0 0.0
      %3197 = vmatmul.mubr.f32.gmra.mrb[0].mxu0 %v1154
      %v3198 = vpop.f32.mrb[0].mxu0
      %v3199 = vadd.f32 0.0, %v3198
      %v3200 = vpop.f32.mrb[0].mxu0
      %3201 = vmatprep.mubr.f32.mxu0 0.0
      %3202 = vmatmul.mubr.f32.gmra.mrb[0].mxu0 %v1155
      %v3203 = vpop.f32.mrb[0].mxu0
      %v3204 = vadd.f32 0.0, %v3203
      %v3205 = vpop.f32.mrb[0].mxu0
      %3206 = vmatprep.mubr.f32.mxu0 0.0
      %3207 = vmatmul.mubr.f32.gmra.mrb[0].mxu0 %v1156
      %v3208 = vpop.f32.mrb[0].mxu0
      %v3209 = vadd.f32 0.0, %v3208
      %v3210 = vpop.f32.mrb[0].mxu0
      %3211 = vmatprep.mubr.f32.mxu0 0.0
      %3212 = vmatmul.mubr.f32.gmra.mrb[0].mxu0 %v1157
      %v3213 = vpop.f32.mrb[0].mxu0
      %v3214 = vadd.f32 0.0, %v3213
      %v3215 = vpop.f32.mrb[0].mxu0
      %3216 = vmatprep.mubr.f32.mxu0 0.0
      %3217 = vmatmul.mubr.f32.gmra.mrb[0].mxu0 %v1158
      %v3218 = vpop.f32.mrb[0].mxu0
      %v3219 = vadd.f32 0.0, %v3218
      %v3220 = vpop.f32.mrb[0].mxu0
      %3221 = vmatprep.mubr.f32.mxu0 0.0
      %3222 = vmatmul.mubr.f32.gmra.mrb[0].mxu0 %v1159
      %v3223 = vpop.f32.mrb[0].mxu0
      %v3224 = vadd.f32 0.0, %v3223
      %v3225 = vpop.f32.mrb[0].mxu0
      %3226 = vmatprep.mubr.f32.mxu0 0.0
      %3227 = vmatmul.mubr.f32.gmra.mrb[0].mxu0 %v1160
      %v3228 = vpop.f32.mrb[0].mxu0
      %v3229 = vadd.f32 0.0, %v3228
      %v3230 = vpop.f32.mrb[0].mxu0
      %3231 = vmatprep.mubr.f32.mxu0 0.0
      %3232 = vmatmul.mubr.f32.gmra.mrb[0].mxu0 %v1161
      %v3233 = vpop.f32.mrb[0].mxu0
      %v3234 = vadd.f32 0.0, %v3233
      %v3235 = vpop.f32.mrb[0].mxu0
      %3236 = vmatprep.mubr.f32.mxu0 0.0
      %3237 = vmatmul.mubr.f32.gmra.mrb[0].mxu0 %v1162
      %v3238 = vpop.f32.mrb[0].mxu0
      %v3239 = vadd.f32 0.0, %v3238
      %v3240 = vpop.f32.mrb[0].mxu0
      %3241 = vmatprep.mubr.f32.mxu0 0.0
      %3242 = vmatmul.mubr.f32.gmra.mrb[0].mxu0 %v1163
      %v3243 = vpop.f32.mrb[0].mxu0
      %v3244 = vadd.f32 0.0, %v3243
      %v3245 = vpop.f32.mrb[0].mxu0
      %3246 = vmatprep.mubr.f32.mxu0 0.0
      %3247 = vmatmul.mubr.f32.gmra.mrb[0].mxu0 %v1164
      %v3248 = vpop.f32.mrb[0].mxu0
      %v3249 = vadd.f32 0.0, %v3248
      %v3250 = vpop.f32.mrb[0].mxu0
      %3251 = vmatprep.mubr.f32.mxu0 0.0
      %3252 = vmatmul.mubr.f32.gmra.mrb[0].mxu0 %v1165
      %v3253 = vpop.f32.mrb[0].mxu0
      %v3254 = vadd.f32 0.0, %v3253
      %v3255 = vpop.f32.mrb[0].mxu0
      %3256 = vmatprep.mubr.f32.mxu0 0.0
      %3257 = vmatmul.mubr.f32.gmra.mrb[0].mxu0 %v1166
      %v3258 = vpop.f32.mrb[0].mxu0
      %v3259 = vadd.f32 0.0, %v3258
      %v3260 = vpop.f32.mrb[0].mxu0
      %3261 = vmatprep.mubr.f32.mxu0 0.0
      %3262 = vmatmul.mubr.f32.gmra.mrb[0].mxu0 %v1167
      %v3263 = vpop.f32.mrb[0].mxu0
      %v3264 = vadd.f32 0.0, %v3263
      %v3265 = vpop.f32.mrb[0].mxu0
      %3266 = vmatprep.mubr.f32.mxu0 0.0
      %3267 = vmatmul.mubr.f32.gmra.mrb[0].mxu0 %v1168
      %v3268 = vpop.f32.mrb[0].mxu0
      %v3269 = vadd.f32 0.0, %v3268
      %v3270 = vpop.f32.mrb[0].mxu0
      %3271 = vmatprep.mubr.f32.mxu0 0.0
      %3272 = vmatmul.mubr.f32.gmra.mrb[0].mxu0 %v1169
      %v3273 = vpop.f32.mrb[0].mxu0
      %v3274 = vadd.f32 0.0, %v3273
      %v3275 = vpop.f32.mrb[0].mxu0
      %3276 = vmatprep.mubr.f32.mxu0 0.0
      %3277 = vmatmul.mubr.f32.gmra.mrb[0].mxu0 %v1170
      %v3278 = vpop.f32.mrb[0].mxu0
      %v3279 = vadd.f32 0.0, %v3278
      %v3280 = vpop.f32.mrb[0].mxu0
      %3281 = vmatprep.mubr.f32.mxu0 0.0
      %3282 = vmatmul.mubr.f32.gmra.mrb[0].mxu0 %v1171
      %v3283 = vpop.f32.mrb[0].mxu0
      %v3284 = vadd.f32 0.0, %v3283
      %v3285 = vpop.f32.mrb[0].mxu0
      %3286 = vmatprep.mubr.f32.mxu0 0.0
      %3287 = vmatmul.mubr.f32.gmra.mrb[0].mxu0 %v1172
      %v3288 = vpop.f32.mrb[0].mxu0
      %v3289 = vadd.f32 0.0, %v3288
      %v3290 = vpop.f32.mrb[0].mxu0
      %3291 = vmatprep.mubr.f32.mxu0 0.0
      %3292 = vmatmul.mubr.f32.gmra.mrb[0].mxu0 %v1173
      %v3293 = vpop.f32.mrb[0].mxu0
      %v3294 = vadd.f32 0.0, %v3293
      %v3295 = vpop.f32.mrb[0].mxu0
      %3296 = vdwg.mxu0
      %v3297 = vadd.f32 %v2927, %v3059
      %v3298 = vadd.f32 %v2928, %v3064
      %v3299 = vadd.f32 %v2929, %v3069
      %v3300 = vadd.f32 %v2930, %v3074
      %v3301 = vadd.f32 %v2931, %v3079
      %v3302 = vadd.f32 %v2932, %v3084
      %v3303 = vadd.f32 %v2933, %v3089
      %v3304 = vadd.f32 %v2934, %v3094
      %v3305 = vadd.f32 %v2935, %v3099
      %v3306 = vadd.f32 %v2936, %v3104
      %v3307 = vadd.f32 %v2937, %v3109
      %v3308 = vadd.f32 %v2938, %v3114
      %v3309 = vadd.f32 %v2939, %v3119
      %v3310 = vadd.f32 %v2940, %v3124
      %v3311 = vadd.f32 %v2941, %v3129
      %v3312 = vadd.f32 %v2942, %v3134
      %v3313 = vadd.f32 %v2943, %v3139
      %v3314 = vadd.f32 %v2944, %v3144
      %v3315 = vadd.f32 %v2945, %v3149
      %v3316 = vadd.f32 %v2946, %v3154
      %v3317 = vadd.f32 %v2947, %v3159
      %v3318 = vadd.f32 %v2948, %v3164
      %v3319 = vadd.f32 %v2949, %v3169
      %v3320 = vadd.f32 %v2950, %v3174
      %v3321 = vadd.f32 %v2951, %v3179
      %v3322 = vadd.f32 %v2952, %v3184
      %v3323 = vadd.f32 %v2953, %v3189
      %v3324 = vadd.f32 %v2954, %v3194
      %v3325 = vadd.f32 %v2955, %v3199
      %v3326 = vadd.f32 %v2956, %v3204
      %v3327 = vadd.f32 %v2957, %v3209
      %v3328 = vadd.f32 %v2958, %v3214
      %v3329 = vadd.f32 %v2959, %v3219
      %v3330 = vadd.f32 %v2960, %v3224
      %v3331 = vadd.f32 %v2961, %v3229
      %v3332 = vadd.f32 %v2962, %v3234
      %v3333 = vadd.f32 %v2963, %v3239
      %v3334 = vadd.f32 %v2964, %v3244
      %v3335 = vadd.f32 %v2965, %v3249
      %v3336 = vadd.f32 %v2966, %v3254
      %v3337 = vadd.f32 %v2967, %v3259
      %v3338 = vadd.f32 %v2968, %v3264
      %v3339 = vadd.f32 %v2969, %v3269
      %v3340 = vadd.f32 %v2970, %v3274
      %v3341 = vadd.f32 %v2971, %v3279
      %v3342 = vadd.f32 %v2972, %v3284
      %v3343 = vadd.f32 %v2973, %v3289
      %v3344 = vadd.f32 %v2974, %v3294
      %s3345 = scalar_lea.vmem %s2, 768
      %v3346 = vld [vmem:[%s3345] sm:$0xff]
      %v3347 = vld [vmem:[%s3345 + $0x8] sm:$0xff]
      %v3348 = vld [vmem:[%s3345 + $0x10] sm:$0xff]
      %v3349 = vld [vmem:[%s3345 + $0x18] sm:$0xff]
      %v3350 = vld [vmem:[%s3345 + $0x20] sm:$0xff]
      %v3351 = vld [vmem:[%s3345 + $0x28] sm:$0xff]
      %v3352 = vld [vmem:[%s3345 + $0x30] sm:$0xff]
      %v3353 = vld [vmem:[%s3345 + $0x38] sm:$0xff]
      %v3354 = vld [vmem:[%s3345 + $0x40] sm:$0xff]
      %v3355 = vld [vmem:[%s3345 + $0x48] sm:$0xff]
      %v3356 = vld [vmem:[%s3345 + $0x50] sm:$0xff]
      %v3357 = vld [vmem:[%s3345 + $0x58] sm:$0xff]
      %v3358 = vld [vmem:[%s3345 + $0x60] sm:$0xff]
      %v3359 = vld [vmem:[%s3345 + $0x68] sm:$0xff]
      %v3360 = vld [vmem:[%s3345 + $0x70] sm:$0xff]
      %v3361 = vld [vmem:[%s3345 + $0x78] sm:$0xff]
      %3362 = vmatprep.subr.mxu0 0.0
      %3363 = vmatpush1.msra.mxu0 %v3346
      %3364 = vmatprep.subr.mxu0 0.0
      %3365 = vmatpush1.msra.mxu0 %v3347
      %3366 = vmatprep.subr.mxu0 0.0
      %3367 = vmatpush1.msra.mxu0 %v3348
      %3368 = vmatprep.subr.mxu0 0.0
      %3369 = vmatpush1.msra.mxu0 %v3349
      %3370 = vmatprep.subr.mxu0 0.0
      %3371 = vmatpush1.msra.mxu0 %v3350
      %3372 = vmatprep.subr.mxu0 0.0
      %3373 = vmatpush1.msra.mxu0 %v3351
      %3374 = vmatprep.subr.mxu0 0.0
      %3375 = vmatpush1.msra.mxu0 %v3352
      %3376 = vmatprep.subr.mxu0 0.0
      %3377 = vmatpush1.msra.mxu0 %v3353
      %3378 = vmatprep.subr.mxu0 0.0
      %3379 = vmatpush1.msra.mxu0 %v3354
      %3380 = vmatprep.subr.mxu0 0.0
      %3381 = vmatpush1.msra.mxu0 %v3355
      %3382 = vmatprep.subr.mxu0 0.0
      %3383 = vmatpush1.msra.mxu0 %v3356
      %3384 = vmatprep.subr.mxu0 0.0
      %3385 = vmatpush1.msra.mxu0 %v3357
      %3386 = vmatprep.subr.mxu0 0.0
      %3387 = vmatpush1.msra.mxu0 %v3358
      %3388 = vmatprep.subr.mxu0 0.0
      %3389 = vmatpush1.msra.mxu0 %v3359
      %3390 = vmatprep.subr.mxu0 0.0
      %3391 = vmatpush1.msra.mxu0 %v3360
      %3392 = vmatprep.subr.mxu0 0.0
      %3393 = vmatpush1.msra.mxu0 %v3361
      %3394 = vmatprep.subr.mxu0 0.0
      %3395 = vmatpush1.msra.mxu0 0.0
      %3396 = vmatprep.subr.mxu0 0.0
      %3397 = vmatpush1.msra.mxu0 0.0
      %3398 = vmatprep.subr.mxu0 0.0
      %3399 = vmatpush1.msra.mxu0 0.0
      %3400 = vmatprep.subr.mxu0 0.0
      %3401 = vmatpush1.msra.mxu0 0.0
      %3402 = vmatprep.subr.mxu0 0.0
      %3403 = vmatpush1.msra.mxu0 0.0
      %3404 = vmatprep.subr.mxu0 0.0
      %3405 = vmatpush1.msra.mxu0 0.0
      %3406 = vmatprep.subr.mxu0 0.0
      %3407 = vmatpush1.msra.mxu0 0.0
      %3408 = vmatprep.subr.mxu0 0.0
      %3409 = vmatpush1.msra.mxu0 0.0
      %3410 = vmatprep.subr.mxu0 0.0
      %3411 = vmatpush1.msra.mxu0 0.0
      %3412 = vmatprep.subr.mxu0 0.0
      %3413 = vmatpush1.msra.mxu0 0.0
      %3414 = vmatprep.subr.mxu0 0.0
      %3415 = vmatpush1.msra.mxu0 0.0
      %3416 = vmatprep.subr.mxu0 0.0
      %3417 = vmatpush1.msra.mxu0 0.0
      %3418 = vmatprep.subr.mxu0 0.0
      %3419 = vmatpush1.msra.mxu0 0.0
      %3420 = vmatprep.subr.mxu0 0.0
      %3421 = vmatpush1.msra.mxu0 0.0
      %3422 = vmatprep.subr.mxu0 0.0
      %3423 = vmatpush1.msra.mxu0 0.0
      %3424 = vmatprep.subr.mxu0 0.0
      %3425 = vmatpush1.msra.mxu0 0.0
      %3426 = vmatprep.mubr.f32.mxu0 0.0
      %3427 = vmatmul.mubr.f32.gmra.mrb[0].mxu0 %v1174
      %v3428 = vpop.f32.mrb[0].mxu0
      %v3429 = vadd.f32 0.0, %v3428
      %v3430 = vpop.f32.mrb[0].mxu0
      %3431 = vmatprep.mubr.f32.mxu0 0.0
      %3432 = vmatmul.mubr.f32.gmra.mrb[0].mxu0 %v1175
      %v3433 = vpop.f32.mrb[0].mxu0
      %v3434 = vadd.f32 0.0, %v3433
      %v3435 = vpop.f32.mrb[0].mxu0
      %3436 = vmatprep.mubr.f32.mxu0 0.0
      %3437 = vmatmul.mubr.f32.gmra.mrb[0].mxu0 %v1176
      %v3438 = vpop.f32.mrb[0].mxu0
      %v3439 = vadd.f32 0.0, %v3438
      %v3440 = vpop.f32.mrb[0].mxu0
      %3441 = vmatprep.mubr.f32.mxu0 0.0
      %3442 = vmatmul.mubr.f32.gmra.mrb[0].mxu0 %v1177
      %v3443 = vpop.f32.mrb[0].mxu0
      %v3444 = vadd.f32 0.0, %v3443
      %v3445 = vpop.f32.mrb[0].mxu0
      %3446 = vmatprep.mubr.f32.mxu0 0.0
      %3447 = vmatmul.mubr.f32.gmra.mrb[0].mxu0 %v1178
      %v3448 = vpop.f32.mrb[0].mxu0
      %v3449 = vadd.f32 0.0, %v3448
      %v3450 = vpop.f32.mrb[0].mxu0
      %3451 = vmatprep.mubr.f32.mxu0 0.0
      %3452 = vmatmul.mubr.f32.gmra.mrb[0].mxu0 %v1179
      %v3453 = vpop.f32.mrb[0].mxu0
      %v3454 = vadd.f32 0.0, %v3453
      %v3455 = vpop.f32.mrb[0].mxu0
      %3456 = vmatprep.mubr.f32.mxu0 0.0
      %3457 = vmatmul.mubr.f32.gmra.mrb[0].mxu0 %v1180
      %v3458 = vpop.f32.mrb[0].mxu0
      %v3459 = vadd.f32 0.0, %v3458
      %v3460 = vpop.f32.mrb[0].mxu0
      %3461 = vmatprep.mubr.f32.mxu0 0.0
      %3462 = vmatmul.mubr.f32.gmra.mrb[0].mxu0 %v1181
      %v3463 = vpop.f32.mrb[0].mxu0
      %v3464 = vadd.f32 0.0, %v3463
      %v3465 = vpop.f32.mrb[0].mxu0
      %3466 = vmatprep.mubr.f32.mxu0 0.0
      %3467 = vmatmul.mubr.f32.gmra.mrb[0].mxu0 %v1182
      %v3468 = vpop.f32.mrb[0].mxu0
      %v3469 = vadd.f32 0.0, %v3468
      %v3470 = vpop.f32.mrb[0].mxu0
      %3471 = vmatprep.mubr.f32.mxu0 0.0
      %3472 = vmatmul.mubr.f32.gmra.mrb[0].mxu0 %v1183
      %v3473 = vpop.f32.mrb[0].mxu0
      %v3474 = vadd.f32 0.0, %v3473
      %v3475 = vpop.f32.mrb[0].mxu0
      %3476 = vmatprep.mubr.f32.mxu0 0.0
      %3477 = vmatmul.mubr.f32.gmra.mrb[0].mxu0 %v1184
      %v3478 = vpop.f32.mrb[0].mxu0
      %v3479 = vadd.f32 0.0, %v3478
      %v3480 = vpop.f32.mrb[0].mxu0
      %3481 = vmatprep.mubr.f32.mxu0 0.0
      %3482 = vmatmul.mubr.f32.gmra.mrb[0].mxu0 %v1185
      %v3483 = vpop.f32.mrb[0].mxu0
      %v3484 = vadd.f32 0.0, %v3483
      %v3485 = vpop.f32.mrb[0].mxu0
      %3486 = vmatprep.mubr.f32.mxu0 0.0
      %3487 = vmatmul.mubr.f32.gmra.mrb[0].mxu0 %v1186
      %v3488 = vpop.f32.mrb[0].mxu0
      %v3489 = vadd.f32 0.0, %v3488
      %v3490 = vpop.f32.mrb[0].mxu0
      %3491 = vmatprep.mubr.f32.mxu0 0.0
      %3492 = vmatmul.mubr.f32.gmra.mrb[0].mxu0 %v1187
      %v3493 = vpop.f32.mrb[0].mxu0
      %v3494 = vadd.f32 0.0, %v3493
      %v3495 = vpop.f32.mrb[0].mxu0
      %3496 = vmatprep.mubr.f32.mxu0 0.0
      %3497 = vmatmul.mubr.f32.gmra.mrb[0].mxu0 %v1188
      %v3498 = vpop.f32.mrb[0].mxu0
      %v3499 = vadd.f32 0.0, %v3498
      %v3500 = vpop.f32.mrb[0].mxu0
      %3501 = vmatprep.mubr.f32.mxu0 0.0
      %3502 = vmatmul.mubr.f32.gmra.mrb[0].mxu0 %v1189
      %v3503 = vpop.f32.mrb[0].mxu0
      %v3504 = vadd.f32 0.0, %v3503
      %v3505 = vpop.f32.mrb[0].mxu0
      %3506 = vmatprep.mubr.f32.mxu0 0.0
      %3507 = vmatmul.mubr.f32.gmra.mrb[0].mxu0 %v1190
      %v3508 = vpop.f32.mrb[0].mxu0
      %v3509 = vadd.f32 0.0, %v3508
      %v3510 = vpop.f32.mrb[0].mxu0
      %3511 = vmatprep.mubr.f32.mxu0 0.0
      %3512 = vmatmul.mubr.f32.gmra.mrb[0].mxu0 %v1191
      %v3513 = vpop.f32.mrb[0].mxu0
      %v3514 = vadd.f32 0.0, %v3513
      %v3515 = vpop.f32.mrb[0].mxu0
      %3516 = vmatprep.mubr.f32.mxu0 0.0
      %3517 = vmatmul.mubr.f32.gmra.mrb[0].mxu0 %v1192
      %v3518 = vpop.f32.mrb[0].mxu0
      %v3519 = vadd.f32 0.0, %v3518
      %v3520 = vpop.f32.mrb[0].mxu0
      %3521 = vmatprep.mubr.f32.mxu0 0.0
      %3522 = vmatmul.mubr.f32.gmra.mrb[0].mxu0 %v1193
      %v3523 = vpop.f32.mrb[0].mxu0
      %v3524 = vadd.f32 0.0, %v3523
      %v3525 = vpop.f32.mrb[0].mxu0
      %3526 = vmatprep.mubr.f32.mxu0 0.0
      %3527 = vmatmul.mubr.f32.gmra.mrb[0].mxu0 %v1194
      %v3528 = vpop.f32.mrb[0].mxu0
      %v3529 = vadd.f32 0.0, %v3528
      %v3530 = vpop.f32.mrb[0].mxu0
      %3531 = vmatprep.mubr.f32.mxu0 0.0
      %3532 = vmatmul.mubr.f32.gmra.mrb[0].mxu0 %v1195
      %v3533 = vpop.f32.mrb[0].mxu0
      %v3534 = vadd.f32 0.0, %v3533
      %v3535 = vpop.f32.mrb[0].mxu0
      %3536 = vmatprep.mubr.f32.mxu0 0.0
      %3537 = vmatmul.mubr.f32.gmra.mrb[0].mxu0 %v1196
      %v3538 = vpop.f32.mrb[0].mxu0
      %v3539 = vadd.f32 0.0, %v3538
      %v3540 = vpop.f32.mrb[0].mxu0
      %3541 = vmatprep.mubr.f32.mxu0 0.0
      %3542 = vmatmul.mubr.f32.gmra.mrb[0].mxu0 %v1197
      %v3543 = vpop.f32.mrb[0].mxu0
      %v3544 = vadd.f32 0.0, %v3543
      %v3545 = vpop.f32.mrb[0].mxu0
      %3546 = vmatprep.mubr.f32.mxu0 0.0
      %3547 = vmatmul.mubr.f32.gmra.mrb[0].mxu0 %v1198
      %v3548 = vpop.f32.mrb[0].mxu0
      %v3549 = vadd.f32 0.0, %v3548
      %v3550 = vpop.f32.mrb[0].mxu0
      %3551 = vmatprep.mubr.f32.mxu0 0.0
      %3552 = vmatmul.mubr.f32.gmra.mrb[0].mxu0 %v1199
      %v3553 = vpop.f32.mrb[0].mxu0
      %v3554 = vadd.f32 0.0, %v3553
      %v3555 = vpop.f32.mrb[0].mxu0
      %3556 = vmatprep.mubr.f32.mxu0 0.0
      %3557 = vmatmul.mubr.f32.gmra.mrb[0].mxu0 %v1200
      %v3558 = vpop.f32.mrb[0].mxu0
      %v3559 = vadd.f32 0.0, %v3558
      %v3560 = vpop.f32.mrb[0].mxu0
      %3561 = vmatprep.mubr.f32.mxu0 0.0
      %3562 = vmatmul.mubr.f32.gmra.mrb[0].mxu0 %v1201
      %v3563 = vpop.f32.mrb[0].mxu0
      %v3564 = vadd.f32 0.0, %v3563
      %v3565 = vpop.f32.mrb[0].mxu0
      %3566 = vmatprep.mubr.f32.mxu0 0.0
      %3567 = vmatmul.mubr.f32.gmra.mrb[0].mxu0 %v1202
      %v3568 = vpop.f32.mrb[0].mxu0
      %v3569 = vadd.f32 0.0, %v3568
      %v3570 = vpop.f32.mrb[0].mxu0
      %3571 = vmatprep.mubr.f32.mxu0 0.0
      %3572 = vmatmul.mubr.f32.gmra.mrb[0].mxu0 %v1203
      %v3573 = vpop.f32.mrb[0].mxu0
      %v3574 = vadd.f32 0.0, %v3573
      %v3575 = vpop.f32.mrb[0].mxu0
      %3576 = vmatprep.mubr.f32.mxu0 0.0
      %3577 = vmatmul.mubr.f32.gmra.mrb[0].mxu0 %v1204
      %v3578 = vpop.f32.mrb[0].mxu0
      %v3579 = vadd.f32 0.0, %v3578
      %v3580 = vpop.f32.mrb[0].mxu0
      %3581 = vmatprep.mubr.f32.mxu0 0.0
      %3582 = vmatmul.mubr.f32.gmra.mrb[0].mxu0 %v1205
      %v3583 = vpop.f32.mrb[0].mxu0
      %v3584 = vadd.f32 0.0, %v3583
      %v3585 = vpop.f32.mrb[0].mxu0
      %3586 = vmatprep.mubr.f32.mxu0 0.0
      %3587 = vmatmul.mubr.f32.gmra.mrb[0].mxu0 %v1206
      %v3588 = vpop.f32.mrb[0].mxu0
      %v3589 = vadd.f32 0.0, %v3588
      %v3590 = vpop.f32.mrb[0].mxu0
      %3591 = vmatprep.mubr.f32.mxu0 0.0
      %3592 = vmatmul.mubr.f32.gmra.mrb[0].mxu0 %v1207
      %v3593 = vpop.f32.mrb[0].mxu0
      %v3594 = vadd.f32 0.0, %v3593
      %v3595 = vpop.f32.mrb[0].mxu0
      %3596 = vmatprep.mubr.f32.mxu0 0.0
      %3597 = vmatmul.mubr.f32.gmra.mrb[0].mxu0 %v1208
      %v3598 = vpop.f32.mrb[0].mxu0
      %v3599 = vadd.f32 0.0, %v3598
      %v3600 = vpop.f32.mrb[0].mxu0
      %3601 = vmatprep.mubr.f32.mxu0 0.0
      %3602 = vmatmul.mubr.f32.gmra.mrb[0].mxu0 %v1209
      %v3603 = vpop.f32.mrb[0].mxu0
      %v3604 = vadd.f32 0.0, %v3603
      %v3605 = vpop.f32.mrb[0].mxu0
      %3606 = vmatprep.mubr.f32.mxu0 0.0
      %3607 = vmatmul.mubr.f32.gmra.mrb[0].mxu0 %v1210
      %v3608 = vpop.f32.mrb[0].mxu0
      %v3609 = vadd.f32 0.0, %v3608
      %v3610 = vpop.f32.mrb[0].mxu0
      %3611 = vmatprep.mubr.f32.mxu0 0.0
      %3612 = vmatmul.mubr.f32.gmra.mrb[0].mxu0 %v1211
      %v3613 = vpop.f32.mrb[0].mxu0
      %v3614 = vadd.f32 0.0, %v3613
      %v3615 = vpop.f32.mrb[0].mxu0
      %3616 = vmatprep.mubr.f32.mxu0 0.0
      %3617 = vmatmul.mubr.f32.gmra.mrb[0].mxu0 %v1212
      %v3618 = vpop.f32.mrb[0].mxu0
      %v3619 = vadd.f32 0.0, %v3618
      %v3620 = vpop.f32.mrb[0].mxu0
      %3621 = vmatprep.mubr.f32.mxu0 0.0
      %3622 = vmatmul.mubr.f32.gmra.mrb[0].mxu0 %v1213
      %v3623 = vpop.f32.mrb[0].mxu0
      %v3624 = vadd.f32 0.0, %v3623
      %v3625 = vpop.f32.mrb[0].mxu0
      %3626 = vmatprep.mubr.f32.mxu0 0.0
      %3627 = vmatmul.mubr.f32.gmra.mrb[0].mxu0 %v1214
      %v3628 = vpop.f32.mrb[0].mxu0
      %v3629 = vadd.f32 0.0, %v3628
      %v3630 = vpop.f32.mrb[0].mxu0
      %3631 = vmatprep.mubr.f32.mxu0 0.0
      %3632 = vmatmul.mubr.f32.gmra.mrb[0].mxu0 %v1215
      %v3633 = vpop.f32.mrb[0].mxu0
      %v3634 = vadd.f32 0.0, %v3633
      %v3635 = vpop.f32.mrb[0].mxu0
      %3636 = vmatprep.mubr.f32.mxu0 0.0
      %3637 = vmatmul.mubr.f32.gmra.mrb[0].mxu0 %v1216
      %v3638 = vpop.f32.mrb[0].mxu0
      %v3639 = vadd.f32 0.0, %v3638
      %v3640 = vpop.f32.mrb[0].mxu0
      %3641 = vmatprep.mubr.f32.mxu0 0.0
      %3642 = vmatmul.mubr.f32.gmra.mrb[0].mxu0 %v1217
      %v3643 = vpop.f32.mrb[0].mxu0
      %v3644 = vadd.f32 0.0, %v3643
      %v3645 = vpop.f32.mrb[0].mxu0
      %3646 = vmatprep.mubr.f32.mxu0 0.0
      %3647 = vmatmul.mubr.f32.gmra.mrb[0].mxu0 %v1218
      %v3648 = vpop.f32.mrb[0].mxu0
      %v3649 = vadd.f32 0.0, %v3648
      %v3650 = vpop.f32.mrb[0].mxu0
      %3651 = vmatprep.mubr.f32.mxu0 0.0
      %3652 = vmatmul.mubr.f32.gmra.mrb[0].mxu0 %v1219
      %v3653 = vpop.f32.mrb[0].mxu0
      %v3654 = vadd.f32 0.0, %v3653
      %v3655 = vpop.f32.mrb[0].mxu0
      %3656 = vmatprep.mubr.f32.mxu0 0.0
      %3657 = vmatmul.mubr.f32.gmra.mrb[0].mxu0 %v1220
      %v3658 = vpop.f32.mrb[0].mxu0
      %v3659 = vadd.f32 0.0, %v3658
      %v3660 = vpop.f32.mrb[0].mxu0
      %3661 = vmatprep.mubr.f32.mxu0 0.0
      %3662 = vmatmul.mubr.f32.gmra.mrb[0].mxu0 %v1221
      %v3663 = vpop.f32.mrb[0].mxu0
      %v3664 = vadd.f32 0.0, %v3663
      %v3665 = vpop.f32.mrb[0].mxu0
      %3666 = vdwg.mxu0
      %v3667 = vadd.f32 %v3297, %v3429
      %v3668 = vadd.f32 %v3298, %v3434
      %v3669 = vadd.f32 %v3299, %v3439
      %v3670 = vadd.f32 %v3300, %v3444
      %v3671 = vadd.f32 %v3301, %v3449
      %v3672 = vadd.f32 %v3302, %v3454
      %v3673 = vadd.f32 %v3303, %v3459
      %v3674 = vadd.f32 %v3304, %v3464
      %v3675 = vadd.f32 %v3305, %v3469
      %v3676 = vadd.f32 %v3306, %v3474
      %v3677 = vadd.f32 %v3307, %v3479
      %v3678 = vadd.f32 %v3308, %v3484
      %v3679 = vadd.f32 %v3309, %v3489
      %v3680 = vadd.f32 %v3310, %v3494
      %v3681 = vadd.f32 %v3311, %v3499
      %v3682 = vadd.f32 %v3312, %v3504
      %v3683 = vadd.f32 %v3313, %v3509
      %v3684 = vadd.f32 %v3314, %v3514
      %v3685 = vadd.f32 %v3315, %v3519
      %v3686 = vadd.f32 %v3316, %v3524
      %v3687 = vadd.f32 %v3317, %v3529
      %v3688 = vadd.f32 %v3318, %v3534
      %v3689 = vadd.f32 %v3319, %v3539
      %v3690 = vadd.f32 %v3320, %v3544
      %v3691 = vadd.f32 %v3321, %v3549
      %v3692 = vadd.f32 %v3322, %v3554
      %v3693 = vadd.f32 %v3323, %v3559
      %v3694 = vadd.f32 %v3324, %v3564
      %v3695 = vadd.f32 %v3325, %v3569
      %v3696 = vadd.f32 %v3326, %v3574
      %v3697 = vadd.f32 %v3327, %v3579
      %v3698 = vadd.f32 %v3328, %v3584
      %v3699 = vadd.f32 %v3329, %v3589
      %v3700 = vadd.f32 %v3330, %v3594
      %v3701 = vadd.f32 %v3331, %v3599
      %v3702 = vadd.f32 %v3332, %v3604
      %v3703 = vadd.f32 %v3333, %v3609
      %v3704 = vadd.f32 %v3334, %v3614
      %v3705 = vadd.f32 %v3335, %v3619
      %v3706 = vadd.f32 %v3336, %v3624
      %v3707 = vadd.f32 %v3337, %v3629
      %v3708 = vadd.f32 %v3338, %v3634
      %v3709 = vadd.f32 %v3339, %v3639
      %v3710 = vadd.f32 %v3340, %v3644
      %v3711 = vadd.f32 %v3341, %v3649
      %v3712 = vadd.f32 %v3342, %v3654
      %v3713 = vadd.f32 %v3343, %v3659
      %v3714 = vadd.f32 %v3344, %v3664
      %v3715 = vld [vmem:[%s3] sm:$0x1]
      %v3717 = vlaneseq
      %v3718 = vshrl.u32 %v3717, 7
      %v3719 = vsub.s32 0, %v3718
      %v3720 = vrot.slane %v3715, %v3719
      %v3722 = vadd.f32 %v3667, %v3720
      %v3723 = vadd.f32 %v3668, %v3720
      %v3724 = vadd.f32 %v3669, %v3720
      %v3725 = vadd.f32 %v3670, %v3720
      %v3726 = vadd.f32 %v3671, %v3720
      %v3727 = vadd.f32 %v3672, %v3720
      %v3728 = vadd.f32 %v3673, %v3720
      %v3729 = vadd.f32 %v3674, %v3720
      %v3730 = vadd.f32 %v3675, %v3720
      %v3731 = vadd.f32 %v3676, %v3720
      %v3732 = vadd.f32 %v3677, %v3720
      %v3733 = vadd.f32 %v3678, %v3720
      %v3734 = vadd.f32 %v3679, %v3720
      %v3735 = vadd.f32 %v3680, %v3720
      %v3736 = vadd.f32 %v3681, %v3720
      %v3737 = vadd.f32 %v3682, %v3720
      %v3738 = vadd.f32 %v3683, %v3720
      %v3739 = vadd.f32 %v3684, %v3720
      %v3740 = vadd.f32 %v3685, %v3720
      %v3741 = vadd.f32 %v3686, %v3720
      %v3742 = vadd.f32 %v3687, %v3720
      %v3743 = vadd.f32 %v3688, %v3720
      %v3744 = vadd.f32 %v3689, %v3720
      %v3745 = vadd.f32 %v3690, %v3720
      %v3746 = vadd.f32 %v3691, %v3720
      %v3747 = vadd.f32 %v3692, %v3720
      %v3748 = vadd.f32 %v3693, %v3720
      %v3749 = vadd.f32 %v3694, %v3720
      %v3750 = vadd.f32 %v3695, %v3720
      %v3751 = vadd.f32 %v3696, %v3720
      %v3752 = vadd.f32 %v3697, %v3720
      %v3753 = vadd.f32 %v3698, %v3720
      %v3754 = vadd.f32 %v3699, %v3720
      %v3755 = vadd.f32 %v3700, %v3720
      %v3756 = vadd.f32 %v3701, %v3720
      %v3757 = vadd.f32 %v3702, %v3720
      %v3758 = vadd.f32 %v3703, %v3720
      %v3759 = vadd.f32 %v3704, %v3720
      %v3760 = vadd.f32 %v3705, %v3720
      %v3761 = vadd.f32 %v3706, %v3720
      %v3762 = vadd.f32 %v3707, %v3720
      %v3763 = vadd.f32 %v3708, %v3720
      %v3764 = vadd.f32 %v3709, %v3720
      %v3765 = vadd.f32 %v3710, %v3720
      %v3766 = vadd.f32 %v3711, %v3720
      %v3767 = vadd.f32 %v3712, %v3720
      %v3768 = vadd.f32 %v3713, %v3720
      %v3769 = vadd.f32 %v3714, %v3720
      %v3770 = vadd.f32 %v3722, %v246
      %v3771 = vadd.f32 %v3723, %v247
      %v3772 = vadd.f32 %v3724, %v248
      %v3773 = vadd.f32 %v3725, %v249
      %v3774 = vadd.f32 %v3726, %v250
      %v3775 = vadd.f32 %v3727, %v251
      %v3776 = vadd.f32 %v3728, %v252
      %v3777 = vadd.f32 %v3729, %v253
      %v3778 = vadd.f32 %v3730, %v254
      %v3779 = vadd.f32 %v3731, %v255
      %v3780 = vadd.f32 %v3732, %v256
      %v3781 = vadd.f32 %v3733, %v257
      %v3782 = vadd.f32 %v3734, %v258
      %v3783 = vadd.f32 %v3735, %v259
      %v3784 = vadd.f32 %v3736, %v260
      %v3785 = vadd.f32 %v3737, %v261
      %v3786 = vadd.f32 %v3738, %v262
      %v3787 = vadd.f32 %v3739, %v263
      %v3788 = vadd.f32 %v3740, %v264
      %v3789 = vadd.f32 %v3741, %v265
      %v3790 = vadd.f32 %v3742, %v266
      %v3791 = vadd.f32 %v3743, %v267
      %v3792 = vadd.f32 %v3744, %v268
      %v3793 = vadd.f32 %v3745, %v269
      %v3794 = vadd.f32 %v3746, %v270
      %v3795 = vadd.f32 %v3747, %v271
      %v3796 = vadd.f32 %v3748, %v272
      %v3797 = vadd.f32 %v3749, %v273
      %v3798 = vadd.f32 %v3750, %v274
      %v3799 = vadd.f32 %v3751, %v275
      %v3800 = vadd.f32 %v3752, %v276
      %v3801 = vadd.f32 %v3753, %v277
      %v3802 = vadd.f32 %v3754, %v278
      %v3803 = vadd.f32 %v3755, %v279
      %v3804 = vadd.f32 %v3756, %v280
      %v3805 = vadd.f32 %v3757, %v281
      %v3806 = vadd.f32 %v3758, %v282
      %v3807 = vadd.f32 %v3759, %v283
      %v3808 = vadd.f32 %v3760, %v284
      %v3809 = vadd.f32 %v3761, %v285
      %v3810 = vadd.f32 %v3762, %v286
      %v3811 = vadd.f32 %v3763, %v287
      %v3812 = vadd.f32 %v3764, %v288
      %v3813 = vadd.f32 %v3765, %v289
      %v3814 = vadd.f32 %v3766, %v290
      %v3815 = vadd.f32 %v3767, %v291
      %v3816 = vadd.f32 %v3768, %v292
      %v3817 = vadd.f32 %v3769, %v293
      %v3818 = vmax.f32 %v3770, 0.0
      %v3819 = vmax.f32 %v3771, 0.0
      %v3820 = vmax.f32 %v3772, 0.0
      %v3821 = vmax.f32 %v3773, 0.0
      %v3822 = vmax.f32 %v3774, 0.0
      %v3823 = vmax.f32 %v3775, 0.0
      %v3824 = vmax.f32 %v3776, 0.0
      %v3825 = vmax.f32 %v3777, 0.0
      %v3826 = vmax.f32 %v3778, 0.0
      %v3827 = vmax.f32 %v3779, 0.0
      %v3828 = vmax.f32 %v3780, 0.0
      %v3829 = vmax.f32 %v3781, 0.0
      %v3830 = vmax.f32 %v3782, 0.0
      %v3831 = vmax.f32 %v3783, 0.0
      %v3832 = vmax.f32 %v3784, 0.0
      %v3833 = vmax.f32 %v3785, 0.0
      %v3834 = vmax.f32 %v3786, 0.0
      %v3835 = vmax.f32 %v3787, 0.0
      %v3836 = vmax.f32 %v3788, 0.0
      %v3837 = vmax.f32 %v3789, 0.0
      %v3838 = vmax.f32 %v3790, 0.0
      %v3839 = vmax.f32 %v3791, 0.0
      %v3840 = vmax.f32 %v3792, 0.0
      %v3841 = vmax.f32 %v3793, 0.0
      %v3842 = vmax.f32 %v3794, 0.0
      %v3843 = vmax.f32 %v3795, 0.0
      %v3844 = vmax.f32 %v3796, 0.0
      %v3845 = vmax.f32 %v3797, 0.0
      %v3846 = vmax.f32 %v3798, 0.0
      %v3847 = vmax.f32 %v3799, 0.0
      %v3848 = vmax.f32 %v3800, 0.0
      %v3849 = vmax.f32 %v3801, 0.0
      %v3850 = vmax.f32 %v3802, 0.0
      %v3851 = vmax.f32 %v3803, 0.0
      %v3852 = vmax.f32 %v3804, 0.0
      %v3853 = vmax.f32 %v3805, 0.0
      %v3854 = vmax.f32 %v3806, 0.0
      %v3855 = vmax.f32 %v3807, 0.0
      %v3856 = vmax.f32 %v3808, 0.0
      %v3857 = vmax.f32 %v3809, 0.0
      %v3858 = vmax.f32 %v3810, 0.0
      %v3859 = vmax.f32 %v3811, 0.0
      %v3860 = vmax.f32 %v3812, 0.0
      %v3861 = vmax.f32 %v3813, 0.0
      %v3862 = vmax.f32 %v3814, 0.0
      %v3863 = vmax.f32 %v3815, 0.0
      %v3864 = vmax.f32 %v3816, 0.0
      %v3865 = vmax.f32 %v3817, 0.0
      %3866 = vst [vmem:[%s241] sm:$0xff] %v3818
      %3867 = vst [vmem:[%s241 + $0x8] sm:$0xff] %v3819
      %3868 = vst [vmem:[%s241 + $0x10] sm:$0xff] %v3820
      %3869 = vst [vmem:[%s241 + $0x18] sm:$0xff] %v3821
      %3870 = vst [vmem:[%s241 + $0x20] sm:$0xff] %v3822
      %3871 = vst [vmem:[%s241 + $0x28] sm:$0xff] %v3823
      %3872 = vst [vmem:[%s241 + $0x30] sm:$0xff] %v3824
      %3873 = vst [vmem:[%s241 + $0x38] sm:$0xff] %v3825
      %3874 = vst [vmem:[%s241 + $0x40] sm:$0xff] %v3826
      %3875 = vst [vmem:[%s241 + $0x48] sm:$0xff] %v3827
      %3876 = vst [vmem:[%s241 + $0x50] sm:$0xff] %v3828
      %3877 = vst [vmem:[%s241 + $0x58] sm:$0xff] %v3829
      %3878 = vst [vmem:[%s241 + $0x60] sm:$0xff] %v3830
      %3879 = vst [vmem:[%s241 + $0x68] sm:$0xff] %v3831
      %3880 = vst [vmem:[%s241 + $0x70] sm:$0xff] %v3832
      %3881 = vst [vmem:[%s241 + $0x78] sm:$0xff] %v3833
      %3882 = vst [vmem:[%s241 + $0x80] sm:$0xff] %v3834
      %3883 = vst [vmem:[%s241 + $0x88] sm:$0xff] %v3835
      %3884 = vst [vmem:[%s241 + $0x90] sm:$0xff] %v3836
      %3885 = vst [vmem:[%s241 + $0x98] sm:$0xff] %v3837
      %3886 = vst [vmem:[%s241 + $0xa0] sm:$0xff] %v3838
      %3887 = vst [vmem:[%s241 + $0xa8] sm:$0xff] %v3839
      %3888 = vst [vmem:[%s241 + $0xb0] sm:$0xff] %v3840
      %3889 = vst [vmem:[%s241 + $0xb8] sm:$0xff] %v3841
      %3890 = vst [vmem:[%s241 + $0xc0] sm:$0xff] %v3842
      %3891 = vst [vmem:[%s241 + $0xc8] sm:$0xff] %v3843
      %3892 = vst [vmem:[%s241 + $0xd0] sm:$0xff] %v3844
      %3893 = vst [vmem:[%s241 + $0xd8] sm:$0xff] %v3845
      %3894 = vst [vmem:[%s241 + $0xe0] sm:$0xff] %v3846
      %3895 = vst [vmem:[%s241 + $0xe8] sm:$0xff] %v3847
      %3896 = vst [vmem:[%s241 + $0xf0] sm:$0xff] %v3848
      %3897 = vst [vmem:[%s241 + $0xf8] sm:$0xff] %v3849
      %3898 = vst [vmem:[%s241 + $0x100] sm:$0xff] %v3850
      %3899 = vst [vmem:[%s241 + $0x108] sm:$0xff] %v3851
      %3900 = vst [vmem:[%s241 + $0x110] sm:$0xff] %v3852
      %3901 = vst [vmem:[%s241 + $0x118] sm:$0xff] %v3853
      %3902 = vst [vmem:[%s241 + $0x120] sm:$0xff] %v3854
      %3903 = vst [vmem:[%s241 + $0x128] sm:$0xff] %v3855
      %3904 = vst [vmem:[%s241 + $0x130] sm:$0xff] %v3856
      %3905 = vst [vmem:[%s241 + $0x138] sm:$0xff] %v3857
      %3906 = vst [vmem:[%s241 + $0x140] sm:$0xff] %v3858
      %3907 = vst [vmem:[%s241 + $0x148] sm:$0xff] %v3859
      %3908 = vst [vmem:[%s241 + $0x150] sm:$0xff] %v3860
      %3909 = vst [vmem:[%s241 + $0x158] sm:$0xff] %v3861
      %3910 = vst [vmem:[%s241 + $0x160] sm:$0xff] %v3862
      %3911 = vst [vmem:[%s241 + $0x168] sm:$0xff] %v3863
      %3912 = vst [vmem:[%s241 + $0x170] sm:$0xff] %v3864
      %3913 = vst [vmem:[%s241 + $0x178] sm:$0xff] %v3865
      %s3914 = smul.u32 48, %s20
      %p3915 = scmp.lt.s32.totalorder %s19, 1
      %s3916 = scalar_select %p3915, %s19, 1
      %p3917 = scmp.lt.s32.totalorder %s3914, 47
      %s3918 = scalar_select %p3917, %s3914, 47
      %s3919 = smul.addr %s3916, 48
      %s3920 = sadd.s32 %s3918, %s3919
      %s3921 = smul.addr %s3920, 8
      %s3922 = scalar_lea.vmem %s4, %s3921
      // Predicated region
      $region37: #{hex_block_forward.1} parent=35 // pred_check
        %p3923 = pneg %p141
      $region38: #{hex_block_forward.1} parent=35 // pred_check_branch
        %3925 = sbr.rel (%p3923) target = $region40
      $region39: #{hex_block_forward.1} parent=35 // pred_region
        %s3926 = smul.u32 48, %s20
      $region40: #{hex_block_forward.1} parent=35 // pred_fallthru
        _
    $region36: #{hex_block_forward.1} parent=5 // pred_fallthru
      _
    %p3927 = scmp.le.s32.totalorder 2, %s10
    // Predicated region
    $region41: #{hex_block_forward.1} parent=5 // pred_check
      %p3928 = pneg %p3927
    $region42: #{hex_block_forward.1} parent=5 // pred_check_branch
      %3930 = sbr.rel (%p3928) target = $region44
    $region43: #{hex_block_forward.1} parent=5 // pred_region
      %s3931 = ssub.s32 %s10, 2
      // Predicated region
      $region45: #{hex_block_forward.1} parent=43 // pred_check
        %p3932 = pneg %p147
      $region46: #{hex_block_forward.1} parent=43 // pred_check_branch
        %3934 = sbr.rel (%p3932) target = $region48
      $region47: #{hex_block_forward.1} parent=43 // pred_region
        %s3935 = smul.u32 48, %s22
        %p3936 = scmp.lt.s32.totalorder %s21, 1
        %s3937 = scalar_select %p3936, %s21, 1
        %p3938 = scmp.lt.s32.totalorder %s3935, 47
        %s3939 = scalar_select %p3938, %s3935, 47
        %s3940 = smul.addr %s3937, 48
        %s3941 = sadd.s32 %s3939, %s3940
        %s3942 = smul.addr %s3941, 8
        %s3943 = scalar_lea.vmem %s4, %s3942
      $region48: #{hex_block_forward.1} parent=43 // pred_fallthru
        _
    $region44: #{hex_block_forward.1} parent=5 // pred_fallthru
      _
  $region6: #{hex_block_forward.1} parent=0 // loop_footer
    %s14 = sadd.s32 1, %s10
  $region7: #{hex_block_forward.1} parent=0 // loop_footer_branch
    %9 = sbr.rel target = $region3
  $region8: #{hex_block_forward.1} parent=0 // loop_exit
    _

</llo_original>
